<compile_context>
chip_gen: v5e
topology: v5e:2x2
jax: 0.10.0
libtpu: 0.0.40
codegen_flags: <defaults>
</compile_context>

<pallas_src>
import jax
import jax.numpy as jnp
from jax.experimental import pallas as pl
from jax.experimental.pallas import tpu as pltpu


# ----------------------------- static geometry -------------------------------

_P1, _P2, _P3 = 80, 40, 20          # per-batch row pitch at each stage
_L1, _L2, _L3 = 65, 23, 2           # valid conv output rows per batch element
_EPS = 1e-5

# weight-slab row offsets (multiples of 8 for clean sublane slicing)
_W1_OFF, _W1_ROWS = 0, 50           # conv1 fused (50, 16)
_W2_OFF, _W2_ROWS = 56, 160         # conv2 fused (160, 32)
_W3_OFF, _W3_ROWS = 216, 320        # conv3 fused (320, 64)
_F1_OFF, _F1_ROWS = 536, 64         # fc1 (64, 50)
_F2_OFF, _F2_ROWS = 600, 50         # fc2 (50, 10)
_F3_OFF, _F3_ROWS = 656, 10         # fc3 (10, 2)
_WSLAB_ROWS, _WSLAB_LANES = 672, 64


# ------------------------------ fused kernel ---------------------------------

def _fused_forward_kernel(xs_ref, w_ref, vec_ref, out_ref):
    # xs_ref : (N*80 + 16, 5)  f32   phase-split input, pitch 80 per batch elem
    # w_ref  : (672, 64)       bf16  packed conv + fc weights (K-fused layouts)
    # vec_ref: (8, 128)        f32   packed [b1, gamma, beta, b2, b3, bf1, bf2, bf3]
    # out_ref: (N, 2)          f32
    n = out_ref.shape[0]
    r1, r2, r3 = n * _P1, n * _P2, n * _P3

    # ---- unpack parameter slabs (static VMEM slices) ----
    w1 = w_ref[_W1_OFF:_W1_OFF + _W1_ROWS, 0:16]
    w2 = w_ref[_W2_OFF:_W2_OFF + _W2_ROWS, 0:32]
    w3 = w_ref[_W3_OFF:_W3_OFF + _W3_ROWS, 0:64]
    wf1 = w_ref[_F1_OFF:_F1_OFF + _F1_ROWS, 0:50]
    wf2 = w_ref[_F2_OFF:_F2_OFF + _F2_ROWS, 0:10]
    wf3 = w_ref[_F3_OFF:_F3_OFF + _F3_ROWS, 0:2]

    vec = vec_ref[...]
    b1, gamma, beta = vec[0:1, 0:16], vec[1:2, 0:16], vec[2:3, 0:16]
    b2, b3 = vec[3:4, 0:32], vec[4:5, 0:64]
    bf1, bf2, bf3 = vec[5:6, 0:50], vec[6:7, 0:10], vec[7:8, 0:2]

    def mm(a_bf16, w_bf16):
        return jnp.dot(a_bf16, w_bf16, preferred_element_type=jnp.float32)

    def im2col(h, m_rows, taps):
        # h: (>= m_rows + taps - 1, C) f32.  One lane-concat of `taps`
        # contiguous row-shifted slices, cast to bf16 once -> (m_rows, taps*C).
        return jnp.concatenate(
            [h[a:a + m_rows, :] for a in range(taps)], axis=-1
        ).astype(jnp.bfloat16)

    def even_sel(rows, cols):
        # 0/1 selection matrix sel[i, 2i] = 1 (even-row compaction), bf16.
        ri = jax.lax.broadcasted_iota(jnp.int32, (rows, cols), 0)
        ci = jax.lax.broadcasted_iota(jnp.int32, (rows, cols), 1)
        return (ci == 2 * ri).astype(jnp.float32).astype(jnp.bfloat16)

    # ---- conv1 (stride 5 handled by the wrapper phase-split) + ReLU ----
    xs = xs_ref[...]                                             # (r1+16, 5) f32
    h1 = jnp.maximum(mm(im2col(xs, r1, 10), w1) + b1, 0.0)       # (r1, 16) f32

    # ---- BatchNorm1d(16), training mode: batch stats over the N*65 valid rows
    row = jax.lax.broadcasted_iota(jnp.int32, (r1, 16), 0)
    valid = row < 0
    for i in range(n):          # n is a trace-time constant; avoids vector mod
        valid = valid | ((row >= i * _P1) & (row < i * _P1 + _L1))
    mask = valid.astype(jnp.float32)
    inv_cnt = 1.0 / float(n * _L1)
    mean = jnp.sum(h1 * mask, axis=0, keepdims=True) * inv_cnt
    msq = jnp.sum(h1 * h1 * mask, axis=0, keepdims=True) * inv_cnt
    var = jnp.maximum(msq - mean * mean, 0.0)                    # biased variance
    scale = jax.lax.rsqrt(var + _EPS) * gamma
    h1 = (h1 - mean) * scale + beta

    # ---- pool1: pairwise max (VPU) + even-row compaction (one bf16 matmul) ---
    pm1 = jnp.maximum(h1[0:r1 - 1, :], h1[1:r1, :]).astype(jnp.bfloat16)
    p1 = mm(even_sel(r2 + 16, r1 - 1), pm1)                      # (r2+16, 16)

    # ---- conv2 + ReLU (single K=160 matmul, batched M=r2) ----
    h2 = jnp.maximum(mm(im2col(p1, r2, 10), w2) + b2, 0.0)       # (r2, 32)

    # ---- pool2 ----
    pm2 = jnp.maximum(h2[0:r2 - 1, :], h2[1:r2, :]).astype(jnp.bfloat16)
    p2 = mm(even_sel(r3 + 16, r2 - 1), pm2)                      # (r3+16, 32)

    # ---- conv3 + ReLU (single K=320 matmul, batched M=r3) ----
    h3 = jnp.maximum(mm(im2col(p2, r3, 10), w3) + b3, 0.0)       # (r3, 64)

    # ---- pool3 (2 -> 1) + flatten: pick max(row 20n, row 20n+1) per element --
    pm3 = jnp.maximum(h3[0:r3 - 1, :], h3[1:r3, :]).astype(jnp.bfloat16)
    ri = jax.lax.broadcasted_iota(jnp.int32, (n, r3 - 1), 0)
    ci = jax.lax.broadcasted_iota(jnp.int32, (n, r3 - 1), 1)
    gather = (ci == _P3 * ri).astype(jnp.float32).astype(jnp.bfloat16)
    z = mm(gather, pm3)                                          # (n, 64) f32

    # ---- fc stack (batched, bf16 MXU, f32 epilogue, ReLU on every layer) -----
    z = jnp.maximum(mm(z.astype(jnp.bfloat16), wf1) + bf1, 0.0)  # (n, 50)
    z = jnp.maximum(mm(z.astype(jnp.bfloat16), wf2) + bf2, 0.0)  # (n, 10)
    z = jnp.maximum(mm(z.astype(jnp.bfloat16), wf3) + bf3, 0.0)  # (n, 2)
    out_ref[...] = z


# -------------------------------- wrapper ------------------------------------

_VMEM = pl.BlockSpec(memory_space=pltpu.MemorySpace.VMEM)


def conv_forward(x_ncl, p):
    # x_ncl: (N, 1, L) with L = 370, PyTorch Conv1d layout.
    n, c, l = x_ncl.shape
    assert c == 1 and l == 370, "this architecture requires (N, 1, 370) inputs"
    # Layout plumbing only: phase-split the stride-5 conv1 input
    # (x[n, 5*i + r] -> xr[n, i, r]), pad each batch segment to the fixed row
    # pitch of 80, stack the batch into a single 2-D row slab, and add a small
    # row tail so the kernel's tap-shifted slices stay in bounds.
    xr = x_ncl.astype(jnp.float32).reshape(n, l // 5, 5)        # (n, 74, 5)
    xr = jnp.pad(xr, ((0, 0), (0, _P1 - l // 5), (0, 0)))       # (n, 80, 5)
    xs = jnp.pad(xr.reshape(n * _P1, 5), ((0, 16), (0, 0)))     # (n*80+16, 5)

    return pl.pallas_call(
        _fused_forward_kernel,
        out_shape=jax.ShapeDtypeStruct((n, 2), jnp.float32),
        in_specs=[_VMEM, _VMEM, _VMEM],
        out_specs=_VMEM,
    )(xs, p["wslab"], p["vec"])


# ---------------------------- parameter creation -----------------------------

def init_params(key):
    def uniform(k, shape, fan_in):
        bound = 1.0 / jnp.sqrt(jnp.float32(fan_in))
        return jax.random.uniform(k, shape, jnp.float32, -bound, bound)

    ks = jax.random.split(key, 12)

    # conv1: torch weight (16, 1, 50), fan_in = 50
    w1 = uniform(ks[0], (16, 1, 50), 50)
    b1 = uniform(ks[1], (16,), 50)
    # BatchNorm1d(16)
    gamma = jnp.ones((16,), jnp.float32)
    beta = jnp.zeros((16,), jnp.float32)
    # conv2: (32, 16, 10), fan_in = 160;  conv3: (64, 32, 10), fan_in = 320
    w2 = uniform(ks[2], (32, 16, 10), 160)
    b2 = uniform(ks[3], (32,), 160)
    w3 = uniform(ks[4], (64, 32, 10), 320)
    b3 = uniform(ks[5], (64,), 320)
    # fc layers (torch Linear weight is (out, in))
    wf1 = uniform(ks[6], (50, 64), 64)
    bfc1 = uniform(ks[7], (50,), 64)
    wf2 = uniform(ks[8], (10, 50), 50)
    bfc2 = uniform(ks[9], (10,), 50)
    wf3 = uniform(ks[10], (2, 10), 10)
    bfc3 = uniform(ks[11], (2,), 10)

    # K-fused conv weights; K ordering = (tap, cin), matching the kernel im2col.
    w1f = w1.reshape(16, 50).T                                   # (50, 16)
    w2f = jnp.transpose(w2, (2, 1, 0)).reshape(160, 32)          # (160, 32)
    w3f = jnp.transpose(w3, (2, 1, 0)).reshape(320, 64)          # (320, 64)

    slab = jnp.zeros((_WSLAB_ROWS, _WSLAB_LANES), jnp.float32)

    def put(s, off, w):
        return s.at[off:off + w.shape[0], 0:w.shape[1]].set(w)

    slab = put(slab, _W1_OFF, w1f)
    slab = put(slab, _W2_OFF, w2f)
    slab = put(slab, _W3_OFF, w3f)
    slab = put(slab, _F1_OFF, wf1.T)                             # (64, 50)
    slab = put(slab, _F2_OFF, wf2.T)                             # (50, 10)
    slab = put(slab, _F3_OFF, wf3.T)                             # (10, 2)

    def row(v):
        return jnp.pad(v, (0, 128 - v.shape[0]))[None, :]

    vec = jnp.concatenate(
        [row(b1), row(gamma), row(beta), row(b2), row(b3),
         row(bfc1), row(bfc2), row(bfc3)], axis=0)               # (8, 128) f32

    return {"wslab": slab.astype(jnp.bfloat16), "vec": vec}


# TODO(synk): criterion / optimizer / train_step (CrossEntropyLoss + Adam) are
# training utilities, not part of the forward pass, and are not implemented.

if __name__ == "__main__":
    key = jax.random.PRNGKey(0)
    pkey, xkey = jax.random.split(key)
    params = init_params(pkey)

    # input: (batch=2, channels=1, length=370) — NCL, as PyTorch Conv1d expects
    x = jax.random.normal(xkey, (2, 1, 370), jnp.float32)

    out = jax.jit(conv_forward)(x, params)
    out = jax.block_until_ready(out)
    assert out.shape == (2, 2) and out.dtype == jnp.float32
    print("KERNEL_OK")
</pallas_src>

<mosaic_0001>
module attributes {stable_mosaic.version = 11 : i64} {
  func.func @_fused_forward_kernel(%arg0: memref<176x5xf32, #tpu.memory_space<vmem>>, %arg1: memref<672x64xbf16, #tpu.memory_space<vmem>>, %arg2: memref<8x128xf32, #tpu.memory_space<vmem>>, %arg3: memref<2x2xf32, #tpu.memory_space<vmem>>) attributes {dimension_semantics = [], scalar_prefetch = 0 : i64, scratch_operands = 0 : i64, tpu.core_type = #tpu.core_type<tc>} {
    %c0 = arith.constant 0 : index
    %c0_0 = arith.constant 0 : index
    %0 = vector.load %arg1[%c0, %c0_0] : memref<672x64xbf16, #tpu.memory_space<vmem>>, vector<50x16xbf16>
    %c56 = arith.constant 56 : index
    %c0_1 = arith.constant 0 : index
    %1 = vector.load %arg1[%c56, %c0_1] : memref<672x64xbf16, #tpu.memory_space<vmem>>, vector<160x32xbf16>
    %c216 = arith.constant 216 : index
    %c0_2 = arith.constant 0 : index
    %2 = vector.load %arg1[%c216, %c0_2] : memref<672x64xbf16, #tpu.memory_space<vmem>>, vector<320x64xbf16>
    %c536 = arith.constant 536 : index
    %c0_3 = arith.constant 0 : index
    %3 = vector.load %arg1[%c536, %c0_3] : memref<672x64xbf16, #tpu.memory_space<vmem>>, vector<64x50xbf16>
    %c600 = arith.constant 600 : index
    %c0_4 = arith.constant 0 : index
    %4 = vector.load %arg1[%c600, %c0_4] : memref<672x64xbf16, #tpu.memory_space<vmem>>, vector<50x10xbf16>
    %c656 = arith.constant 656 : index
    %c0_5 = arith.constant 0 : index
    %5 = vector.load %arg1[%c656, %c0_5] : memref<672x64xbf16, #tpu.memory_space<vmem>>, vector<10x2xbf16>
    %c0_6 = arith.constant 0 : index
    %c0_7 = arith.constant 0 : index
    %6 = vector.load %arg2[%c0_6, %c0_7] : memref<8x128xf32, #tpu.memory_space<vmem>>, vector<8x128xf32>
    %7 = vector.extract_strided_slice %6 {offsets = [0, 0], sizes = [1, 16], strides = [1, 1]} : vector<8x128xf32> to vector<1x16xf32>
    %8 = vector.extract_strided_slice %6 {offsets = [1, 0], sizes = [1, 16], strides = [1, 1]} : vector<8x128xf32> to vector<1x16xf32>
    %9 = vector.extract_strided_slice %6 {offsets = [2, 0], sizes = [1, 16], strides = [1, 1]} : vector<8x128xf32> to vector<1x16xf32>
    %10 = vector.extract_strided_slice %6 {offsets = [3, 0], sizes = [1, 32], strides = [1, 1]} : vector<8x128xf32> to vector<1x32xf32>
    %11 = vector.extract_strided_slice %6 {offsets = [4, 0], sizes = [1, 64], strides = [1, 1]} : vector<8x128xf32> to vector<1x64xf32>
    %12 = vector.extract_strided_slice %6 {offsets = [5, 0], sizes = [1, 50], strides = [1, 1]} : vector<8x128xf32> to vector<1x50xf32>
    %13 = vector.extract_strided_slice %6 {offsets = [6, 0], sizes = [1, 10], strides = [1, 1]} : vector<8x128xf32> to vector<1x10xf32>
    %14 = vector.extract_strided_slice %6 {offsets = [7, 0], sizes = [1, 2], strides = [1, 1]} : vector<8x128xf32> to vector<1x2xf32>
    %c0_8 = arith.constant 0 : index
    %c0_9 = arith.constant 0 : index
    %15 = vector.load %arg0[%c0_8, %c0_9] : memref<176x5xf32, #tpu.memory_space<vmem>>, vector<176x5xf32>
    %16 = vector.extract_strided_slice %15 {offsets = [0, 0], sizes = [160, 5], strides = [1, 1]} : vector<176x5xf32> to vector<160x5xf32>
    %17 = vector.extract_strided_slice %15 {offsets = [1, 0], sizes = [160, 5], strides = [1, 1]} : vector<176x5xf32> to vector<160x5xf32>
    %18 = vector.extract_strided_slice %15 {offsets = [2, 0], sizes = [160, 5], strides = [1, 1]} : vector<176x5xf32> to vector<160x5xf32>
    %19 = vector.extract_strided_slice %15 {offsets = [3, 0], sizes = [160, 5], strides = [1, 1]} : vector<176x5xf32> to vector<160x5xf32>
    %20 = vector.extract_strided_slice %15 {offsets = [4, 0], sizes = [160, 5], strides = [1, 1]} : vector<176x5xf32> to vector<160x5xf32>
    %21 = vector.extract_strided_slice %15 {offsets = [5, 0], sizes = [160, 5], strides = [1, 1]} : vector<176x5xf32> to vector<160x5xf32>
    %22 = vector.extract_strided_slice %15 {offsets = [6, 0], sizes = [160, 5], strides = [1, 1]} : vector<176x5xf32> to vector<160x5xf32>
    %23 = vector.extract_strided_slice %15 {offsets = [7, 0], sizes = [160, 5], strides = [1, 1]} : vector<176x5xf32> to vector<160x5xf32>
    %24 = vector.extract_strided_slice %15 {offsets = [8, 0], sizes = [160, 5], strides = [1, 1]} : vector<176x5xf32> to vector<160x5xf32>
    %25 = vector.extract_strided_slice %15 {offsets = [9, 0], sizes = [160, 5], strides = [1, 1]} : vector<176x5xf32> to vector<160x5xf32>
    %26 = tpu.concatenate %16, %17, %18, %19, %20, %21, %22, %23, %24, %25 in 1 : vector<160x5xf32>, vector<160x5xf32>, vector<160x5xf32>, vector<160x5xf32>, vector<160x5xf32>, vector<160x5xf32>, vector<160x5xf32>, vector<160x5xf32>, vector<160x5xf32>, vector<160x5xf32> -> vector<160x50xf32>
    %27 = arith.truncf %26 : vector<160x50xf32> to vector<160x50xbf16>
    %cst = arith.constant dense<0.000000e+00> : vector<160x16xf32>
    %28 = tpu.matmul %27, %0, %cst {dimension_numbers = #tpu.dot_dimension_numbers<[1], [0], [0], [1], [0, 0, 1, 1], [], []>} : vector<160x50xbf16>, vector<50x16xbf16>, vector<160x16xf32> -> vector<160x16xf32>
    %29 = vector.broadcast %7 : vector<1x16xf32> to vector<160x16xf32>
    %30 = arith.addf %28, %29 : vector<160x16xf32>
    %cst_10 = arith.constant 0.000000e+00 : f32
    %31 = vector.broadcast %cst_10 : f32 to vector<160x16xf32>
    %32 = arith.maximumf %30, %31 : vector<160x16xf32>
    %33 = tpu.iota {dimensions = array<i32: 0>} : vector<160x16xi32>
    %c0_i32 = arith.constant 0 : i32
    %34 = vector.broadcast %c0_i32 : i32 to vector<160x16xi32>
    %35 = arith.cmpi slt, %33, %34 : vector<160x16xi32>
    %c0_i32_11 = arith.constant 0 : i32
    %36 = vector.broadcast %c0_i32_11 : i32 to vector<160x16xi32>
    %37 = arith.cmpi sge, %33, %36 : vector<160x16xi32>
    %c65_i32 = arith.constant 65 : i32
    %38 = vector.broadcast %c65_i32 : i32 to vector<160x16xi32>
    %39 = arith.cmpi slt, %33, %38 : vector<160x16xi32>
    %40 = arith.andi %37, %39 : vector<160x16xi1>
    %41 = arith.ori %35, %40 : vector<160x16xi1>
    %c80_i32 = arith.constant 80 : i32
    %42 = vector.broadcast %c80_i32 : i32 to vector<160x16xi32>
    %43 = arith.cmpi sge, %33, %42 : vector<160x16xi32>
    %c145_i32 = arith.constant 145 : i32
    %44 = vector.broadcast %c145_i32 : i32 to vector<160x16xi32>
    %45 = arith.cmpi slt, %33, %44 : vector<160x16xi32>
    %46 = arith.andi %43, %45 : vector<160x16xi1>
    %47 = arith.ori %41, %46 : vector<160x16xi1>
    %48 = arith.extui %47 : vector<160x16xi1> to vector<160x16xi32>
    %49 = arith.sitofp %48 : vector<160x16xi32> to vector<160x16xf32>
    %50 = arith.mulf %32, %49 : vector<160x16xf32>
    %cst_12 = arith.constant dense<0.000000e+00> : vector<16xf32>
    %51 = vector.multi_reduction <add>, %50, %cst_12 [0] : vector<160x16xf32> to vector<16xf32>
    %52 = vector.shape_cast %51 : vector<16xf32> to vector<1x16xf32>
    %cst_13 = arith.constant 0.0076923077 : f32
    %53 = vector.broadcast %cst_13 : f32 to vector<1x16xf32>
    %54 = arith.mulf %52, %53 : vector<1x16xf32>
    %55 = arith.mulf %32, %32 : vector<160x16xf32>
    %56 = arith.mulf %55, %49 : vector<160x16xf32>
    %cst_14 = arith.constant dense<0.000000e+00> : vector<16xf32>
    %57 = vector.multi_reduction <add>, %56, %cst_14 [0] : vector<160x16xf32> to vector<16xf32>
    %58 = vector.shape_cast %57 : vector<16xf32> to vector<1x16xf32>
    %cst_15 = arith.constant 0.0076923077 : f32
    %59 = vector.broadcast %cst_15 : f32 to vector<1x16xf32>
    %60 = arith.mulf %58, %59 : vector<1x16xf32>
    %61 = arith.mulf %54, %54 : vector<1x16xf32>
    %62 = arith.subf %60, %61 : vector<1x16xf32>
    %cst_16 = arith.constant 0.000000e+00 : f32
    %63 = vector.broadcast %cst_16 : f32 to vector<1x16xf32>
    %64 = arith.maximumf %62, %63 : vector<1x16xf32>
    %cst_17 = arith.constant 9.99999974E-6 : f32
    %65 = vector.broadcast %cst_17 : f32 to vector<1x16xf32>
    %66 = arith.addf %64, %65 : vector<1x16xf32>
    %67 = math.rsqrt %66 : vector<1x16xf32>
    %68 = arith.mulf %67, %8 : vector<1x16xf32>
    %69 = vector.broadcast %54 : vector<1x16xf32> to vector<160x16xf32>
    %70 = arith.subf %32, %69 : vector<160x16xf32>
    %71 = vector.broadcast %68 : vector<1x16xf32> to vector<160x16xf32>
    %72 = arith.mulf %70, %71 : vector<160x16xf32>
    %73 = vector.broadcast %9 : vector<1x16xf32> to vector<160x16xf32>
    %74 = arith.addf %72, %73 : vector<160x16xf32>
    %75 = vector.extract_strided_slice %74 {offsets = [0, 0], sizes = [159, 16], strides = [1, 1]} : vector<160x16xf32> to vector<159x16xf32>
    %76 = vector.extract_strided_slice %74 {offsets = [1, 0], sizes = [159, 16], strides = [1, 1]} : vector<160x16xf32> to vector<159x16xf32>
    %77 = arith.maximumf %75, %76 : vector<159x16xf32>
    %78 = arith.truncf %77 : vector<159x16xf32> to vector<159x16xbf16>
    %79 = tpu.iota {dimensions = array<i32: 0>} : vector<96x159xi32>
    %80 = tpu.iota {dimensions = array<i32: 1>} : vector<96x159xi32>
    %c2_i32 = arith.constant 2 : i32
    %81 = vector.broadcast %c2_i32 : i32 to vector<96x159xi32>
    %82 = arith.muli %81, %79 : vector<96x159xi32>
    %83 = arith.cmpi eq, %80, %82 : vector<96x159xi32>
    %84 = arith.extui %83 : vector<96x159xi1> to vector<96x159xi32>
    %85 = arith.sitofp %84 : vector<96x159xi32> to vector<96x159xf32>
    %86 = arith.truncf %85 : vector<96x159xf32> to vector<96x159xbf16>
    %cst_18 = arith.constant dense<0.000000e+00> : vector<96x16xf32>
    %87 = tpu.matmul %86, %78, %cst_18 {dimension_numbers = #tpu.dot_dimension_numbers<[1], [0], [0], [1], [0, 0, 1, 1], [], []>} : vector<96x159xbf16>, vector<159x16xbf16>, vector<96x16xf32> -> vector<96x16xf32>
    %88 = vector.extract_strided_slice %87 {offsets = [0, 0], sizes = [80, 16], strides = [1, 1]} : vector<96x16xf32> to vector<80x16xf32>
    %89 = vector.extract_strided_slice %87 {offsets = [1, 0], sizes = [80, 16], strides = [1, 1]} : vector<96x16xf32> to vector<80x16xf32>
    %90 = vector.extract_strided_slice %87 {offsets = [2, 0], sizes = [80, 16], strides = [1, 1]} : vector<96x16xf32> to vector<80x16xf32>
    %91 = vector.extract_strided_slice %87 {offsets = [3, 0], sizes = [80, 16], strides = [1, 1]} : vector<96x16xf32> to vector<80x16xf32>
    %92 = vector.extract_strided_slice %87 {offsets = [4, 0], sizes = [80, 16], strides = [1, 1]} : vector<96x16xf32> to vector<80x16xf32>
    %93 = vector.extract_strided_slice %87 {offsets = [5, 0], sizes = [80, 16], strides = [1, 1]} : vector<96x16xf32> to vector<80x16xf32>
    %94 = vector.extract_strided_slice %87 {offsets = [6, 0], sizes = [80, 16], strides = [1, 1]} : vector<96x16xf32> to vector<80x16xf32>
    %95 = vector.extract_strided_slice %87 {offsets = [7, 0], sizes = [80, 16], strides = [1, 1]} : vector<96x16xf32> to vector<80x16xf32>
    %96 = vector.extract_strided_slice %87 {offsets = [8, 0], sizes = [80, 16], strides = [1, 1]} : vector<96x16xf32> to vector<80x16xf32>
    %97 = vector.extract_strided_slice %87 {offsets = [9, 0], sizes = [80, 16], strides = [1, 1]} : vector<96x16xf32> to vector<80x16xf32>
    %98 = tpu.concatenate %88, %89, %90, %91, %92, %93, %94, %95, %96, %97 in 1 : vector<80x16xf32>, vector<80x16xf32>, vector<80x16xf32>, vector<80x16xf32>, vector<80x16xf32>, vector<80x16xf32>, vector<80x16xf32>, vector<80x16xf32>, vector<80x16xf32>, vector<80x16xf32> -> vector<80x160xf32>
    %99 = arith.truncf %98 : vector<80x160xf32> to vector<80x160xbf16>
    %cst_19 = arith.constant dense<0.000000e+00> : vector<80x32xf32>
    %100 = tpu.matmul %99, %1, %cst_19 {dimension_numbers = #tpu.dot_dimension_numbers<[1], [0], [0], [1], [0, 0, 1, 1], [], []>} : vector<80x160xbf16>, vector<160x32xbf16>, vector<80x32xf32> -> vector<80x32xf32>
    %101 = vector.broadcast %10 : vector<1x32xf32> to vector<80x32xf32>
    %102 = arith.addf %100, %101 : vector<80x32xf32>
    %cst_20 = arith.constant 0.000000e+00 : f32
    %103 = vector.broadcast %cst_20 : f32 to vector<80x32xf32>
    %104 = arith.maximumf %102, %103 : vector<80x32xf32>
    %105 = vector.extract_strided_slice %104 {offsets = [0, 0], sizes = [79, 32], strides = [1, 1]} : vector<80x32xf32> to vector<79x32xf32>
    %106 = vector.extract_strided_slice %104 {offsets = [1, 0], sizes = [79, 32], strides = [1, 1]} : vector<80x32xf32> to vector<79x32xf32>
    %107 = arith.maximumf %105, %106 : vector<79x32xf32>
    %108 = arith.truncf %107 : vector<79x32xf32> to vector<79x32xbf16>
    %109 = tpu.iota {dimensions = array<i32: 0>} : vector<56x79xi32>
    %110 = tpu.iota {dimensions = array<i32: 1>} : vector<56x79xi32>
    %c2_i32_21 = arith.constant 2 : i32
    %111 = vector.broadcast %c2_i32_21 : i32 to vector<56x79xi32>
    %112 = arith.muli %111, %109 : vector<56x79xi32>
    %113 = arith.cmpi eq, %110, %112 : vector<56x79xi32>
    %114 = arith.extui %113 : vector<56x79xi1> to vector<56x79xi32>
    %115 = arith.sitofp %114 : vector<56x79xi32> to vector<56x79xf32>
    %116 = arith.truncf %115 : vector<56x79xf32> to vector<56x79xbf16>
    %cst_22 = arith.constant dense<0.000000e+00> : vector<56x32xf32>
    %117 = tpu.matmul %116, %108, %cst_22 {dimension_numbers = #tpu.dot_dimension_numbers<[1], [0], [0], [1], [0, 0, 1, 1], [], []>} : vector<56x79xbf16>, vector<79x32xbf16>, vector<56x32xf32> -> vector<56x32xf32>
    %118 = vector.extract_strided_slice %117 {offsets = [0, 0], sizes = [40, 32], strides = [1, 1]} : vector<56x32xf32> to vector<40x32xf32>
    %119 = vector.extract_strided_slice %117 {offsets = [1, 0], sizes = [40, 32], strides = [1, 1]} : vector<56x32xf32> to vector<40x32xf32>
    %120 = vector.extract_strided_slice %117 {offsets = [2, 0], sizes = [40, 32], strides = [1, 1]} : vector<56x32xf32> to vector<40x32xf32>
    %121 = vector.extract_strided_slice %117 {offsets = [3, 0], sizes = [40, 32], strides = [1, 1]} : vector<56x32xf32> to vector<40x32xf32>
    %122 = vector.extract_strided_slice %117 {offsets = [4, 0], sizes = [40, 32], strides = [1, 1]} : vector<56x32xf32> to vector<40x32xf32>
    %123 = vector.extract_strided_slice %117 {offsets = [5, 0], sizes = [40, 32], strides = [1, 1]} : vector<56x32xf32> to vector<40x32xf32>
    %124 = vector.extract_strided_slice %117 {offsets = [6, 0], sizes = [40, 32], strides = [1, 1]} : vector<56x32xf32> to vector<40x32xf32>
    %125 = vector.extract_strided_slice %117 {offsets = [7, 0], sizes = [40, 32], strides = [1, 1]} : vector<56x32xf32> to vector<40x32xf32>
    %126 = vector.extract_strided_slice %117 {offsets = [8, 0], sizes = [40, 32], strides = [1, 1]} : vector<56x32xf32> to vector<40x32xf32>
    %127 = vector.extract_strided_slice %117 {offsets = [9, 0], sizes = [40, 32], strides = [1, 1]} : vector<56x32xf32> to vector<40x32xf32>
    %128 = tpu.concatenate %118, %119, %120, %121, %122, %123, %124, %125, %126, %127 in 1 : vector<40x32xf32>, vector<40x32xf32>, vector<40x32xf32>, vector<40x32xf32>, vector<40x32xf32>, vector<40x32xf32>, vector<40x32xf32>, vector<40x32xf32>, vector<40x32xf32>, vector<40x32xf32> -> vector<40x320xf32>
    %129 = arith.truncf %128 : vector<40x320xf32> to vector<40x320xbf16>
    %cst_23 = arith.constant dense<0.000000e+00> : vector<40x64xf32>
    %130 = tpu.matmul %129, %2, %cst_23 {dimension_numbers = #tpu.dot_dimension_numbers<[1], [0], [0], [1], [0, 0, 1, 1], [], []>} : vector<40x320xbf16>, vector<320x64xbf16>, vector<40x64xf32> -> vector<40x64xf32>
    %131 = vector.broadcast %11 : vector<1x64xf32> to vector<40x64xf32>
    %132 = arith.addf %130, %131 : vector<40x64xf32>
    %cst_24 = arith.constant 0.000000e+00 : f32
    %133 = vector.broadcast %cst_24 : f32 to vector<40x64xf32>
    %134 = arith.maximumf %132, %133 : vector<40x64xf32>
    %135 = vector.extract_strided_slice %134 {offsets = [0, 0], sizes = [39, 64], strides = [1, 1]} : vector<40x64xf32> to vector<39x64xf32>
    %136 = vector.extract_strided_slice %134 {offsets = [1, 0], sizes = [39, 64], strides = [1, 1]} : vector<40x64xf32> to vector<39x64xf32>
    %137 = arith.maximumf %135, %136 : vector<39x64xf32>
    %138 = arith.truncf %137 : vector<39x64xf32> to vector<39x64xbf16>
    %139 = tpu.iota {dimensions = array<i32: 0>} : vector<2x39xi32>
    %140 = tpu.iota {dimensions = array<i32: 1>} : vector<2x39xi32>
    %c20_i32 = arith.constant 20 : i32
    %141 = vector.broadcast %c20_i32 : i32 to vector<2x39xi32>
    %142 = arith.muli %141, %139 : vector<2x39xi32>
    %143 = arith.cmpi eq, %140, %142 : vector<2x39xi32>
    %144 = arith.extui %143 : vector<2x39xi1> to vector<2x39xi32>
    %145 = arith.sitofp %144 : vector<2x39xi32> to vector<2x39xf32>
    %146 = arith.truncf %145 : vector<2x39xf32> to vector<2x39xbf16>
    %cst_25 = arith.constant dense<0.000000e+00> : vector<2x64xf32>
    %147 = tpu.matmul %146, %138, %cst_25 {dimension_numbers = #tpu.dot_dimension_numbers<[1], [0], [0], [1], [0, 0, 1, 1], [], []>} : vector<2x39xbf16>, vector<39x64xbf16>, vector<2x64xf32> -> vector<2x64xf32>
    %148 = arith.truncf %147 : vector<2x64xf32> to vector<2x64xbf16>
    %cst_26 = arith.constant dense<0.000000e+00> : vector<2x50xf32>
    %149 = tpu.matmul %148, %3, %cst_26 {dimension_numbers = #tpu.dot_dimension_numbers<[1], [0], [0], [1], [0, 0, 1, 1], [], []>} : vector<2x64xbf16>, vector<64x50xbf16>, vector<2x50xf32> -> vector<2x50xf32>
    %150 = vector.broadcast %12 : vector<1x50xf32> to vector<2x50xf32>
    %151 = arith.addf %149, %150 : vector<2x50xf32>
    %cst_27 = arith.constant 0.000000e+00 : f32
    %152 = vector.broadcast %cst_27 : f32 to vector<2x50xf32>
    %153 = arith.maximumf %151, %152 : vector<2x50xf32>
    %154 = arith.truncf %153 : vector<2x50xf32> to vector<2x50xbf16>
    %cst_28 = arith.constant dense<0.000000e+00> : vector<2x10xf32>
    %155 = tpu.matmul %154, %4, %cst_28 {dimension_numbers = #tpu.dot_dimension_numbers<[1], [0], [0], [1], [0, 0, 1, 1], [], []>} : vector<2x50xbf16>, vector<50x10xbf16>, vector<2x10xf32> -> vector<2x10xf32>
    %156 = vector.broadcast %13 : vector<1x10xf32> to vector<2x10xf32>
    %157 = arith.addf %155, %156 : vector<2x10xf32>
    %cst_29 = arith.constant 0.000000e+00 : f32
    %158 = vector.broadcast %cst_29 : f32 to vector<2x10xf32>
    %159 = arith.maximumf %157, %158 : vector<2x10xf32>
    %160 = arith.truncf %159 : vector<2x10xf32> to vector<2x10xbf16>
    %cst_30 = arith.constant dense<0.000000e+00> : vector<2x2xf32>
    %161 = tpu.matmul %160, %5, %cst_30 {dimension_numbers = #tpu.dot_dimension_numbers<[1], [0], [0], [1], [0, 0, 1, 1], [], []>} : vector<2x10xbf16>, vector<10x2xbf16>, vector<2x2xf32> -> vector<2x2xf32>
    %162 = vector.broadcast %14 : vector<1x2xf32> to vector<2x2xf32>
    %163 = arith.addf %161, %162 : vector<2x2xf32>
    %cst_31 = arith.constant 0.000000e+00 : f32
    %164 = vector.broadcast %cst_31 : f32 to vector<2x2xf32>
    %165 = arith.maximumf %163, %164 : vector<2x2xf32>
    %c0_32 = arith.constant 0 : index
    %c0_33 = arith.constant 0 : index
    %166 = vector.load %arg3[%c0_32, %c0_33] : memref<2x2xf32, #tpu.memory_space<vmem>>, vector<2x2xf32>
    tpu.vector_store %arg3[%c0_32, %c0_33], %165 {strides = array<i32>} : memref<2x2xf32, #tpu.memory_space<vmem>>, vector<2x2xf32>,
    return
  }
}

</mosaic_0001>

<llo_original>
// kernel: conv_forward.1
$region0: #{conv_forward.1}
  #allocation0 [shape = 'u32[]', space=smem, size = 0x4, offset = 0x4, fixed_abs, tag = 'smem constant byte address 0x4 - core index']
  #allocation1 [shape = 'u32[72,128]{1,0:T(1,128)}', space=vmem, size = 0x9000, scoped, tag = 'internal scratch']
  %s0 = inlined_call_operand.vmem [shape: f32[176,5], index: 0, kind: input, shape index: {}]
  %s1 = inlined_call_operand.vmem [shape: bf16[672,64], index: 1, kind: input, shape index: {}]
  %s2 = inlined_call_operand.vmem [shape: f32[8,128], index: 2, kind: input, shape index: {}]
  %s3 = inlined_call_operand.hbm [shape: f32[2,2], index: 3, kind: output, shape index: {}]
  %s4 = sld [smem:[#allocation0]]
  $region22: #{conv_forward.1} parent=0
    _
  %s6 = ssub.s32 1, %s4
  %s7 = scalar_select 0, %s6, %s4
  $region1: #{conv_forward.1} parent=0
    #allocation2 [shape = 'u8[1024]{0}', space=vmem, size = 0x400, scoped, tag = 'output window, operand 0, single buffered']
    #allocation3 [shape = 's32[1]{0}', space=sflag, size = 0x4, scoped, tag = 'scoped memory for conv_forward.1']
    %8 = vsyncpa [#allocation3], 0
    // Predicated region
    $region2: #{conv_forward.1} parent=1 // pred_check
      _
    $region3: #{conv_forward.1} parent=1 // pred_check_branch
      %10 = sbr.rel (0) target = $region5
    $region4: #{conv_forward.1} parent=1 // pred_region
      _
    $region5: #{conv_forward.1} parent=1 // pred_fallthru
      _
    // Predicated region
    $region6: #{conv_forward.1} parent=1 // pred_check
      _
    $region7: #{conv_forward.1} parent=1 // pred_check_branch
      %12 = sbr.rel (0) target = $region9
    $region8: #{conv_forward.1} parent=1 // pred_region
      _
    $region9: #{conv_forward.1} parent=1 // pred_fallthru
      _
    // Predicated region
    $region10: #{conv_forward.1} parent=1 // pred_check
      _
    $region11: #{conv_forward.1} parent=1 // pred_check_branch
      %14 = sbr.rel (0) target = $region13
    $region12: #{conv_forward.1} parent=1 // pred_region
      _
    $region13: #{conv_forward.1} parent=1 // pred_fallthru
      _
    %v16 = vld [vmem:[%s1] sm:$0xf]
    %v17 = vld [vmem:[%s1 + $0x4] sm:$0xf]
    %v18 = vld [vmem:[%s1 + $0x8] sm:$0xf]
    %v19 = vld [vmem:[%s1 + $0xc] sm:$0xf]
    %v20 = vld [vmem:[%s1 + $0x10] sm:$0xf]
    %v21 = vld [vmem:[%s1 + $0x14] sm:$0xf]
    %v22 = vld [vmem:[%s1 + $0x18] sm:$0x1]
    %v23 = vld [vmem:[%s1 + $0x1c] sm:$0xf]
    %v24 = vld [vmem:[%s1 + $0x20] sm:$0xf]
    %v25 = vld [vmem:[%s1 + $0x24] sm:$0xf]
    %v26 = vld [vmem:[%s1 + $0x28] sm:$0xf]
    %v27 = vld [vmem:[%s1 + $0x2c] sm:$0xf]
    %v28 = vld [vmem:[%s1 + $0x30] sm:$0xf]
    %v29 = vld [vmem:[%s1 + $0x34] sm:$0xf]
    %v30 = vld [vmem:[%s1 + $0x38] sm:$0xf]
    %v31 = vld [vmem:[%s1 + $0x3c] sm:$0xf]
    %v32 = vld [vmem:[%s1 + $0x40] sm:$0xf]
    %v33 = vld [vmem:[%s1 + $0x44] sm:$0xf]
    %v34 = vld [vmem:[%s1 + $0x48] sm:$0xf]
    %v35 = vld [vmem:[%s1 + $0x4c] sm:$0xf]
    %v36 = vld [vmem:[%s1 + $0x50] sm:$0xf]
    %v37 = vld [vmem:[%s1 + $0x54] sm:$0xf]
    %v38 = vld [vmem:[%s1 + $0x58] sm:$0xf]
    %v39 = vld [vmem:[%s1 + $0x5c] sm:$0xf]
    %v40 = vld [vmem:[%s1 + $0x60] sm:$0xf]
    %v41 = vld [vmem:[%s1 + $0x64] sm:$0xf]
    %v42 = vld [vmem:[%s1 + $0x68] sm:$0xf]
    %v43 = vld [vmem:[%s1 + $0x6c] sm:$0xf]
    %v44 = vld [vmem:[%s1 + $0x70] sm:$0xf]
    %v45 = vld [vmem:[%s1 + $0x74] sm:$0xf]
    %v46 = vld [vmem:[%s1 + $0x78] sm:$0xf]
    %v47 = vld [vmem:[%s1 + $0x7c] sm:$0xf]
    %v48 = vld [vmem:[%s1 + $0x80] sm:$0xf]
    %v49 = vld [vmem:[%s1 + $0x84] sm:$0xf]
    %v50 = vld [vmem:[%s1 + $0x88] sm:$0xf]
    %v51 = vld [vmem:[%s1 + $0x8c] sm:$0xf]
    %v52 = vld [vmem:[%s1 + $0x90] sm:$0xf]
    %v53 = vld [vmem:[%s1 + $0x94] sm:$0xf]
    %v54 = vld [vmem:[%s1 + $0x98] sm:$0xf]
    %v55 = vld [vmem:[%s1 + $0x9c] sm:$0xf]
    %v56 = vld [vmem:[%s1 + $0xa0] sm:$0xf]
    %v57 = vld [vmem:[%s1 + $0xa4] sm:$0xf]
    %v58 = vld [vmem:[%s1 + $0xa8] sm:$0xf]
    %v59 = vld [vmem:[%s1 + $0xac] sm:$0xf]
    %v60 = vld [vmem:[%s1 + $0xb0] sm:$0xf]
    %v61 = vld [vmem:[%s1 + $0xb4] sm:$0xf]
    %v62 = vld [vmem:[%s1 + $0xb8] sm:$0xf]
    %v63 = vld [vmem:[%s1 + $0xbc] sm:$0xf]
    %v64 = vld [vmem:[%s1 + $0xc0] sm:$0xf]
    %v65 = vld [vmem:[%s1 + $0xc4] sm:$0xf]
    %v66 = vld [vmem:[%s1 + $0xc8] sm:$0xf]
    %v67 = vld [vmem:[%s1 + $0xcc] sm:$0xf]
    %v68 = vld [vmem:[%s1 + $0xd0] sm:$0xf]
    %v69 = vld [vmem:[%s1 + $0xd4] sm:$0xf]
    %v70 = vld [vmem:[%s1 + $0xd8] sm:$0xf]
    %v71 = vld [vmem:[%s1 + $0xdc] sm:$0xf]
    %v72 = vld [vmem:[%s1 + $0xe0] sm:$0xf]
    %v73 = vld [vmem:[%s1 + $0xe4] sm:$0xf]
    %v74 = vld [vmem:[%s1 + $0xe8] sm:$0xf]
    %v75 = vld [vmem:[%s1 + $0xec] sm:$0xf]
    %v76 = vld [vmem:[%s1 + $0xf0] sm:$0xf]
    %v77 = vld [vmem:[%s1 + $0xf4] sm:$0xf]
    %v78 = vld [vmem:[%s1 + $0xf8] sm:$0xf]
    %v79 = vld [vmem:[%s1 + $0xfc] sm:$0xf]
    %v80 = vld [vmem:[%s1 + $0x100] sm:$0xf]
    %v81 = vld [vmem:[%s1 + $0x104] sm:$0xf]
    %v82 = vld [vmem:[%s1 + $0x108] sm:$0xf]
    %v83 = vld [vmem:[%s1 + $0x10c] sm:$0xf]
    %v84 = vld [vmem:[%s1 + $0x110] sm:$0xf]
    %v85 = vld [vmem:[%s1 + $0x114] sm:$0xf]
    %v86 = vld [vmem:[%s1 + $0x118] sm:$0xf]
    %v87 = vld [vmem:[%s1 + $0x11c] sm:$0xf]
    %v88 = vld [vmem:[%s1 + $0x120] sm:$0xf]
    %v89 = vld [vmem:[%s1 + $0x124] sm:$0xf]
    %v90 = vld [vmem:[%s1 + $0x128] sm:$0xf]
    %v91 = vld [vmem:[%s1 + $0x12c] sm:$0xf]
    %v92 = vld [vmem:[%s1 + $0x130] sm:$0xf]
    %v93 = vld [vmem:[%s1 + $0x134] sm:$0xf]
    %v94 = vld [vmem:[%s1 + $0x138] sm:$0xf]
    %v95 = vld [vmem:[%s1 + $0x13c] sm:$0xf]
    %v96 = vld [vmem:[%s1 + $0x140] sm:$0xf]
    %v97 = vld [vmem:[%s1 + $0x144] sm:$0x1]
    %v98 = vld [vmem:[%s1 + $0x148] sm:$0xf]
    %v99 = vld [vmem:[%s1 + $0x14c] sm:$0x1]
    %v100 = vld [vmem:[%s2] sm:$0xff]
    %v101 = vld [vmem:[%s0] sm:$0xff]
    %v102 = vld [vmem:[%s0 + $0x8] sm:$0xff]
    %v103 = vld [vmem:[%s0 + $0x10] sm:$0xff]
    %v104 = vld [vmem:[%s0 + $0x18] sm:$0xff]
    %v105 = vld [vmem:[%s0 + $0x20] sm:$0xff]
    %v106 = vld [vmem:[%s0 + $0x28] sm:$0xff]
    %v107 = vld [vmem:[%s0 + $0x30] sm:$0xff]
    %v108 = vld [vmem:[%s0 + $0x38] sm:$0xff]
    %v109 = vld [vmem:[%s0 + $0x40] sm:$0xff]
    %v110 = vld [vmem:[%s0 + $0x48] sm:$0xff]
    %v111 = vld [vmem:[%s0 + $0x50] sm:$0xff]
    %v112 = vld [vmem:[%s0 + $0x58] sm:$0xff]
    %v113 = vld [vmem:[%s0 + $0x60] sm:$0xff]
    %v114 = vld [vmem:[%s0 + $0x68] sm:$0xff]
    %v115 = vld [vmem:[%s0 + $0x70] sm:$0xff]
    %v116 = vld [vmem:[%s0 + $0x78] sm:$0xff]
    %v117 = vld [vmem:[%s0 + $0x80] sm:$0xff]
    %v118 = vld [vmem:[%s0 + $0x88] sm:$0xff]
    %v119 = vld [vmem:[%s0 + $0x90] sm:$0xff]
    %v120 = vld [vmem:[%s0 + $0x98] sm:$0xff]
    %v121 = vld [vmem:[%s0 + $0xa0] sm:$0xff]
    %v122 = vld [vmem:[%s0 + $0xa8] sm:$0xff]
    %vm144 = vcmask 1046528
    %v145 = vrot.slane %v101, 1
    %v146 = vrot.slane %v102, 1
    %v147 = vsel %vm144, %v145, %v146
    %v148 = vrot.slane %v103, 1
    %v149 = vsel %vm144, %v146, %v148
    %v150 = vrot.slane %v104, 1
    %v151 = vsel %vm144, %v148, %v150
    %v152 = vrot.slane %v105, 1
    %v153 = vsel %vm144, %v150, %v152
    %v154 = vrot.slane %v106, 1
    %v155 = vsel %vm144, %v152, %v154
    %v156 = vrot.slane %v107, 1
    %v157 = vsel %vm144, %v154, %v156
    %v158 = vrot.slane %v108, 1
    %v159 = vsel %vm144, %v156, %v158
    %v160 = vrot.slane %v109, 1
    %v161 = vsel %vm144, %v158, %v160
    %v162 = vrot.slane %v110, 1
    %v163 = vsel %vm144, %v160, %v162
    %v164 = vrot.slane %v111, 1
    %v165 = vsel %vm144, %v162, %v164
    %v166 = vrot.slane %v112, 1
    %v167 = vsel %vm144, %v164, %v166
    %v168 = vrot.slane %v113, 1
    %v169 = vsel %vm144, %v166, %v168
    %v170 = vrot.slane %v114, 1
    %v171 = vsel %vm144, %v168, %v170
    %v172 = vrot.slane %v115, 1
    %v173 = vsel %vm144, %v170, %v172
    %v174 = vrot.slane %v116, 1
    %v175 = vsel %vm144, %v172, %v174
    %v176 = vrot.slane %v117, 1
    %v177 = vsel %vm144, %v174, %v176
    %v178 = vrot.slane %v118, 1
    %v179 = vsel %vm144, %v176, %v178
    %v180 = vrot.slane %v119, 1
    %v181 = vsel %vm144, %v178, %v180
    %v182 = vrot.slane %v120, 1
    %v183 = vsel %vm144, %v180, %v182
    %v184 = vrot.slane %v121, 1
    %v185 = vsel %vm144, %v182, %v184
    %186 = vrot.lane.b32.xlu0 %v147, 5
    %v187 = vpop.permute.xlu0 %186
    %188 = vrot.lane.b32.xlu0 %v149, 5
    %v189 = vpop.permute.xlu0 %188
    %190 = vrot.lane.b32.xlu0 %v151, 5
    %v191 = vpop.permute.xlu0 %190
    %192 = vrot.lane.b32.xlu0 %v153, 5
    %v193 = vpop.permute.xlu0 %192
    %194 = vrot.lane.b32.xlu0 %v155, 5
    %v195 = vpop.permute.xlu0 %194
    %196 = vrot.lane.b32.xlu0 %v157, 5
    %v197 = vpop.permute.xlu0 %196
    %198 = vrot.lane.b32.xlu0 %v159, 5
    %v199 = vpop.permute.xlu0 %198
    %200 = vrot.lane.b32.xlu0 %v161, 5
    %v201 = vpop.permute.xlu0 %200
    %202 = vrot.lane.b32.xlu0 %v163, 5
    %v203 = vpop.permute.xlu0 %202
    %204 = vrot.lane.b32.xlu0 %v165, 5
    %v205 = vpop.permute.xlu0 %204
    %206 = vrot.lane.b32.xlu0 %v167, 5
    %v207 = vpop.permute.xlu0 %206
    %208 = vrot.lane.b32.xlu0 %v169, 5
    %v209 = vpop.permute.xlu0 %208
    %210 = vrot.lane.b32.xlu0 %v171, 5
    %v211 = vpop.permute.xlu0 %210
    %212 = vrot.lane.b32.xlu0 %v173, 5
    %v213 = vpop.permute.xlu0 %212
    %214 = vrot.lane.b32.xlu0 %v175, 5
    %v215 = vpop.permute.xlu0 %214
    %216 = vrot.lane.b32.xlu0 %v177, 5
    %v217 = vpop.permute.xlu0 %216
    %218 = vrot.lane.b32.xlu0 %v179, 5
    %v219 = vpop.permute.xlu0 %218
    %220 = vrot.lane.b32.xlu0 %v181, 5
    %v221 = vpop.permute.xlu0 %220
    %222 = vrot.lane.b32.xlu0 %v183, 5
    %v223 = vpop.permute.xlu0 %222
    %224 = vrot.lane.b32.xlu0 %v185, 5
    %v225 = vpop.permute.xlu0 %224
    %vm246 = vcmask 1045504
    %v247 = vrot.slane %v101, 2
    %v248 = vrot.slane %v102, 2
    %v249 = vsel %vm246, %v247, %v248
    %v250 = vrot.slane %v103, 2
    %v251 = vsel %vm246, %v248, %v250
    %v252 = vrot.slane %v104, 2
    %v253 = vsel %vm246, %v250, %v252
    %v254 = vrot.slane %v105, 2
    %v255 = vsel %vm246, %v252, %v254
    %v256 = vrot.slane %v106, 2
    %v257 = vsel %vm246, %v254, %v256
    %v258 = vrot.slane %v107, 2
    %v259 = vsel %vm246, %v256, %v258
    %v260 = vrot.slane %v108, 2
    %v261 = vsel %vm246, %v258, %v260
    %v262 = vrot.slane %v109, 2
    %v263 = vsel %vm246, %v260, %v262
    %v264 = vrot.slane %v110, 2
    %v265 = vsel %vm246, %v262, %v264
    %v266 = vrot.slane %v111, 2
    %v267 = vsel %vm246, %v264, %v266
    %v268 = vrot.slane %v112, 2
    %v269 = vsel %vm246, %v266, %v268
    %v270 = vrot.slane %v113, 2
    %v271 = vsel %vm246, %v268, %v270
    %v272 = vrot.slane %v114, 2
    %v273 = vsel %vm246, %v270, %v272
    %v274 = vrot.slane %v115, 2
    %v275 = vsel %vm246, %v272, %v274
    %v276 = vrot.slane %v116, 2
    %v277 = vsel %vm246, %v274, %v276
    %v278 = vrot.slane %v117, 2
    %v279 = vsel %vm246, %v276, %v278
    %v280 = vrot.slane %v118, 2
    %v281 = vsel %vm246, %v278, %v280
    %v282 = vrot.slane %v119, 2
    %v283 = vsel %vm246, %v280, %v282
    %v284 = vrot.slane %v120, 2
    %v285 = vsel %vm246, %v282, %v284
    %v286 = vrot.slane %v121, 2
    %v287 = vsel %vm246, %v284, %v286
    %288 = vrot.lane.b32.xlu0 %v249, 10
    %v289 = vpop.permute.xlu0 %288
    %290 = vrot.lane.b32.xlu0 %v251, 10
    %v291 = vpop.permute.xlu0 %290
    %292 = vrot.lane.b32.xlu0 %v253, 10
    %v293 = vpop.permute.xlu0 %292
    %294 = vrot.lane.b32.xlu0 %v255, 10
    %v295 = vpop.permute.xlu0 %294
    %296 = vrot.lane.b32.xlu0 %v257, 10
    %v297 = vpop.permute.xlu0 %296
    %298 = vrot.lane.b32.xlu0 %v259, 10
    %v299 = vpop.permute.xlu0 %298
    %300 = vrot.lane.b32.xlu0 %v261, 10
    %v301 = vpop.permute.xlu0 %300
    %302 = vrot.lane.b32.xlu0 %v263, 10
    %v303 = vpop.permute.xlu0 %302
    %304 = vrot.lane.b32.xlu0 %v265, 10
    %v305 = vpop.permute.xlu0 %304
    %306 = vrot.lane.b32.xlu0 %v267, 10
    %v307 = vpop.permute.xlu0 %306
    %308 = vrot.lane.b32.xlu0 %v269, 10
    %v309 = vpop.permute.xlu0 %308
    %310 = vrot.lane.b32.xlu0 %v271, 10
    %v311 = vpop.permute.xlu0 %310
    %312 = vrot.lane.b32.xlu0 %v273, 10
    %v313 = vpop.permute.xlu0 %312
    %314 = vrot.lane.b32.xlu0 %v275, 10
    %v315 = vpop.permute.xlu0 %314
    %316 = vrot.lane.b32.xlu0 %v277, 10
    %v317 = vpop.permute.xlu0 %316
    %318 = vrot.lane.b32.xlu0 %v279, 10
    %v319 = vpop.permute.xlu0 %318
    %320 = vrot.lane.b32.xlu0 %v281, 10
    %v321 = vpop.permute.xlu0 %320
    %322 = vrot.lane.b32.xlu0 %v283, 10
    %v323 = vpop.permute.xlu0 %322
    %324 = vrot.lane.b32.xlu0 %v285, 10
    %v325 = vpop.permute.xlu0 %324
    %326 = vrot.lane.b32.xlu0 %v287, 10
    %v327 = vpop.permute.xlu0 %326
    %vm348 = vcmask 1044480
    %v349 = vrot.slane %v101, 3
    %v350 = vrot.slane %v102, 3
    %v351 = vsel %vm348, %v349, %v350
    %v352 = vrot.slane %v103, 3
    %v353 = vsel %vm348, %v350, %v352
    %v354 = vrot.slane %v104, 3
    %v355 = vsel %vm348, %v352, %v354
    %v356 = vrot.slane %v105, 3
    %v357 = vsel %vm348, %v354, %v356
    %v358 = vrot.slane %v106, 3
    %v359 = vsel %vm348, %v356, %v358
    %v360 = vrot.slane %v107, 3
    %v361 = vsel %vm348, %v358, %v360
    %v362 = vrot.slane %v108, 3
    %v363 = vsel %vm348, %v360, %v362
    %v364 = vrot.slane %v109, 3
    %v365 = vsel %vm348, %v362, %v364
    %v366 = vrot.slane %v110, 3
    %v367 = vsel %vm348, %v364, %v366
    %v368 = vrot.slane %v111, 3
    %v369 = vsel %vm348, %v366, %v368
    %v370 = vrot.slane %v112, 3
    %v371 = vsel %vm348, %v368, %v370
    %v372 = vrot.slane %v113, 3
    %v373 = vsel %vm348, %v370, %v372
    %v374 = vrot.slane %v114, 3
    %v375 = vsel %vm348, %v372, %v374
    %v376 = vrot.slane %v115, 3
    %v377 = vsel %vm348, %v374, %v376
    %v378 = vrot.slane %v116, 3
    %v379 = vsel %vm348, %v376, %v378
    %v380 = vrot.slane %v117, 3
    %v381 = vsel %vm348, %v378, %v380
    %v382 = vrot.slane %v118, 3
    %v383 = vsel %vm348, %v380, %v382
    %v384 = vrot.slane %v119, 3
    %v385 = vsel %vm348, %v382, %v384
    %v386 = vrot.slane %v120, 3
    %v387 = vsel %vm348, %v384, %v386
    %v388 = vrot.slane %v121, 3
    %v389 = vsel %vm348, %v386, %v388
    %390 = vrot.lane.b32.xlu0 %v351, 15
    %v391 = vpop.permute.xlu0 %390
    %392 = vrot.lane.b32.xlu0 %v353, 15
    %v393 = vpop.permute.xlu0 %392
    %394 = vrot.lane.b32.xlu0 %v355, 15
    %v395 = vpop.permute.xlu0 %394
    %396 = vrot.lane.b32.xlu0 %v357, 15
    %v397 = vpop.permute.xlu0 %396
    %398 = vrot.lane.b32.xlu0 %v359, 15
    %v399 = vpop.permute.xlu0 %398
    %400 = vrot.lane.b32.xlu0 %v361, 15
    %v401 = vpop.permute.xlu0 %400
    %402 = vrot.lane.b32.xlu0 %v363, 15
    %v403 = vpop.permute.xlu0 %402
    %404 = vrot.lane.b32.xlu0 %v365, 15
    %v405 = vpop.permute.xlu0 %404
    %406 = vrot.lane.b32.xlu0 %v367, 15
    %v407 = vpop.permute.xlu0 %406
    %408 = vrot.lane.b32.xlu0 %v369, 15
    %v409 = vpop.permute.xlu0 %408
    %410 = vrot.lane.b32.xlu0 %v371, 15
    %v411 = vpop.permute.xlu0 %410
    %412 = vrot.lane.b32.xlu0 %v373, 15
    %v413 = vpop.permute.xlu0 %412
    %414 = vrot.lane.b32.xlu0 %v375, 15
    %v415 = vpop.permute.xlu0 %414
    %416 = vrot.lane.b32.xlu0 %v377, 15
    %v417 = vpop.permute.xlu0 %416
    %418 = vrot.lane.b32.xlu0 %v379, 15
    %v419 = vpop.permute.xlu0 %418
    %420 = vrot.lane.b32.xlu0 %v381, 15
    %v421 = vpop.permute.xlu0 %420
    %422 = vrot.lane.b32.xlu0 %v383, 15
    %v423 = vpop.permute.xlu0 %422
    %424 = vrot.lane.b32.xlu0 %v385, 15
    %v425 = vpop.permute.xlu0 %424
    %426 = vrot.lane.b32.xlu0 %v387, 15
    %v427 = vpop.permute.xlu0 %426
    %428 = vrot.lane.b32.xlu0 %v389, 15
    %v429 = vpop.permute.xlu0 %428
    %vm450 = vcmask 1043456
    %v451 = vrot.slane %v101, 4
    %v452 = vrot.slane %v102, 4
    %v453 = vsel %vm450, %v451, %v452
    %v454 = vrot.slane %v103, 4
    %v455 = vsel %vm450, %v452, %v454
    %v456 = vrot.slane %v104, 4
    %v457 = vsel %vm450, %v454, %v456
    %v458 = vrot.slane %v105, 4
    %v459 = vsel %vm450, %v456, %v458
    %v460 = vrot.slane %v106, 4
    %v461 = vsel %vm450, %v458, %v460
    %v462 = vrot.slane %v107, 4
    %v463 = vsel %vm450, %v460, %v462
    %v464 = vrot.slane %v108, 4
    %v465 = vsel %vm450, %v462, %v464
    %v466 = vrot.slane %v109, 4
    %v467 = vsel %vm450, %v464, %v466
    %v468 = vrot.slane %v110, 4
    %v469 = vsel %vm450, %v466, %v468
    %v470 = vrot.slane %v111, 4
    %v471 = vsel %vm450, %v468, %v470
    %v472 = vrot.slane %v112, 4
    %v473 = vsel %vm450, %v470, %v472
    %v474 = vrot.slane %v113, 4
    %v475 = vsel %vm450, %v472, %v474
    %v476 = vrot.slane %v114, 4
    %v477 = vsel %vm450, %v474, %v476
    %v478 = vrot.slane %v115, 4
    %v479 = vsel %vm450, %v476, %v478
    %v480 = vrot.slane %v116, 4
    %v481 = vsel %vm450, %v478, %v480
    %v482 = vrot.slane %v117, 4
    %v483 = vsel %vm450, %v480, %v482
    %v484 = vrot.slane %v118, 4
    %v485 = vsel %vm450, %v482, %v484
    %v486 = vrot.slane %v119, 4
    %v487 = vsel %vm450, %v484, %v486
    %v488 = vrot.slane %v120, 4
    %v489 = vsel %vm450, %v486, %v488
    %v490 = vrot.slane %v121, 4
    %v491 = vsel %vm450, %v488, %v490
    %492 = vrot.lane.b32.xlu0 %v453, 20
    %v493 = vpop.permute.xlu0 %492
    %494 = vrot.lane.b32.xlu0 %v455, 20
    %v495 = vpop.permute.xlu0 %494
    %496 = vrot.lane.b32.xlu0 %v457, 20
    %v497 = vpop.permute.xlu0 %496
    %498 = vrot.lane.b32.xlu0 %v459, 20
    %v499 = vpop.permute.xlu0 %498
    %500 = vrot.lane.b32.xlu0 %v461, 20
    %v501 = vpop.permute.xlu0 %500
    %502 = vrot.lane.b32.xlu0 %v463, 20
    %v503 = vpop.permute.xlu0 %502
    %504 = vrot.lane.b32.xlu0 %v465, 20
    %v505 = vpop.permute.xlu0 %504
    %506 = vrot.lane.b32.xlu0 %v467, 20
    %v507 = vpop.permute.xlu0 %506
    %508 = vrot.lane.b32.xlu0 %v469, 20
    %v509 = vpop.permute.xlu0 %508
    %510 = vrot.lane.b32.xlu0 %v471, 20
    %v511 = vpop.permute.xlu0 %510
    %512 = vrot.lane.b32.xlu0 %v473, 20
    %v513 = vpop.permute.xlu0 %512
    %514 = vrot.lane.b32.xlu0 %v475, 20
    %v515 = vpop.permute.xlu0 %514
    %516 = vrot.lane.b32.xlu0 %v477, 20
    %v517 = vpop.permute.xlu0 %516
    %518 = vrot.lane.b32.xlu0 %v479, 20
    %v519 = vpop.permute.xlu0 %518
    %520 = vrot.lane.b32.xlu0 %v481, 20
    %v521 = vpop.permute.xlu0 %520
    %522 = vrot.lane.b32.xlu0 %v483, 20
    %v523 = vpop.permute.xlu0 %522
    %524 = vrot.lane.b32.xlu0 %v485, 20
    %v525 = vpop.permute.xlu0 %524
    %526 = vrot.lane.b32.xlu0 %v487, 20
    %v527 = vpop.permute.xlu0 %526
    %528 = vrot.lane.b32.xlu0 %v489, 20
    %v529 = vpop.permute.xlu0 %528
    %530 = vrot.lane.b32.xlu0 %v491, 20
    %v531 = vpop.permute.xlu0 %530
    %vm552 = vcmask 1042432
    %v553 = vrot.slane %v101, 5
    %v554 = vrot.slane %v102, 5
    %v555 = vsel %vm552, %v553, %v554
    %v556 = vrot.slane %v103, 5
    %v557 = vsel %vm552, %v554, %v556
    %v558 = vrot.slane %v104, 5
    %v559 = vsel %vm552, %v556, %v558
    %v560 = vrot.slane %v105, 5
    %v561 = vsel %vm552, %v558, %v560
    %v562 = vrot.slane %v106, 5
    %v563 = vsel %vm552, %v560, %v562
    %v564 = vrot.slane %v107, 5
    %v565 = vsel %vm552, %v562, %v564
    %v566 = vrot.slane %v108, 5
    %v567 = vsel %vm552, %v564, %v566
    %v568 = vrot.slane %v109, 5
    %v569 = vsel %vm552, %v566, %v568
    %v570 = vrot.slane %v110, 5
    %v571 = vsel %vm552, %v568, %v570
    %v572 = vrot.slane %v111, 5
    %v573 = vsel %vm552, %v570, %v572
    %v574 = vrot.slane %v112, 5
    %v575 = vsel %vm552, %v572, %v574
    %v576 = vrot.slane %v113, 5
    %v577 = vsel %vm552, %v574, %v576
    %v578 = vrot.slane %v114, 5
    %v579 = vsel %vm552, %v576, %v578
    %v580 = vrot.slane %v115, 5
    %v581 = vsel %vm552, %v578, %v580
    %v582 = vrot.slane %v116, 5
    %v583 = vsel %vm552, %v580, %v582
    %v584 = vrot.slane %v117, 5
    %v585 = vsel %vm552, %v582, %v584
    %v586 = vrot.slane %v118, 5
    %v587 = vsel %vm552, %v584, %v586
    %v588 = vrot.slane %v119, 5
    %v589 = vsel %vm552, %v586, %v588
    %v590 = vrot.slane %v120, 5
    %v591 = vsel %vm552, %v588, %v590
    %v592 = vrot.slane %v121, 5
    %v593 = vsel %vm552, %v590, %v592
    %594 = vrot.lane.b32.xlu0 %v555, 25
    %v595 = vpop.permute.xlu0 %594
    %596 = vrot.lane.b32.xlu0 %v557, 25
    %v597 = vpop.permute.xlu0 %596
    %598 = vrot.lane.b32.xlu0 %v559, 25
    %v599 = vpop.permute.xlu0 %598
    %600 = vrot.lane.b32.xlu0 %v561, 25
    %v601 = vpop.permute.xlu0 %600
    %602 = vrot.lane.b32.xlu0 %v563, 25
    %v603 = vpop.permute.xlu0 %602
    %604 = vrot.lane.b32.xlu0 %v565, 25
    %v605 = vpop.permute.xlu0 %604
    %606 = vrot.lane.b32.xlu0 %v567, 25
    %v607 = vpop.permute.xlu0 %606
    %608 = vrot.lane.b32.xlu0 %v569, 25
    %v609 = vpop.permute.xlu0 %608
    %610 = vrot.lane.b32.xlu0 %v571, 25
    %v611 = vpop.permute.xlu0 %610
    %612 = vrot.lane.b32.xlu0 %v573, 25
    %v613 = vpop.permute.xlu0 %612
    %614 = vrot.lane.b32.xlu0 %v575, 25
    %v615 = vpop.permute.xlu0 %614
    %616 = vrot.lane.b32.xlu0 %v577, 25
    %v617 = vpop.permute.xlu0 %616
    %618 = vrot.lane.b32.xlu0 %v579, 25
    %v619 = vpop.permute.xlu0 %618
    %620 = vrot.lane.b32.xlu0 %v581, 25
    %v621 = vpop.permute.xlu0 %620
    %622 = vrot.lane.b32.xlu0 %v583, 25
    %v623 = vpop.permute.xlu0 %622
    %624 = vrot.lane.b32.xlu0 %v585, 25
    %v625 = vpop.permute.xlu0 %624
    %626 = vrot.lane.b32.xlu0 %v587, 25
    %v627 = vpop.permute.xlu0 %626
    %628 = vrot.lane.b32.xlu0 %v589, 25
    %v629 = vpop.permute.xlu0 %628
    %630 = vrot.lane.b32.xlu0 %v591, 25
    %v631 = vpop.permute.xlu0 %630
    %632 = vrot.lane.b32.xlu0 %v593, 25
    %v633 = vpop.permute.xlu0 %632
    %vm654 = vcmask 1041408
    %v655 = vrot.slane %v101, 6
    %v656 = vrot.slane %v102, 6
    %v657 = vsel %vm654, %v655, %v656
    %v658 = vrot.slane %v103, 6
    %v659 = vsel %vm654, %v656, %v658
    %v660 = vrot.slane %v104, 6
    %v661 = vsel %vm654, %v658, %v660
    %v662 = vrot.slane %v105, 6
    %v663 = vsel %vm654, %v660, %v662
    %v664 = vrot.slane %v106, 6
    %v665 = vsel %vm654, %v662, %v664
    %v666 = vrot.slane %v107, 6
    %v667 = vsel %vm654, %v664, %v666
    %v668 = vrot.slane %v108, 6
    %v669 = vsel %vm654, %v666, %v668
    %v670 = vrot.slane %v109, 6
    %v671 = vsel %vm654, %v668, %v670
    %v672 = vrot.slane %v110, 6
    %v673 = vsel %vm654, %v670, %v672
    %v674 = vrot.slane %v111, 6
    %v675 = vsel %vm654, %v672, %v674
    %v676 = vrot.slane %v112, 6
    %v677 = vsel %vm654, %v674, %v676
    %v678 = vrot.slane %v113, 6
    %v679 = vsel %vm654, %v676, %v678
    %v680 = vrot.slane %v114, 6
    %v681 = vsel %vm654, %v678, %v680
    %v682 = vrot.slane %v115, 6
    %v683 = vsel %vm654, %v680, %v682
    %v684 = vrot.slane %v116, 6
    %v685 = vsel %vm654, %v682, %v684
    %v686 = vrot.slane %v117, 6
    %v687 = vsel %vm654, %v684, %v686
    %v688 = vrot.slane %v118, 6
    %v689 = vsel %vm654, %v686, %v688
    %v690 = vrot.slane %v119, 6
    %v691 = vsel %vm654, %v688, %v690
    %v692 = vrot.slane %v120, 6
    %v693 = vsel %vm654, %v690, %v692
    %v694 = vrot.slane %v121, 6
    %v695 = vsel %vm654, %v692, %v694
    %696 = vrot.lane.b32.xlu0 %v657, 30
    %v697 = vpop.permute.xlu0 %696
    %698 = vrot.lane.b32.xlu0 %v659, 30
    %v699 = vpop.permute.xlu0 %698
    %700 = vrot.lane.b32.xlu0 %v661, 30
    %v701 = vpop.permute.xlu0 %700
    %702 = vrot.lane.b32.xlu0 %v663, 30
    %v703 = vpop.permute.xlu0 %702
    %704 = vrot.lane.b32.xlu0 %v665, 30
    %v705 = vpop.permute.xlu0 %704
    %706 = vrot.lane.b32.xlu0 %v667, 30
    %v707 = vpop.permute.xlu0 %706
    %708 = vrot.lane.b32.xlu0 %v669, 30
    %v709 = vpop.permute.xlu0 %708
    %710 = vrot.lane.b32.xlu0 %v671, 30
    %v711 = vpop.permute.xlu0 %710
    %712 = vrot.lane.b32.xlu0 %v673, 30
    %v713 = vpop.permute.xlu0 %712
    %714 = vrot.lane.b32.xlu0 %v675, 30
    %v715 = vpop.permute.xlu0 %714
    %716 = vrot.lane.b32.xlu0 %v677, 30
    %v717 = vpop.permute.xlu0 %716
    %718 = vrot.lane.b32.xlu0 %v679, 30
    %v719 = vpop.permute.xlu0 %718
    %720 = vrot.lane.b32.xlu0 %v681, 30
    %v721 = vpop.permute.xlu0 %720
    %722 = vrot.lane.b32.xlu0 %v683, 30
    %v723 = vpop.permute.xlu0 %722
    %724 = vrot.lane.b32.xlu0 %v685, 30
    %v725 = vpop.permute.xlu0 %724
    %726 = vrot.lane.b32.xlu0 %v687, 30
    %v727 = vpop.permute.xlu0 %726
    %728 = vrot.lane.b32.xlu0 %v689, 30
    %v729 = vpop.permute.xlu0 %728
    %730 = vrot.lane.b32.xlu0 %v691, 30
    %v731 = vpop.permute.xlu0 %730
    %732 = vrot.lane.b32.xlu0 %v693, 30
    %v733 = vpop.permute.xlu0 %732
    %734 = vrot.lane.b32.xlu0 %v695, 30
    %v735 = vpop.permute.xlu0 %734
    %vm756 = vcmask 1040384
    %v757 = vrot.slane %v101, 7
    %v758 = vrot.slane %v102, 7
    %v759 = vsel %vm756, %v757, %v758
    %v760 = vrot.slane %v103, 7
    %v761 = vsel %vm756, %v758, %v760
    %v762 = vrot.slane %v104, 7
    %v763 = vsel %vm756, %v760, %v762
    %v764 = vrot.slane %v105, 7
    %v765 = vsel %vm756, %v762, %v764
    %v766 = vrot.slane %v106, 7
    %v767 = vsel %vm756, %v764, %v766
    %v768 = vrot.slane %v107, 7
    %v769 = vsel %vm756, %v766, %v768
    %v770 = vrot.slane %v108, 7
    %v771 = vsel %vm756, %v768, %v770
    %v772 = vrot.slane %v109, 7
    %v773 = vsel %vm756, %v770, %v772
    %v774 = vrot.slane %v110, 7
    %v775 = vsel %vm756, %v772, %v774
    %v776 = vrot.slane %v111, 7
    %v777 = vsel %vm756, %v774, %v776
    %v778 = vrot.slane %v112, 7
    %v779 = vsel %vm756, %v776, %v778
    %v780 = vrot.slane %v113, 7
    %v781 = vsel %vm756, %v778, %v780
    %v782 = vrot.slane %v114, 7
    %v783 = vsel %vm756, %v780, %v782
    %v784 = vrot.slane %v115, 7
    %v785 = vsel %vm756, %v782, %v784
    %v786 = vrot.slane %v116, 7
    %v787 = vsel %vm756, %v784, %v786
    %v788 = vrot.slane %v117, 7
    %v789 = vsel %vm756, %v786, %v788
    %v790 = vrot.slane %v118, 7
    %v791 = vsel %vm756, %v788, %v790
    %v792 = vrot.slane %v119, 7
    %v793 = vsel %vm756, %v790, %v792
    %v794 = vrot.slane %v120, 7
    %v795 = vsel %vm756, %v792, %v794
    %v796 = vrot.slane %v121, 7
    %v797 = vsel %vm756, %v794, %v796
    %798 = vrot.lane.b32.xlu0 %v759, 35
    %v799 = vpop.permute.xlu0 %798
    %800 = vrot.lane.b32.xlu0 %v761, 35
    %v801 = vpop.permute.xlu0 %800
    %802 = vrot.lane.b32.xlu0 %v763, 35
    %v803 = vpop.permute.xlu0 %802
    %804 = vrot.lane.b32.xlu0 %v765, 35
    %v805 = vpop.permute.xlu0 %804
    %806 = vrot.lane.b32.xlu0 %v767, 35
    %v807 = vpop.permute.xlu0 %806
    %808 = vrot.lane.b32.xlu0 %v769, 35
    %v809 = vpop.permute.xlu0 %808
    %810 = vrot.lane.b32.xlu0 %v771, 35
    %v811 = vpop.permute.xlu0 %810
    %812 = vrot.lane.b32.xlu0 %v773, 35
    %v813 = vpop.permute.xlu0 %812
    %814 = vrot.lane.b32.xlu0 %v775, 35
    %v815 = vpop.permute.xlu0 %814
    %816 = vrot.lane.b32.xlu0 %v777, 35
    %v817 = vpop.permute.xlu0 %816
    %818 = vrot.lane.b32.xlu0 %v779, 35
    %v819 = vpop.permute.xlu0 %818
    %820 = vrot.lane.b32.xlu0 %v781, 35
    %v821 = vpop.permute.xlu0 %820
    %822 = vrot.lane.b32.xlu0 %v783, 35
    %v823 = vpop.permute.xlu0 %822
    %824 = vrot.lane.b32.xlu0 %v785, 35
    %v825 = vpop.permute.xlu0 %824
    %826 = vrot.lane.b32.xlu0 %v787, 35
    %v827 = vpop.permute.xlu0 %826
    %828 = vrot.lane.b32.xlu0 %v789, 35
    %v829 = vpop.permute.xlu0 %828
    %830 = vrot.lane.b32.xlu0 %v791, 35
    %v831 = vpop.permute.xlu0 %830
    %832 = vrot.lane.b32.xlu0 %v793, 35
    %v833 = vpop.permute.xlu0 %832
    %834 = vrot.lane.b32.xlu0 %v795, 35
    %v835 = vpop.permute.xlu0 %834
    %836 = vrot.lane.b32.xlu0 %v797, 35
    %v837 = vpop.permute.xlu0 %836
    %858 = vrot.lane.b32.xlu0 %v102, 40
    %v859 = vpop.permute.xlu0 %858
    %860 = vrot.lane.b32.xlu0 %v103, 40
    %v861 = vpop.permute.xlu0 %860
    %862 = vrot.lane.b32.xlu0 %v104, 40
    %v863 = vpop.permute.xlu0 %862
    %864 = vrot.lane.b32.xlu0 %v105, 40
    %v865 = vpop.permute.xlu0 %864
    %866 = vrot.lane.b32.xlu0 %v106, 40
    %v867 = vpop.permute.xlu0 %866
    %868 = vrot.lane.b32.xlu0 %v107, 40
    %v869 = vpop.permute.xlu0 %868
    %870 = vrot.lane.b32.xlu0 %v108, 40
    %v871 = vpop.permute.xlu0 %870
    %872 = vrot.lane.b32.xlu0 %v109, 40
    %v873 = vpop.permute.xlu0 %872
    %874 = vrot.lane.b32.xlu0 %v110, 40
    %v875 = vpop.permute.xlu0 %874
    %876 = vrot.lane.b32.xlu0 %v111, 40
    %v877 = vpop.permute.xlu0 %876
    %878 = vrot.lane.b32.xlu0 %v112, 40
    %v879 = vpop.permute.xlu0 %878
    %880 = vrot.lane.b32.xlu0 %v113, 40
    %v881 = vpop.permute.xlu0 %880
    %882 = vrot.lane.b32.xlu0 %v114, 40
    %v883 = vpop.permute.xlu0 %882
    %884 = vrot.lane.b32.xlu0 %v115, 40
    %v885 = vpop.permute.xlu0 %884
    %886 = vrot.lane.b32.xlu0 %v116, 40
    %v887 = vpop.permute.xlu0 %886
    %888 = vrot.lane.b32.xlu0 %v117, 40
    %v889 = vpop.permute.xlu0 %888
    %890 = vrot.lane.b32.xlu0 %v118, 40
    %v891 = vpop.permute.xlu0 %890
    %892 = vrot.lane.b32.xlu0 %v119, 40
    %v893 = vpop.permute.xlu0 %892
    %894 = vrot.lane.b32.xlu0 %v120, 40
    %v895 = vpop.permute.xlu0 %894
    %896 = vrot.lane.b32.xlu0 %v121, 40
    %v897 = vpop.permute.xlu0 %896
    %v919 = vrot.slane %v122, 1
    %v920 = vsel %vm144, %v184, %v919
    %921 = vrot.lane.b32.xlu0 %v149, 45
    %v922 = vpop.permute.xlu0 %921
    %923 = vrot.lane.b32.xlu0 %v151, 45
    %v924 = vpop.permute.xlu0 %923
    %925 = vrot.lane.b32.xlu0 %v153, 45
    %v926 = vpop.permute.xlu0 %925
    %927 = vrot.lane.b32.xlu0 %v155, 45
    %v928 = vpop.permute.xlu0 %927
    %929 = vrot.lane.b32.xlu0 %v157, 45
    %v930 = vpop.permute.xlu0 %929
    %931 = vrot.lane.b32.xlu0 %v159, 45
    %v932 = vpop.permute.xlu0 %931
    %933 = vrot.lane.b32.xlu0 %v161, 45
    %v934 = vpop.permute.xlu0 %933
    %935 = vrot.lane.b32.xlu0 %v163, 45
    %v936 = vpop.permute.xlu0 %935
    %937 = vrot.lane.b32.xlu0 %v165, 45
    %v938 = vpop.permute.xlu0 %937
    %939 = vrot.lane.b32.xlu0 %v167, 45
    %v940 = vpop.permute.xlu0 %939
    %941 = vrot.lane.b32.xlu0 %v169, 45
    %v942 = vpop.permute.xlu0 %941
    %943 = vrot.lane.b32.xlu0 %v171, 45
    %v944 = vpop.permute.xlu0 %943
    %945 = vrot.lane.b32.xlu0 %v173, 45
    %v946 = vpop.permute.xlu0 %945
    %947 = vrot.lane.b32.xlu0 %v175, 45
    %v948 = vpop.permute.xlu0 %947
    %949 = vrot.lane.b32.xlu0 %v177, 45
    %v950 = vpop.permute.xlu0 %949
    %951 = vrot.lane.b32.xlu0 %v179, 45
    %v952 = vpop.permute.xlu0 %951
    %953 = vrot.lane.b32.xlu0 %v181, 45
    %v954 = vpop.permute.xlu0 %953
    %955 = vrot.lane.b32.xlu0 %v183, 45
    %v956 = vpop.permute.xlu0 %955
    %957 = vrot.lane.b32.xlu0 %v185, 45
    %v958 = vpop.permute.xlu0 %957
    %959 = vrot.lane.b32.xlu0 %v920, 45
    %v960 = vpop.permute.xlu0 %959
    %vm981 = vcmask 39936
    %v982 = vsel %vm981, %v101, %v187
    %v983 = vsel %vm981, %v102, %v189
    %v984 = vsel %vm981, %v103, %v191
    %v985 = vsel %vm981, %v104, %v193
    %v986 = vsel %vm981, %v105, %v195
    %v987 = vsel %vm981, %v106, %v197
    %v988 = vsel %vm981, %v107, %v199
    %v989 = vsel %vm981, %v108, %v201
    %v990 = vsel %vm981, %v109, %v203
    %v991 = vsel %vm981, %v110, %v205
    %v992 = vsel %vm981, %v111, %v207
    %v993 = vsel %vm981, %v112, %v209
    %v994 = vsel %vm981, %v113, %v211
    %v995 = vsel %vm981, %v114, %v213
    %v996 = vsel %vm981, %v115, %v215
    %v997 = vsel %vm981, %v116, %v217
    %v998 = vsel %vm981, %v117, %v219
    %v999 = vsel %vm981, %v118, %v221
    %v1000 = vsel %vm981, %v119, %v223
    %v1001 = vsel %vm981, %v120, %v225
    %vm1002 = vcmask 80896
    %v1003 = vsel %vm1002, %v982, %v289
    %v1004 = vsel %vm1002, %v983, %v291
    %v1005 = vsel %vm1002, %v984, %v293
    %v1006 = vsel %vm1002, %v985, %v295
    %v1007 = vsel %vm1002, %v986, %v297
    %v1008 = vsel %vm1002, %v987, %v299
    %v1009 = vsel %vm1002, %v988, %v301
    %v1010 = vsel %vm1002, %v989, %v303
    %v1011 = vsel %vm1002, %v990, %v305
    %v1012 = vsel %vm1002, %v991, %v307
    %v1013 = vsel %vm1002, %v992, %v309
    %v1014 = vsel %vm1002, %v993, %v311
    %v1015 = vsel %vm1002, %v994, %v313
    %v1016 = vsel %vm1002, %v995, %v315
    %v1017 = vsel %vm1002, %v996, %v317
    %v1018 = vsel %vm1002, %v997, %v319
    %v1019 = vsel %vm1002, %v998, %v321
    %v1020 = vsel %vm1002, %v999, %v323
    %v1021 = vsel %vm1002, %v1000, %v325
    %v1022 = vsel %vm1002, %v1001, %v327
    %vm1023 = vcmask 121856
    %v1024 = vsel %vm1023, %v1003, %v391
    %v1025 = vsel %vm1023, %v1004, %v393
    %v1026 = vsel %vm1023, %v1005, %v395
    %v1027 = vsel %vm1023, %v1006, %v397
    %v1028 = vsel %vm1023, %v1007, %v399
    %v1029 = vsel %vm1023, %v1008, %v401
    %v1030 = vsel %vm1023, %v1009, %v403
    %v1031 = vsel %vm1023, %v1010, %v405
    %v1032 = vsel %vm1023, %v1011, %v407
    %v1033 = vsel %vm1023, %v1012, %v409
    %v1034 = vsel %vm1023, %v1013, %v411
    %v1035 = vsel %vm1023, %v1014, %v413
    %v1036 = vsel %vm1023, %v1015, %v415
    %v1037 = vsel %vm1023, %v1016, %v417
    %v1038 = vsel %vm1023, %v1017, %v419
    %v1039 = vsel %vm1023, %v1018, %v421
    %v1040 = vsel %vm1023, %v1019, %v423
    %v1041 = vsel %vm1023, %v1020, %v425
    %v1042 = vsel %vm1023, %v1021, %v427
    %v1043 = vsel %vm1023, %v1022, %v429
    %vm1044 = vcmask 162816
    %v1045 = vsel %vm1044, %v1024, %v493
    %v1046 = vsel %vm1044, %v1025, %v495
    %v1047 = vsel %vm1044, %v1026, %v497
    %v1048 = vsel %vm1044, %v1027, %v499
    %v1049 = vsel %vm1044, %v1028, %v501
    %v1050 = vsel %vm1044, %v1029, %v503
    %v1051 = vsel %vm1044, %v1030, %v505
    %v1052 = vsel %vm1044, %v1031, %v507
    %v1053 = vsel %vm1044, %v1032, %v509
    %v1054 = vsel %vm1044, %v1033, %v511
    %v1055 = vsel %vm1044, %v1034, %v513
    %v1056 = vsel %vm1044, %v1035, %v515
    %v1057 = vsel %vm1044, %v1036, %v517
    %v1058 = vsel %vm1044, %v1037, %v519
    %v1059 = vsel %vm1044, %v1038, %v521
    %v1060 = vsel %vm1044, %v1039, %v523
    %v1061 = vsel %vm1044, %v1040, %v525
    %v1062 = vsel %vm1044, %v1041, %v527
    %v1063 = vsel %vm1044, %v1042, %v529
    %v1064 = vsel %vm1044, %v1043, %v531
    %vm1065 = vcmask 203776
    %v1066 = vsel %vm1065, %v1045, %v595
    %v1067 = vsel %vm1065, %v1046, %v597
    %v1068 = vsel %vm1065, %v1047, %v599
    %v1069 = vsel %vm1065, %v1048, %v601
    %v1070 = vsel %vm1065, %v1049, %v603
    %v1071 = vsel %vm1065, %v1050, %v605
    %v1072 = vsel %vm1065, %v1051, %v607
    %v1073 = vsel %vm1065, %v1052, %v609
    %v1074 = vsel %vm1065, %v1053, %v611
    %v1075 = vsel %vm1065, %v1054, %v613
    %v1076 = vsel %vm1065, %v1055, %v615
    %v1077 = vsel %vm1065, %v1056, %v617
    %v1078 = vsel %vm1065, %v1057, %v619
    %v1079 = vsel %vm1065, %v1058, %v621
    %v1080 = vsel %vm1065, %v1059, %v623
    %v1081 = vsel %vm1065, %v1060, %v625
    %v1082 = vsel %vm1065, %v1061, %v627
    %v1083 = vsel %vm1065, %v1062, %v629
    %v1084 = vsel %vm1065, %v1063, %v631
    %v1085 = vsel %vm1065, %v1064, %v633
    %vm1086 = vcmask 244736
    %v1087 = vsel %vm1086, %v1066, %v697
    %v1088 = vsel %vm1086, %v1067, %v699
    %v1089 = vsel %vm1086, %v1068, %v701
    %v1090 = vsel %vm1086, %v1069, %v703
    %v1091 = vsel %vm1086, %v1070, %v705
    %v1092 = vsel %vm1086, %v1071, %v707
    %v1093 = vsel %vm1086, %v1072, %v709
    %v1094 = vsel %vm1086, %v1073, %v711
    %v1095 = vsel %vm1086, %v1074, %v713
    %v1096 = vsel %vm1086, %v1075, %v715
    %v1097 = vsel %vm1086, %v1076, %v717
    %v1098 = vsel %vm1086, %v1077, %v719
    %v1099 = vsel %vm1086, %v1078, %v721
    %v1100 = vsel %vm1086, %v1079, %v723
    %v1101 = vsel %vm1086, %v1080, %v725
    %v1102 = vsel %vm1086, %v1081, %v727
    %v1103 = vsel %vm1086, %v1082, %v729
    %v1104 = vsel %vm1086, %v1083, %v731
    %v1105 = vsel %vm1086, %v1084, %v733
    %v1106 = vsel %vm1086, %v1085, %v735
    %vm1107 = vcmask 285696
    %v1108 = vsel %vm1107, %v1087, %v799
    %v1109 = vsel %vm1107, %v1088, %v801
    %v1110 = vsel %vm1107, %v1089, %v803
    %v1111 = vsel %vm1107, %v1090, %v805
    %v1112 = vsel %vm1107, %v1091, %v807
    %v1113 = vsel %vm1107, %v1092, %v809
    %v1114 = vsel %vm1107, %v1093, %v811
    %v1115 = vsel %vm1107, %v1094, %v813
    %v1116 = vsel %vm1107, %v1095, %v815
    %v1117 = vsel %vm1107, %v1096, %v817
    %v1118 = vsel %vm1107, %v1097, %v819
    %v1119 = vsel %vm1107, %v1098, %v821
    %v1120 = vsel %vm1107, %v1099, %v823
    %v1121 = vsel %vm1107, %v1100, %v825
    %v1122 = vsel %vm1107, %v1101, %v827
    %v1123 = vsel %vm1107, %v1102, %v829
    %v1124 = vsel %vm1107, %v1103, %v831
    %v1125 = vsel %vm1107, %v1104, %v833
    %v1126 = vsel %vm1107, %v1105, %v835
    %v1127 = vsel %vm1107, %v1106, %v837
    %vm1128 = vcmask 326656
    %v1129 = vsel %vm1128, %v1108, %v859
    %v1130 = vsel %vm1128, %v1109, %v861
    %v1131 = vsel %vm1128, %v1110, %v863
    %v1132 = vsel %vm1128, %v1111, %v865
    %v1133 = vsel %vm1128, %v1112, %v867
    %v1134 = vsel %vm1128, %v1113, %v869
    %v1135 = vsel %vm1128, %v1114, %v871
    %v1136 = vsel %vm1128, %v1115, %v873
    %v1137 = vsel %vm1128, %v1116, %v875
    %v1138 = vsel %vm1128, %v1117, %v877
    %v1139 = vsel %vm1128, %v1118, %v879
    %v1140 = vsel %vm1128, %v1119, %v881
    %v1141 = vsel %vm1128, %v1120, %v883
    %v1142 = vsel %vm1128, %v1121, %v885
    %v1143 = vsel %vm1128, %v1122, %v887
    %v1144 = vsel %vm1128, %v1123, %v889
    %v1145 = vsel %vm1128, %v1124, %v891
    %v1146 = vsel %vm1128, %v1125, %v893
    %v1147 = vsel %vm1128, %v1126, %v895
    %v1148 = vsel %vm1128, %v1127, %v897
    %vm1149 = vcmask 367616
    %v1150 = vsel %vm1149, %v1129, %v922
    %v1151 = vsel %vm1149, %v1130, %v924
    %v1152 = vsel %vm1149, %v1131, %v926
    %v1153 = vsel %vm1149, %v1132, %v928
    %v1154 = vsel %vm1149, %v1133, %v930
    %v1155 = vsel %vm1149, %v1134, %v932
    %v1156 = vsel %vm1149, %v1135, %v934
    %v1157 = vsel %vm1149, %v1136, %v936
    %v1158 = vsel %vm1149, %v1137, %v938
    %v1159 = vsel %vm1149, %v1138, %v940
    %v1160 = vsel %vm1149, %v1139, %v942
    %v1161 = vsel %vm1149, %v1140, %v944
    %v1162 = vsel %vm1149, %v1141, %v946
    %v1163 = vsel %vm1149, %v1142, %v948
    %v1164 = vsel %vm1149, %v1143, %v950
    %v1165 = vsel %vm1149, %v1144, %v952
    %v1166 = vsel %vm1149, %v1145, %v954
    %v1167 = vsel %vm1149, %v1146, %v956
    %v1168 = vsel %vm1149, %v1147, %v958
    %v1169 = vsel %vm1149, %v1148, %v960
    %v1170 = vpack.c.bf16 %v1151, %v1150
    %v1171 = vpack.c.bf16 %v1153, %v1152
    %v1172 = vpack.c.bf16 %v1155, %v1154
    %v1173 = vpack.c.bf16 %v1157, %v1156
    %v1174 = vpack.c.bf16 %v1159, %v1158
    %v1175 = vpack.c.bf16 %v1161, %v1160
    %v1176 = vpack.c.bf16 %v1163, %v1162
    %v1177 = vpack.c.bf16 %v1165, %v1164
    %v1178 = vpack.c.bf16 %v1167, %v1166
    %v1179 = vpack.c.bf16 %v1169, %v1168
    %v1180 = vperm.slane %v100, 0
    %v1188 = vunpack.c.l.b16 %v16
    %v1189 = vunpack.c.l.b16 %v17
    %v1190 = vunpack.c.l.b16 %v18
    %v1191 = vunpack.c.l.b16 %v19
    %v1192 = vunpack.c.l.b16 %v20
    %v1193 = vunpack.c.l.b16 %v21
    %v1194 = vunpack.c.l.b16 %v22
    %v1195 = vpack.c.b16 %v1189, %v1188
    %v1196 = vpack.c.b16 %v1191, %v1190
    %v1197 = vpack.c.b16 %v1193, %v1192
    %v1198 = vpack.c.b16 %v1194, %v1194
    %vm1202 = vcmask 408576
    %v1204 = vsel %vm1202, %v1170, 0
    %v1207 = vsel %vm1202, %v1171, 0
    %v1210 = vsel %vm1202, %v1172, 0
    %v1213 = vsel %vm1202, %v1173, 0
    %v1216 = vsel %vm1202, %v1174, 0
    %v1219 = vsel %vm1202, %v1175, 0
    %v1222 = vsel %vm1202, %v1176, 0
    %v1225 = vsel %vm1202, %v1177, 0
    %v1228 = vsel %vm1202, %v1178, 0
    %v1231 = vsel %vm1202, %v1179, 0
    %v1234 = vsel %vm756, %v1198, 0
    %1236 = vmatpush.bf16.msra.mxu0 0
    %1237 = vmatpush.bf16.msra.mxu0 0
    %1238 = vmatpush.bf16.msra.mxu0 0
    %1239 = vmatpush.bf16.msra.mxu0 0
    %1240 = vmatpush.bf16.msra.mxu0 %v1234
    %1241 = vmatpush.bf16.msra.mxu0 %v1197
    %1242 = vmatpush.bf16.msra.mxu0 %v1196
    %1243 = vmatpush.bf16.msra.mxu0 %v1195
    %1244 = vmatmul.bf16.gmra.mxu0 %v1204
    %v1245 = vpop.f32.mrf.mxu0
    %v1246 = vadd.f32 %v1180, %v1245
    %v1247 = vpop.f32.mrf.mxu0
    %v1248 = vadd.f32 %v1180, %v1247
    %1249 = vmatmul.bf16.gmra.mxu0 %v1207
    %v1250 = vpop.f32.mrf.mxu0
    %v1251 = vadd.f32 %v1180, %v1250
    %v1252 = vpop.f32.mrf.mxu0
    %v1253 = vadd.f32 %v1180, %v1252
    %1254 = vmatmul.bf16.gmra.mxu0 %v1210
    %v1255 = vpop.f32.mrf.mxu0
    %v1256 = vadd.f32 %v1180, %v1255
    %v1257 = vpop.f32.mrf.mxu0
    %v1258 = vadd.f32 %v1180, %v1257
    %1259 = vmatmul.bf16.gmra.mxu0 %v1213
    %v1260 = vpop.f32.mrf.mxu0
    %v1261 = vadd.f32 %v1180, %v1260
    %v1262 = vpop.f32.mrf.mxu0
    %v1263 = vadd.f32 %v1180, %v1262
    %1264 = vmatmul.bf16.gmra.mxu0 %v1216
    %v1265 = vpop.f32.mrf.mxu0
    %v1266 = vadd.f32 %v1180, %v1265
    %v1267 = vpop.f32.mrf.mxu0
    %v1268 = vadd.f32 %v1180, %v1267
    %1269 = vmatmul.bf16.gmra.mxu0 %v1219
    %v1270 = vpop.f32.mrf.mxu0
    %v1271 = vadd.f32 %v1180, %v1270
    %v1272 = vpop.f32.mrf.mxu0
    %v1273 = vadd.f32 %v1180, %v1272
    %1274 = vmatmul.bf16.gmra.mxu0 %v1222
    %v1275 = vpop.f32.mrf.mxu0
    %v1276 = vadd.f32 %v1180, %v1275
    %v1277 = vpop.f32.mrf.mxu0
    %v1278 = vadd.f32 %v1180, %v1277
    %1279 = vmatmul.bf16.gmra.mxu0 %v1225
    %v1280 = vpop.f32.mrf.mxu0
    %v1281 = vadd.f32 %v1180, %v1280
    %v1282 = vpop.f32.mrf.mxu0
    %v1283 = vadd.f32 %v1180, %v1282
    %1284 = vmatmul.bf16.gmra.mxu0 %v1228
    %v1285 = vpop.f32.mrf.mxu0
    %v1286 = vadd.f32 %v1180, %v1285
    %v1287 = vpop.f32.mrf.mxu0
    %v1288 = vadd.f32 %v1180, %v1287
    %1289 = vmatmul.bf16.gmra.mxu0 %v1231
    %v1290 = vpop.f32.mrf.mxu0
    %v1291 = vadd.f32 %v1180, %v1290
    %v1292 = vpop.f32.mrf.mxu0
    %v1293 = vadd.f32 %v1180, %v1292
    %1294 = vdwg.mxu0
    %v1295 = vmax.f32 %v1246, 0.0
    %v1296 = vmax.f32 %v1248, 0.0
    %v1297 = vmax.f32 %v1251, 0.0
    %v1298 = vmax.f32 %v1253, 0.0
    %v1299 = vmax.f32 %v1256, 0.0
    %v1300 = vmax.f32 %v1258, 0.0
    %v1301 = vmax.f32 %v1261, 0.0
    %v1302 = vmax.f32 %v1263, 0.0
    %v1303 = vmax.f32 %v1266, 0.0
    %v1304 = vmax.f32 %v1268, 0.0
    %v1305 = vmax.f32 %v1271, 0.0
    %v1306 = vmax.f32 %v1273, 0.0
    %v1307 = vmax.f32 %v1276, 0.0
    %v1308 = vmax.f32 %v1278, 0.0
    %v1309 = vmax.f32 %v1281, 0.0
    %v1310 = vmax.f32 %v1283, 0.0
    %v1311 = vmax.f32 %v1286, 0.0
    %v1312 = vmax.f32 %v1288, 0.0
    %v1313 = vmax.f32 %v1291, 0.0
    %v1314 = vmax.f32 %v1293, 0.0
    %v1315 = vlaneseq
    %v1316 = vshrl.u32 %v1315, 7
    %v1317 = vadd.s32 %v1316, 8
    %v1318 = vadd.s32 %v1316, 16
    %v1319 = vadd.s32 %v1316, 24
    %v1320 = vadd.s32 %v1316, 32
    %v1321 = vadd.s32 %v1316, 40
    %v1322 = vadd.s32 %v1316, 48
    %v1323 = vadd.s32 %v1316, 56
    %v1324 = vadd.s32 %v1316, 64
    %v1325 = vadd.s32 %v1316, 72
    %v1326 = vadd.s32 %v1316, 80
    %v1327 = vadd.s32 %v1316, 88
    %v1328 = vadd.s32 %v1316, 96
    %v1329 = vadd.s32 %v1316, 104
    %v1330 = vadd.s32 %v1316, 112
    %v1331 = vadd.s32 %v1316, 120
    %v1332 = vadd.s32 %v1316, 128
    %v1333 = vadd.s32 %v1316, 136
    %v1334 = vadd.s32 %v1316, 144
    %v1335 = vadd.s32 %v1316, 152
    %vm1336 = vcmp.lt.s32.totalorder %v1316, 0
    %vm1337 = vcmp.lt.s32.totalorder %v1317, 0
    %vm1338 = vcmp.lt.s32.totalorder %v1318, 0
    %vm1339 = vcmp.lt.s32.totalorder %v1319, 0
    %vm1340 = vcmp.lt.s32.totalorder %v1320, 0
    %vm1341 = vcmp.lt.s32.totalorder %v1321, 0
    %vm1342 = vcmp.lt.s32.totalorder %v1322, 0
    %vm1343 = vcmp.lt.s32.totalorder %v1323, 0
    %vm1344 = vcmp.lt.s32.totalorder %v1324, 0
    %vm1345 = vcmp.lt.s32.totalorder %v1325, 0
    %vm1346 = vcmp.lt.s32.totalorder %v1326, 0
    %vm1347 = vcmp.lt.s32.totalorder %v1327, 0
    %vm1348 = vcmp.lt.s32.totalorder %v1328, 0
    %vm1349 = vcmp.lt.s32.totalorder %v1329, 0
    %vm1350 = vcmp.lt.s32.totalorder %v1330, 0
    %vm1351 = vcmp.lt.s32.totalorder %v1331, 0
    %vm1352 = vcmp.lt.s32.totalorder %v1332, 0
    %vm1353 = vcmp.lt.s32.totalorder %v1333, 0
    %vm1354 = vcmp.lt.s32.totalorder %v1334, 0
    %vm1355 = vcmp.lt.s32.totalorder %v1335, 0
    %vm1356 = vcmp.ge.s32.totalorder %v1316, 0
    %vm1357 = vcmp.ge.s32.totalorder %v1317, 0
    %vm1358 = vcmp.ge.s32.totalorder %v1318, 0
    %vm1359 = vcmp.ge.s32.totalorder %v1319, 0
    %vm1360 = vcmp.ge.s32.totalorder %v1320, 0
    %vm1361 = vcmp.ge.s32.totalorder %v1321, 0
    %vm1362 = vcmp.ge.s32.totalorder %v1322, 0
    %vm1363 = vcmp.ge.s32.totalorder %v1323, 0
    %vm1364 = vcmp.ge.s32.totalorder %v1324, 0
    %vm1365 = vcmp.ge.s32.totalorder %v1325, 0
    %vm1366 = vcmp.ge.s32.totalorder %v1326, 0
    %vm1367 = vcmp.ge.s32.totalorder %v1327, 0
    %vm1368 = vcmp.ge.s32.totalorder %v1328, 0
    %vm1369 = vcmp.ge.s32.totalorder %v1329, 0
    %vm1370 = vcmp.ge.s32.totalorder %v1330, 0
    %vm1371 = vcmp.ge.s32.totalorder %v1331, 0
    %vm1372 = vcmp.ge.s32.totalorder %v1332, 0
    %vm1373 = vcmp.ge.s32.totalorder %v1333, 0
    %vm1374 = vcmp.ge.s32.totalorder %v1334, 0
    %vm1375 = vcmp.ge.s32.totalorder %v1335, 0
    %vm1376 = vcmp.lt.s32.totalorder %v1316, 65
    %vm1377 = vcmp.lt.s32.totalorder %v1317, 65
    %vm1378 = vcmp.lt.s32.totalorder %v1318, 65
    %vm1379 = vcmp.lt.s32.totalorder %v1319, 65
    %vm1380 = vcmp.lt.s32.totalorder %v1320, 65
    %vm1381 = vcmp.lt.s32.totalorder %v1321, 65
    %vm1382 = vcmp.lt.s32.totalorder %v1322, 65
    %vm1383 = vcmp.lt.s32.totalorder %v1323, 65
    %vm1384 = vcmp.lt.s32.totalorder %v1324, 65
    %vm1385 = vcmp.lt.s32.totalorder %v1325, 65
    %vm1386 = vcmp.lt.s32.totalorder %v1326, 65
    %vm1387 = vcmp.lt.s32.totalorder %v1327, 65
    %vm1388 = vcmp.lt.s32.totalorder %v1328, 65
    %vm1389 = vcmp.lt.s32.totalorder %v1329, 65
    %vm1390 = vcmp.lt.s32.totalorder %v1330, 65
    %vm1391 = vcmp.lt.s32.totalorder %v1331, 65
    %vm1392 = vcmp.lt.s32.totalorder %v1332, 65
    %vm1393 = vcmp.lt.s32.totalorder %v1333, 65
    %vm1394 = vcmp.lt.s32.totalorder %v1334, 65
    %vm1395 = vcmp.lt.s32.totalorder %v1335, 65
    %vm1396 = vmand %vm1356, %vm1376
    %vm1397 = vmand %vm1357, %vm1377
    %vm1398 = vmand %vm1358, %vm1378
    %vm1399 = vmand %vm1359, %vm1379
    %vm1400 = vmand %vm1360, %vm1380
    %vm1401 = vmand %vm1361, %vm1381
    %vm1402 = vmand %vm1362, %vm1382
    %vm1403 = vmand %vm1363, %vm1383
    %vm1404 = vmand %vm1364, %vm1384
    %vm1405 = vmand %vm1365, %vm1385
    %vm1406 = vmand %vm1366, %vm1386
    %vm1407 = vmand %vm1367, %vm1387
    %vm1408 = vmand %vm1368, %vm1388
    %vm1409 = vmand %vm1369, %vm1389
    %vm1410 = vmand %vm1370, %vm1390
    %vm1411 = vmand %vm1371, %vm1391
    %vm1412 = vmand %vm1372, %vm1392
    %vm1413 = vmand %vm1373, %vm1393
    %vm1414 = vmand %vm1374, %vm1394
    %vm1415 = vmand %vm1375, %vm1395
    %vm1416 = vmor %vm1336, %vm1396
    %vm1417 = vmor %vm1337, %vm1397
    %vm1418 = vmor %vm1338, %vm1398
    %vm1419 = vmor %vm1339, %vm1399
    %vm1420 = vmor %vm1340, %vm1400
    %vm1421 = vmor %vm1341, %vm1401
    %vm1422 = vmor %vm1342, %vm1402
    %vm1423 = vmor %vm1343, %vm1403
    %vm1424 = vmor %vm1344, %vm1404
    %vm1425 = vmor %vm1345, %vm1405
    %vm1426 = vmor %vm1346, %vm1406
    %vm1427 = vmor %vm1347, %vm1407
    %vm1428 = vmor %vm1348, %vm1408
    %vm1429 = vmor %vm1349, %vm1409
    %vm1430 = vmor %vm1350, %vm1410
    %vm1431 = vmor %vm1351, %vm1411
    %vm1432 = vmor %vm1352, %vm1412
    %vm1433 = vmor %vm1353, %vm1413
    %vm1434 = vmor %vm1354, %vm1414
    %vm1435 = vmor %vm1355, %vm1415
    %vm1436 = vcmp.ge.s32.totalorder %v1316, 80
    %vm1437 = vcmp.ge.s32.totalorder %v1317, 80
    %vm1438 = vcmp.ge.s32.totalorder %v1318, 80
    %vm1439 = vcmp.ge.s32.totalorder %v1319, 80
    %vm1440 = vcmp.ge.s32.totalorder %v1320, 80
    %vm1441 = vcmp.ge.s32.totalorder %v1321, 80
    %vm1442 = vcmp.ge.s32.totalorder %v1322, 80
    %vm1443 = vcmp.ge.s32.totalorder %v1323, 80
    %vm1444 = vcmp.ge.s32.totalorder %v1324, 80
    %vm1445 = vcmp.ge.s32.totalorder %v1325, 80
    %vm1446 = vcmp.ge.s32.totalorder %v1326, 80
    %vm1447 = vcmp.ge.s32.totalorder %v1327, 80
    %vm1448 = vcmp.ge.s32.totalorder %v1328, 80
    %vm1449 = vcmp.ge.s32.totalorder %v1329, 80
    %vm1450 = vcmp.ge.s32.totalorder %v1330, 80
    %vm1451 = vcmp.ge.s32.totalorder %v1331, 80
    %vm1452 = vcmp.ge.s32.totalorder %v1332, 80
    %vm1453 = vcmp.ge.s32.totalorder %v1333, 80
    %vm1454 = vcmp.ge.s32.totalorder %v1334, 80
    %vm1455 = vcmp.ge.s32.totalorder %v1335, 80
    %vm1456 = vcmp.lt.s32.totalorder %v1316, 145
    %vm1457 = vcmp.lt.s32.totalorder %v1317, 145
    %vm1458 = vcmp.lt.s32.totalorder %v1318, 145
    %vm1459 = vcmp.lt.s32.totalorder %v1319, 145
    %vm1460 = vcmp.lt.s32.totalorder %v1320, 145
    %vm1461 = vcmp.lt.s32.totalorder %v1321, 145
    %vm1462 = vcmp.lt.s32.totalorder %v1322, 145
    %vm1463 = vcmp.lt.s32.totalorder %v1323, 145
    %vm1464 = vcmp.lt.s32.totalorder %v1324, 145
    %vm1465 = vcmp.lt.s32.totalorder %v1325, 145
    %vm1466 = vcmp.lt.s32.totalorder %v1326, 145
    %vm1467 = vcmp.lt.s32.totalorder %v1327, 145
    %vm1468 = vcmp.lt.s32.totalorder %v1328, 145
    %vm1469 = vcmp.lt.s32.totalorder %v1329, 145
    %vm1470 = vcmp.lt.s32.totalorder %v1330, 145
    %vm1471 = vcmp.lt.s32.totalorder %v1331, 145
    %vm1472 = vcmp.lt.s32.totalorder %v1332, 145
    %vm1473 = vcmp.lt.s32.totalorder %v1333, 145
    %vm1474 = vcmp.lt.s32.totalorder %v1334, 145
    %vm1475 = vcmp.lt.s32.totalorder %v1335, 145
    %vm1476 = vmand %vm1436, %vm1456
    %vm1477 = vmand %vm1437, %vm1457
    %vm1478 = vmand %vm1438, %vm1458
    %vm1479 = vmand %vm1439, %vm1459
    %vm1480 = vmand %vm1440, %vm1460
    %vm1481 = vmand %vm1441, %vm1461
    %vm1482 = vmand %vm1442, %vm1462
    %vm1483 = vmand %vm1443, %vm1463
    %vm1484 = vmand %vm1444, %vm1464
    %vm1485 = vmand %vm1445, %vm1465
    %vm1486 = vmand %vm1446, %vm1466
    %vm1487 = vmand %vm1447, %vm1467
    %vm1488 = vmand %vm1448, %vm1468
    %vm1489 = vmand %vm1449, %vm1469
    %vm1490 = vmand %vm1450, %vm1470
    %vm1491 = vmand %vm1451, %vm1471
    %vm1492 = vmand %vm1452, %vm1472
    %vm1493 = vmand %vm1453, %vm1473
    %vm1494 = vmand %vm1454, %vm1474
    %vm1495 = vmand %vm1455, %vm1475
    %vm1496 = vmor %vm1416, %vm1476
    %vm1497 = vmor %vm1417, %vm1477
    %vm1498 = vmor %vm1418, %vm1478
    %vm1499 = vmor %vm1419, %vm1479
    %vm1500 = vmor %vm1420, %vm1480
    %vm1501 = vmor %vm1421, %vm1481
    %vm1502 = vmor %vm1422, %vm1482
    %vm1503 = vmor %vm1423, %vm1483
    %vm1504 = vmor %vm1424, %vm1484
    %vm1505 = vmor %vm1425, %vm1485
    %vm1506 = vmor %vm1426, %vm1486
    %vm1507 = vmor %vm1427, %vm1487
    %vm1508 = vmor %vm1428, %vm1488
    %vm1509 = vmor %vm1429, %vm1489
    %vm1510 = vmor %vm1430, %vm1490
    %vm1511 = vmor %vm1431, %vm1491
    %vm1512 = vmor %vm1432, %vm1492
    %vm1513 = vmor %vm1433, %vm1493
    %vm1514 = vmor %vm1434, %vm1494
    %vm1515 = vmor %vm1435, %vm1495
    %v1516 = vsel %vm1496, 1, 0
    %v1517 = vsel %vm1497, 1, 0
    %v1518 = vsel %vm1498, 1, 0
    %v1519 = vsel %vm1499, 1, 0
    %v1520 = vsel %vm1500, 1, 0
    %v1521 = vsel %vm1501, 1, 0
    %v1522 = vsel %vm1502, 1, 0
    %v1523 = vsel %vm1503, 1, 0
    %v1524 = vsel %vm1504, 1, 0
    %v1525 = vsel %vm1505, 1, 0
    %v1526 = vsel %vm1506, 1, 0
    %v1527 = vsel %vm1507, 1, 0
    %v1528 = vsel %vm1508, 1, 0
    %v1529 = vsel %vm1509, 1, 0
    %v1530 = vsel %vm1510, 1, 0
    %v1531 = vsel %vm1511, 1, 0
    %v1532 = vsel %vm1512, 1, 0
    %v1533 = vsel %vm1513, 1, 0
    %v1534 = vsel %vm1514, 1, 0
    %v1535 = vsel %vm1515, 1, 0
    %v1536 = vcvt.s32.f32 %v1516
    %v1537 = vcvt.s32.f32 %v1517
    %v1538 = vcvt.s32.f32 %v1518
    %v1539 = vcvt.s32.f32 %v1519
    %v1540 = vcvt.s32.f32 %v1520
    %v1541 = vcvt.s32.f32 %v1521
    %v1542 = vcvt.s32.f32 %v1522
    %v1543 = vcvt.s32.f32 %v1523
    %v1544 = vcvt.s32.f32 %v1524
    %v1545 = vcvt.s32.f32 %v1525
    %v1546 = vcvt.s32.f32 %v1526
    %v1547 = vcvt.s32.f32 %v1527
    %v1548 = vcvt.s32.f32 %v1528
    %v1549 = vcvt.s32.f32 %v1529
    %v1550 = vcvt.s32.f32 %v1530
    %v1551 = vcvt.s32.f32 %v1531
    %v1552 = vcvt.s32.f32 %v1532
    %v1553 = vcvt.s32.f32 %v1533
    %v1554 = vcvt.s32.f32 %v1534
    %v1555 = vcvt.s32.f32 %v1535
    %v1556 = vmul.f32 %v1295, %v1536
    %v1557 = vmul.f32 %v1296, %v1537
    %v1558 = vmul.f32 %v1297, %v1538
    %v1559 = vmul.f32 %v1298, %v1539
    %v1560 = vmul.f32 %v1299, %v1540
    %v1561 = vmul.f32 %v1300, %v1541
    %v1562 = vmul.f32 %v1301, %v1542
    %v1563 = vmul.f32 %v1302, %v1543
    %v1564 = vmul.f32 %v1303, %v1544
    %v1565 = vmul.f32 %v1304, %v1545
    %v1566 = vmul.f32 %v1305, %v1546
    %v1567 = vmul.f32 %v1306, %v1547
    %v1568 = vmul.f32 %v1307, %v1548
    %v1569 = vmul.f32 %v1308, %v1549
    %v1570 = vmul.f32 %v1309, %v1550
    %v1571 = vmul.f32 %v1310, %v1551
    %v1572 = vmul.f32 %v1311, %v1552
    %v1573 = vmul.f32 %v1312, %v1553
    %v1574 = vmul.f32 %v1313, %v1554
    %v1575 = vmul.f32 %v1314, %v1555
    %vm1576 = vcmask 130048
    %v1577 = vsel %vm1576, %v1556, 0.0
    %v1578 = vsel %vm1576, %v1557, 0.0
    %v1579 = vadd.f32 %v1577, %v1578
    %v1580 = vsel %vm1576, %v1558, 0.0
    %v1581 = vadd.f32 %v1579, %v1580
    %v1582 = vsel %vm1576, %v1559, 0.0
    %v1583 = vadd.f32 %v1581, %v1582
    %v1584 = vsel %vm1576, %v1560, 0.0
    %v1585 = vadd.f32 %v1583, %v1584
    %v1586 = vsel %vm1576, %v1561, 0.0
    %v1587 = vadd.f32 %v1585, %v1586
    %v1588 = vsel %vm1576, %v1562, 0.0
    %v1589 = vadd.f32 %v1587, %v1588
    %v1590 = vsel %vm1576, %v1563, 0.0
    %v1591 = vadd.f32 %v1589, %v1590
    %v1592 = vsel %vm1576, %v1564, 0.0
    %v1593 = vadd.f32 %v1591, %v1592
    %v1594 = vsel %vm1576, %v1565, 0.0
    %v1595 = vadd.f32 %v1593, %v1594
    %v1596 = vsel %vm1576, %v1566, 0.0
    %v1597 = vadd.f32 %v1595, %v1596
    %v1598 = vsel %vm1576, %v1567, 0.0
    %v1599 = vadd.f32 %v1597, %v1598
    %v1600 = vsel %vm1576, %v1568, 0.0
    %v1601 = vadd.f32 %v1599, %v1600
    %v1602 = vsel %vm1576, %v1569, 0.0
    %v1603 = vadd.f32 %v1601, %v1602
    %v1604 = vsel %vm1576, %v1570, 0.0
    %v1605 = vadd.f32 %v1603, %v1604
    %v1606 = vsel %vm1576, %v1571, 0.0
    %v1607 = vadd.f32 %v1605, %v1606
    %v1608 = vsel %vm1576, %v1572, 0.0
    %v1609 = vadd.f32 %v1607, %v1608
    %v1610 = vsel %vm1576, %v1573, 0.0
    %v1611 = vadd.f32 %v1609, %v1610
    %v1612 = vsel %vm1576, %v1574, 0.0
    %v1613 = vadd.f32 %v1611, %v1612
    %v1614 = vsel %vm1576, %v1575, 0.0
    %v1615 = vadd.f32 %v1613, %v1614
    %v1616 = vrot.slane %v1615, 4
    %v1617 = vadd.f32 %v1615, %v1616
    %v1618 = vrot.slane %v1617, 2
    %v1619 = vadd.f32 %v1617, %v1618
    %v1620 = vrot.slane %v1619, 1
    %v1621 = vadd.f32 %v1619, %v1620
    %v1622 = vmul.f32 %v1621, 0.0076923077
    %v1623 = vmul.f32 %v1295, %v1295
    %v1624 = vmul.f32 %v1296, %v1296
    %v1625 = vmul.f32 %v1297, %v1297
    %v1626 = vmul.f32 %v1298, %v1298
    %v1627 = vmul.f32 %v1299, %v1299
    %v1628 = vmul.f32 %v1300, %v1300
    %v1629 = vmul.f32 %v1301, %v1301
    %v1630 = vmul.f32 %v1302, %v1302
    %v1631 = vmul.f32 %v1303, %v1303
    %v1632 = vmul.f32 %v1304, %v1304
    %v1633 = vmul.f32 %v1305, %v1305
    %v1634 = vmul.f32 %v1306, %v1306
    %v1635 = vmul.f32 %v1307, %v1307
    %v1636 = vmul.f32 %v1308, %v1308
    %v1637 = vmul.f32 %v1309, %v1309
    %v1638 = vmul.f32 %v1310, %v1310
    %v1639 = vmul.f32 %v1311, %v1311
    %v1640 = vmul.f32 %v1312, %v1312
    %v1641 = vmul.f32 %v1313, %v1313
    %v1642 = vmul.f32 %v1314, %v1314
    %v1643 = vmul.f32 %v1623, %v1536
    %v1644 = vmul.f32 %v1624, %v1537
    %v1645 = vmul.f32 %v1625, %v1538
    %v1646 = vmul.f32 %v1626, %v1539
    %v1647 = vmul.f32 %v1627, %v1540
    %v1648 = vmul.f32 %v1628, %v1541
    %v1649 = vmul.f32 %v1629, %v1542
    %v1650 = vmul.f32 %v1630, %v1543
    %v1651 = vmul.f32 %v1631, %v1544
    %v1652 = vmul.f32 %v1632, %v1545
    %v1653 = vmul.f32 %v1633, %v1546
    %v1654 = vmul.f32 %v1634, %v1547
    %v1655 = vmul.f32 %v1635, %v1548
    %v1656 = vmul.f32 %v1636, %v1549
    %v1657 = vmul.f32 %v1637, %v1550
    %v1658 = vmul.f32 %v1638, %v1551
    %v1659 = vmul.f32 %v1639, %v1552
    %v1660 = vmul.f32 %v1640, %v1553
    %v1661 = vmul.f32 %v1641, %v1554
    %v1662 = vmul.f32 %v1642, %v1555
    %v1663 = vsel %vm1576, %v1643, 0.0
    %v1664 = vsel %vm1576, %v1644, 0.0
    %v1665 = vadd.f32 %v1663, %v1664
    %v1666 = vsel %vm1576, %v1645, 0.0
    %v1667 = vadd.f32 %v1665, %v1666
    %v1668 = vsel %vm1576, %v1646, 0.0
    %v1669 = vadd.f32 %v1667, %v1668
    %v1670 = vsel %vm1576, %v1647, 0.0
    %v1671 = vadd.f32 %v1669, %v1670
    %v1672 = vsel %vm1576, %v1648, 0.0
    %v1673 = vadd.f32 %v1671, %v1672
    %v1674 = vsel %vm1576, %v1649, 0.0
    %v1675 = vadd.f32 %v1673, %v1674
    %v1676 = vsel %vm1576, %v1650, 0.0
    %v1677 = vadd.f32 %v1675, %v1676
    %v1678 = vsel %vm1576, %v1651, 0.0
    %v1679 = vadd.f32 %v1677, %v1678
    %v1680 = vsel %vm1576, %v1652, 0.0
    %v1681 = vadd.f32 %v1679, %v1680
    %v1682 = vsel %vm1576, %v1653, 0.0
    %v1683 = vadd.f32 %v1681, %v1682
    %v1684 = vsel %vm1576, %v1654, 0.0
    %v1685 = vadd.f32 %v1683, %v1684
    %v1686 = vsel %vm1576, %v1655, 0.0
    %v1687 = vadd.f32 %v1685, %v1686
    %v1688 = vsel %vm1576, %v1656, 0.0
    %v1689 = vadd.f32 %v1687, %v1688
    %v1690 = vsel %vm1576, %v1657, 0.0
    %v1691 = vadd.f32 %v1689, %v1690
    %v1692 = vsel %vm1576, %v1658, 0.0
    %v1693 = vadd.f32 %v1691, %v1692
    %v1694 = vsel %vm1576, %v1659, 0.0
    %v1695 = vadd.f32 %v1693, %v1694
    %v1696 = vsel %vm1576, %v1660, 0.0
    %v1697 = vadd.f32 %v1695, %v1696
    %v1698 = vsel %vm1576, %v1661, 0.0
    %v1699 = vadd.f32 %v1697, %v1698
    %v1700 = vsel %vm1576, %v1662, 0.0
    %v1701 = vadd.f32 %v1699, %v1700
    %v1702 = vrot.slane %v1701, 4
    %v1703 = vadd.f32 %v1701, %v1702
    %v1704 = vrot.slane %v1703, 2
    %v1705 = vadd.f32 %v1703, %v1704
    %v1706 = vrot.slane %v1705, 1
    %v1707 = vadd.f32 %v1705, %v1706
    %v1708 = vmul.f32 %v1707, 0.0076923077
    %v1709 = vmul.f32 %v1622, %v1622
    %v1710 = vsub.f32 %v1708, %v1709
    %v1711 = vmax.f32 %v1710, 0.0
    %v1712 = vadd.f32 %v1711, 1e-05
    %v1713 = vrsqrt.pop %v1712
    %v1714 = vmul.f32 %v1713, %v1712
    %v1715 = vmul.f32 %v1714, %v1713
    %v1716 = vmul.f32 0.5, %v1715
    %v1717 = vsub.f32 1.5, %v1716
    %v1718 = vmul.f32 %v1713, %v1717
    %vm1719 = vweird.f32 %v1712
    %vm1720 = vweird.f32 %v1713
    %vm1721 = vmor %vm1719, %vm1720
    %v1722 = vsel %vm1721, %v1713, %v1718
    %v1723 = vmul.f32 %v1722, %v100
    %v1724 = vsub.f32 %v1295, %v1622
    %v1725 = vsub.f32 %v1296, %v1622
    %v1726 = vsub.f32 %v1297, %v1622
    %v1727 = vsub.f32 %v1298, %v1622
    %v1728 = vsub.f32 %v1299, %v1622
    %v1729 = vsub.f32 %v1300, %v1622
    %v1730 = vsub.f32 %v1301, %v1622
    %v1731 = vsub.f32 %v1302, %v1622
    %v1732 = vsub.f32 %v1303, %v1622
    %v1733 = vsub.f32 %v1304, %v1622
    %v1734 = vsub.f32 %v1305, %v1622
    %v1735 = vsub.f32 %v1306, %v1622
    %v1736 = vsub.f32 %v1307, %v1622
    %v1737 = vsub.f32 %v1308, %v1622
    %v1738 = vsub.f32 %v1309, %v1622
    %v1739 = vsub.f32 %v1310, %v1622
    %v1740 = vsub.f32 %v1311, %v1622
    %v1741 = vsub.f32 %v1312, %v1622
    %v1742 = vsub.f32 %v1313, %v1622
    %v1743 = vsub.f32 %v1314, %v1622
    %v1744 = vperm.slane %v1723, 1
    %v1745 = vmul.f32 %v1724, %v1744
    %v1746 = vmul.f32 %v1725, %v1744
    %v1747 = vmul.f32 %v1726, %v1744
    %v1748 = vmul.f32 %v1727, %v1744
    %v1749 = vmul.f32 %v1728, %v1744
    %v1750 = vmul.f32 %v1729, %v1744
    %v1751 = vmul.f32 %v1730, %v1744
    %v1752 = vmul.f32 %v1731, %v1744
    %v1753 = vmul.f32 %v1732, %v1744
    %v1754 = vmul.f32 %v1733, %v1744
    %v1755 = vmul.f32 %v1734, %v1744
    %v1756 = vmul.f32 %v1735, %v1744
    %v1757 = vmul.f32 %v1736, %v1744
    %v1758 = vmul.f32 %v1737, %v1744
    %v1759 = vmul.f32 %v1738, %v1744
    %v1760 = vmul.f32 %v1739, %v1744
    %v1761 = vmul.f32 %v1740, %v1744
    %v1762 = vmul.f32 %v1741, %v1744
    %v1763 = vmul.f32 %v1742, %v1744
    %v1764 = vmul.f32 %v1743, %v1744
    %v1765 = vperm.slane %v100, 2
    %v1766 = vadd.f32 %v1745, %v1765
    %v1767 = vadd.f32 %v1746, %v1765
    %v1768 = vadd.f32 %v1747, %v1765
    %v1769 = vadd.f32 %v1748, %v1765
    %v1770 = vadd.f32 %v1749, %v1765
    %v1771 = vadd.f32 %v1750, %v1765
    %v1772 = vadd.f32 %v1751, %v1765
    %v1773 = vadd.f32 %v1752, %v1765
    %v1774 = vadd.f32 %v1753, %v1765
    %v1775 = vadd.f32 %v1754, %v1765
    %v1776 = vadd.f32 %v1755, %v1765
    %v1777 = vadd.f32 %v1756, %v1765
    %v1778 = vadd.f32 %v1757, %v1765
    %v1779 = vadd.f32 %v1758, %v1765
    %v1780 = vadd.f32 %v1759, %v1765
    %v1781 = vadd.f32 %v1760, %v1765
    %v1782 = vadd.f32 %v1761, %v1765
    %v1783 = vadd.f32 %v1762, %v1765
    %v1784 = vadd.f32 %v1763, %v1765
    %v1785 = vadd.f32 %v1764, %v1765
    %v1806 = vrot.slane %v1766, 1
    %v1807 = vrot.slane %v1767, 1
    %v1808 = vsel %vm144, %v1806, %v1807
    %v1809 = vrot.slane %v1768, 1
    %v1810 = vsel %vm144, %v1807, %v1809
    %v1811 = vrot.slane %v1769, 1
    %v1812 = vsel %vm144, %v1809, %v1811
    %v1813 = vrot.slane %v1770, 1
    %v1814 = vsel %vm144, %v1811, %v1813
    %v1815 = vrot.slane %v1771, 1
    %v1816 = vsel %vm144, %v1813, %v1815
    %v1817 = vrot.slane %v1772, 1
    %v1818 = vsel %vm144, %v1815, %v1817
    %v1819 = vrot.slane %v1773, 1
    %v1820 = vsel %vm144, %v1817, %v1819
    %v1821 = vrot.slane %v1774, 1
    %v1822 = vsel %vm144, %v1819, %v1821
    %v1823 = vrot.slane %v1775, 1
    %v1824 = vsel %vm144, %v1821, %v1823
    %v1825 = vrot.slane %v1776, 1
    %v1826 = vsel %vm144, %v1823, %v1825
    %v1827 = vrot.slane %v1777, 1
    %v1828 = vsel %vm144, %v1825, %v1827
    %v1829 = vrot.slane %v1778, 1
    %v1830 = vsel %vm144, %v1827, %v1829
    %v1831 = vrot.slane %v1779, 1
    %v1832 = vsel %vm144, %v1829, %v1831
    %v1833 = vrot.slane %v1780, 1
    %v1834 = vsel %vm144, %v1831, %v1833
    %v1835 = vrot.slane %v1781, 1
    %v1836 = vsel %vm144, %v1833, %v1835
    %v1837 = vrot.slane %v1782, 1
    %v1838 = vsel %vm144, %v1835, %v1837
    %v1839 = vrot.slane %v1783, 1
    %v1840 = vsel %vm144, %v1837, %v1839
    %v1841 = vrot.slane %v1784, 1
    %v1842 = vsel %vm144, %v1839, %v1841
    %v1843 = vrot.slane %v1785, 1
    %v1844 = vsel %vm144, %v1841, %v1843
    %v1865 = vmax.f32 %v1766, %v1808
    %v1866 = vmax.f32 %v1767, %v1810
    %v1867 = vmax.f32 %v1768, %v1812
    %v1868 = vmax.f32 %v1769, %v1814
    %v1869 = vmax.f32 %v1770, %v1816
    %v1870 = vmax.f32 %v1771, %v1818
    %v1871 = vmax.f32 %v1772, %v1820
    %v1872 = vmax.f32 %v1773, %v1822
    %v1873 = vmax.f32 %v1774, %v1824
    %v1874 = vmax.f32 %v1775, %v1826
    %v1875 = vmax.f32 %v1776, %v1828
    %v1876 = vmax.f32 %v1777, %v1830
    %v1877 = vmax.f32 %v1778, %v1832
    %v1878 = vmax.f32 %v1779, %v1834
    %v1879 = vmax.f32 %v1780, %v1836
    %v1880 = vmax.f32 %v1781, %v1838
    %v1881 = vmax.f32 %v1782, %v1840
    %v1882 = vmax.f32 %v1783, %v1842
    %v1883 = vmax.f32 %v1784, %v1844
    %v1884 = vmax.f32 %v1785, %v1843
    %v1885 = vpack.c.bf16 %v1866, %v1865
    %v1886 = vpack.c.bf16 %v1868, %v1867
    %v1887 = vpack.c.bf16 %v1870, %v1869
    %v1888 = vpack.c.bf16 %v1872, %v1871
    %v1889 = vpack.c.bf16 %v1874, %v1873
    %v1890 = vpack.c.bf16 %v1876, %v1875
    %v1891 = vpack.c.bf16 %v1878, %v1877
    %v1892 = vpack.c.bf16 %v1880, %v1879
    %v1893 = vpack.c.bf16 %v1882, %v1881
    %v1894 = vpack.c.bf16 %v1884, %v1883
    %v1895 = vlaneseq
    %v1896 = vand.u32 %v1895, 127
    %v1897 = vadd.s32 %v1896, 128
    %v1898 = vmul.u32 %v1316, 2
    %v1899 = vmul.u32 %v1317, 2
    %v1900 = vmul.u32 %v1318, 2
    %v1901 = vmul.u32 %v1319, 2
    %v1902 = vmul.u32 %v1320, 2
    %v1903 = vmul.u32 %v1321, 2
    %v1904 = vmul.u32 %v1322, 2
    %v1905 = vmul.u32 %v1323, 2
    %v1906 = vmul.u32 %v1324, 2
    %v1907 = vmul.u32 %v1325, 2
    %v1908 = vmul.u32 %v1326, 2
    %v1909 = vmul.u32 %v1327, 2
    %vm1910 = vcmp.eq.s32.totalorder %v1896, %v1898
    %vm1911 = vcmp.eq.s32.totalorder %v1897, %v1898
    %vm1912 = vcmp.eq.s32.totalorder %v1896, %v1899
    %vm1913 = vcmp.eq.s32.totalorder %v1897, %v1899
    %vm1914 = vcmp.eq.s32.totalorder %v1896, %v1900
    %vm1915 = vcmp.eq.s32.totalorder %v1897, %v1900
    %vm1916 = vcmp.eq.s32.totalorder %v1896, %v1901
    %vm1917 = vcmp.eq.s32.totalorder %v1897, %v1901
    %vm1918 = vcmp.eq.s32.totalorder %v1896, %v1902
    %vm1919 = vcmp.eq.s32.totalorder %v1897, %v1902
    %vm1920 = vcmp.eq.s32.totalorder %v1896, %v1903
    %vm1921 = vcmp.eq.s32.totalorder %v1897, %v1903
    %vm1922 = vcmp.eq.s32.totalorder %v1896, %v1904
    %vm1923 = vcmp.eq.s32.totalorder %v1897, %v1904
    %vm1924 = vcmp.eq.s32.totalorder %v1896, %v1905
    %vm1925 = vcmp.eq.s32.totalorder %v1897, %v1905
    %vm1926 = vcmp.eq.s32.totalorder %v1896, %v1906
    %vm1927 = vcmp.eq.s32.totalorder %v1897, %v1906
    %vm1928 = vcmp.eq.s32.totalorder %v1896, %v1907
    %vm1929 = vcmp.eq.s32.totalorder %v1897, %v1907
    %vm1930 = vcmp.eq.s32.totalorder %v1896, %v1908
    %vm1931 = vcmp.eq.s32.totalorder %v1897, %v1908
    %vm1932 = vcmp.eq.s32.totalorder %v1896, %v1909
    %vm1933 = vcmp.eq.s32.totalorder %v1897, %v1909
    %v1934 = vsel %vm1910, 1, 0
    %v1935 = vsel %vm1911, 1, 0
    %v1936 = vsel %vm1912, 1, 0
    %v1937 = vsel %vm1913, 1, 0
    %v1938 = vsel %vm1914, 1, 0
    %v1939 = vsel %vm1915, 1, 0
    %v1940 = vsel %vm1916, 1, 0
    %v1941 = vsel %vm1917, 1, 0
    %v1942 = vsel %vm1918, 1, 0
    %v1943 = vsel %vm1919, 1, 0
    %v1944 = vsel %vm1920, 1, 0
    %v1945 = vsel %vm1921, 1, 0
    %v1946 = vsel %vm1922, 1, 0
    %v1947 = vsel %vm1923, 1, 0
    %v1948 = vsel %vm1924, 1, 0
    %v1949 = vsel %vm1925, 1, 0
    %v1950 = vsel %vm1926, 1, 0
    %v1951 = vsel %vm1927, 1, 0
    %v1952 = vsel %vm1928, 1, 0
    %v1953 = vsel %vm1929, 1, 0
    %v1954 = vsel %vm1930, 1, 0
    %v1955 = vsel %vm1931, 1, 0
    %v1956 = vsel %vm1932, 1, 0
    %v1957 = vsel %vm1933, 1, 0
    %v1958 = vcvt.s32.f32 %v1934
    %v1959 = vcvt.s32.f32 %v1935
    %v1960 = vcvt.s32.f32 %v1936
    %v1961 = vcvt.s32.f32 %v1937
    %v1962 = vcvt.s32.f32 %v1938
    %v1963 = vcvt.s32.f32 %v1939
    %v1964 = vcvt.s32.f32 %v1940
    %v1965 = vcvt.s32.f32 %v1941
    %v1966 = vcvt.s32.f32 %v1942
    %v1967 = vcvt.s32.f32 %v1943
    %v1968 = vcvt.s32.f32 %v1944
    %v1969 = vcvt.s32.f32 %v1945
    %v1970 = vcvt.s32.f32 %v1946
    %v1971 = vcvt.s32.f32 %v1947
    %v1972 = vcvt.s32.f32 %v1948
    %v1973 = vcvt.s32.f32 %v1949
    %v1974 = vcvt.s32.f32 %v1950
    %v1975 = vcvt.s32.f32 %v1951
    %v1976 = vcvt.s32.f32 %v1952
    %v1977 = vcvt.s32.f32 %v1953
    %v1978 = vcvt.s32.f32 %v1954
    %v1979 = vcvt.s32.f32 %v1955
    %v1980 = vcvt.s32.f32 %v1956
    %v1981 = vcvt.s32.f32 %v1957
    %v1982 = vpack.c.bf16 %v1960, %v1958
    %v1983 = vpack.c.bf16 %v1961, %v1959
    %v1984 = vpack.c.bf16 %v1964, %v1962
    %v1985 = vpack.c.bf16 %v1965, %v1963
    %v1986 = vpack.c.bf16 %v1968, %v1966
    %v1987 = vpack.c.bf16 %v1969, %v1967
    %v1988 = vpack.c.bf16 %v1972, %v1970
    %v1989 = vpack.c.bf16 %v1973, %v1971
    %v1990 = vpack.c.bf16 %v1976, %v1974
    %v1991 = vpack.c.bf16 %v1977, %v1975
    %v1992 = vpack.c.bf16 %v1980, %v1978
    %v1993 = vpack.c.bf16 %v1981, %v1979
    %vm1994 = vcmask 252928
    %v1996 = vsel %vm1994, %v1983, 0
    %v1999 = vsel %vm1994, %v1985, 0
    %v2002 = vsel %vm1994, %v1987, 0
    %v2005 = vsel %vm1994, %v1989, 0
    %v2008 = vsel %vm1994, %v1991, 0
    %v2011 = vsel %vm1994, %v1993, 0
    %vm2013 = vcmask 1047552
    %v2014 = vsel %vm144, 4294967295, 65535
    %v2015 = vsel %vm2013, %v2014, 0
    %v2017 = vand.u32 %v1894, %v2015
    %2019 = vmatpush.bf16.msra.mxu0 %v1892
    %2020 = vmatpush.bf16.msra.mxu0 %v1891
    %2021 = vmatpush.bf16.msra.mxu0 %v1890
    %2022 = vmatpush.bf16.msra.mxu0 %v1889
    %2023 = vmatpush.bf16.msra.mxu0 %v1888
    %2024 = vmatpush.bf16.msra.mxu0 %v1887
    %2025 = vmatpush.bf16.msra.mxu0 %v1886
    %2026 = vmatpush.bf16.msra.mxu0 %v1885
    %2027 = vmatmul.bf16.gmra.mxu0 %v1982
    %v2028 = vpop.f32.mrf.mxu0
    %v2029 = vadd.f32 0.0, %v2028
    %v2030 = vpop.f32.mrf.mxu0
    %v2031 = vadd.f32 0.0, %v2030
    %2032 = vmatmul.bf16.gmra.mxu0 %v1984
    %v2033 = vpop.f32.mrf.mxu0
    %v2034 = vadd.f32 0.0, %v2033
    %v2035 = vpop.f32.mrf.mxu0
    %v2036 = vadd.f32 0.0, %v2035
    %2037 = vmatmul.bf16.gmra.mxu0 %v1986
    %v2038 = vpop.f32.mrf.mxu0
    %v2039 = vadd.f32 0.0, %v2038
    %v2040 = vpop.f32.mrf.mxu0
    %v2041 = vadd.f32 0.0, %v2040
    %2042 = vmatmul.bf16.gmra.mxu0 %v1988
    %v2043 = vpop.f32.mrf.mxu0
    %v2044 = vadd.f32 0.0, %v2043
    %v2045 = vpop.f32.mrf.mxu0
    %v2046 = vadd.f32 0.0, %v2045
    %2047 = vmatmul.bf16.gmra.mxu0 %v1990
    %v2048 = vpop.f32.mrf.mxu0
    %v2049 = vadd.f32 0.0, %v2048
    %v2050 = vpop.f32.mrf.mxu0
    %v2051 = vadd.f32 0.0, %v2050
    %2052 = vmatmul.bf16.gmra.mxu0 %v1992
    %v2053 = vpop.f32.mrf.mxu0
    %v2054 = vadd.f32 0.0, %v2053
    %v2055 = vpop.f32.mrf.mxu0
    %v2056 = vadd.f32 0.0, %v2055
    %2057 = vdwg.mxu0
    %2058 = vmatpush.bf16.msra.mxu0 0
    %2059 = vmatpush.bf16.msra.mxu0 0
    %2060 = vmatpush.bf16.msra.mxu0 0
    %2061 = vmatpush.bf16.msra.mxu0 0
    %2062 = vmatpush.bf16.msra.mxu0 0
    %2063 = vmatpush.bf16.msra.mxu0 0
    %2064 = vmatpush.bf16.msra.mxu0 %v2017
    %2065 = vmatpush.bf16.msra.mxu0 %v1893
    %2066 = vmatmul.bf16.gmra.mxu0 %v1996
    %v2067 = vpop.f32.mrf.mxu0
    %v2068 = vadd.f32 %v2029, %v2067
    %v2069 = vpop.f32.mrf.mxu0
    %v2070 = vadd.f32 %v2031, %v2069
    %2071 = vmatmul.bf16.gmra.mxu0 %v1999
    %v2072 = vpop.f32.mrf.mxu0
    %v2073 = vadd.f32 %v2034, %v2072
    %v2074 = vpop.f32.mrf.mxu0
    %v2075 = vadd.f32 %v2036, %v2074
    %2076 = vmatmul.bf16.gmra.mxu0 %v2002
    %v2077 = vpop.f32.mrf.mxu0
    %v2078 = vadd.f32 %v2039, %v2077
    %v2079 = vpop.f32.mrf.mxu0
    %v2080 = vadd.f32 %v2041, %v2079
    %2081 = vmatmul.bf16.gmra.mxu0 %v2005
    %v2082 = vpop.f32.mrf.mxu0
    %v2083 = vadd.f32 %v2044, %v2082
    %v2084 = vpop.f32.mrf.mxu0
    %v2085 = vadd.f32 %v2046, %v2084
    %2086 = vmatmul.bf16.gmra.mxu0 %v2008
    %v2087 = vpop.f32.mrf.mxu0
    %v2088 = vadd.f32 %v2049, %v2087
    %v2089 = vpop.f32.mrf.mxu0
    %v2090 = vadd.f32 %v2051, %v2089
    %2091 = vmatmul.bf16.gmra.mxu0 %v2011
    %v2092 = vpop.f32.mrf.mxu0
    %v2093 = vadd.f32 %v2054, %v2092
    %v2094 = vpop.f32.mrf.mxu0
    %v2095 = vadd.f32 %v2056, %v2094
    %2096 = vdwg.mxu0
    %v2108 = vrot.slane %v2068, 1
    %v2109 = vrot.slane %v2070, 1
    %v2110 = vsel %vm144, %v2108, %v2109
    %v2111 = vrot.slane %v2073, 1
    %v2112 = vsel %vm144, %v2109, %v2111
    %v2113 = vrot.slane %v2075, 1
    %v2114 = vsel %vm144, %v2111, %v2113
    %v2115 = vrot.slane %v2078, 1
    %v2116 = vsel %vm144, %v2113, %v2115
    %v2117 = vrot.slane %v2080, 1
    %v2118 = vsel %vm144, %v2115, %v2117
    %v2119 = vrot.slane %v2083, 1
    %v2120 = vsel %vm144, %v2117, %v2119
    %v2121 = vrot.slane %v2085, 1
    %v2122 = vsel %vm144, %v2119, %v2121
    %v2123 = vrot.slane %v2088, 1
    %v2124 = vsel %vm144, %v2121, %v2123
    %v2125 = vrot.slane %v2090, 1
    %v2126 = vsel %vm144, %v2123, %v2125
    %v2127 = vrot.slane %v2093, 1
    %v2128 = vsel %vm144, %v2125, %v2127
    %2129 = vrot.lane.b32.xlu0 %v2110, 16
    %v2130 = vpop.permute.xlu0 %2129
    %2131 = vrot.lane.b32.xlu0 %v2112, 16
    %v2132 = vpop.permute.xlu0 %2131
    %2133 = vrot.lane.b32.xlu0 %v2114, 16
    %v2134 = vpop.permute.xlu0 %2133
    %2135 = vrot.lane.b32.xlu0 %v2116, 16
    %v2136 = vpop.permute.xlu0 %2135
    %2137 = vrot.lane.b32.xlu0 %v2118, 16
    %v2138 = vpop.permute.xlu0 %2137
    %2139 = vrot.lane.b32.xlu0 %v2120, 16
    %v2140 = vpop.permute.xlu0 %2139
    %2141 = vrot.lane.b32.xlu0 %v2122, 16
    %v2142 = vpop.permute.xlu0 %2141
    %2143 = vrot.lane.b32.xlu0 %v2124, 16
    %v2144 = vpop.permute.xlu0 %2143
    %2145 = vrot.lane.b32.xlu0 %v2126, 16
    %v2146 = vpop.permute.xlu0 %2145
    %2147 = vrot.lane.b32.xlu0 %v2128, 16
    %v2148 = vpop.permute.xlu0 %2147
    %v2159 = vrot.slane %v2068, 2
    %v2160 = vrot.slane %v2070, 2
    %v2161 = vsel %vm246, %v2159, %v2160
    %v2162 = vrot.slane %v2073, 2
    %v2163 = vsel %vm246, %v2160, %v2162
    %v2164 = vrot.slane %v2075, 2
    %v2165 = vsel %vm246, %v2162, %v2164
    %v2166 = vrot.slane %v2078, 2
    %v2167 = vsel %vm246, %v2164, %v2166
    %v2168 = vrot.slane %v2080, 2
    %v2169 = vsel %vm246, %v2166, %v2168
    %v2170 = vrot.slane %v2083, 2
    %v2171 = vsel %vm246, %v2168, %v2170
    %v2172 = vrot.slane %v2085, 2
    %v2173 = vsel %vm246, %v2170, %v2172
    %v2174 = vrot.slane %v2088, 2
    %v2175 = vsel %vm246, %v2172, %v2174
    %v2176 = vrot.slane %v2090, 2
    %v2177 = vsel %vm246, %v2174, %v2176
    %v2178 = vrot.slane %v2093, 2
    %v2179 = vsel %vm246, %v2176, %v2178
    %2180 = vrot.lane.b32.xlu0 %v2161, 32
    %v2181 = vpop.permute.xlu0 %2180
    %2182 = vrot.lane.b32.xlu0 %v2163, 32
    %v2183 = vpop.permute.xlu0 %2182
    %2184 = vrot.lane.b32.xlu0 %v2165, 32
    %v2185 = vpop.permute.xlu0 %2184
    %2186 = vrot.lane.b32.xlu0 %v2167, 32
    %v2187 = vpop.permute.xlu0 %2186
    %2188 = vrot.lane.b32.xlu0 %v2169, 32
    %v2189 = vpop.permute.xlu0 %2188
    %2190 = vrot.lane.b32.xlu0 %v2171, 32
    %v2191 = vpop.permute.xlu0 %2190
    %2192 = vrot.lane.b32.xlu0 %v2173, 32
    %v2193 = vpop.permute.xlu0 %2192
    %2194 = vrot.lane.b32.xlu0 %v2175, 32
    %v2195 = vpop.permute.xlu0 %2194
    %2196 = vrot.lane.b32.xlu0 %v2177, 32
    %v2197 = vpop.permute.xlu0 %2196
    %2198 = vrot.lane.b32.xlu0 %v2179, 32
    %v2199 = vpop.permute.xlu0 %2198
    %v2210 = vrot.slane %v2068, 3
    %v2211 = vrot.slane %v2070, 3
    %v2212 = vsel %vm348, %v2210, %v2211
    %v2213 = vrot.slane %v2073, 3
    %v2214 = vsel %vm348, %v2211, %v2213
    %v2215 = vrot.slane %v2075, 3
    %v2216 = vsel %vm348, %v2213, %v2215
    %v2217 = vrot.slane %v2078, 3
    %v2218 = vsel %vm348, %v2215, %v2217
    %v2219 = vrot.slane %v2080, 3
    %v2220 = vsel %vm348, %v2217, %v2219
    %v2221 = vrot.slane %v2083, 3
    %v2222 = vsel %vm348, %v2219, %v2221
    %v2223 = vrot.slane %v2085, 3
    %v2224 = vsel %vm348, %v2221, %v2223
    %v2225 = vrot.slane %v2088, 3
    %v2226 = vsel %vm348, %v2223, %v2225
    %v2227 = vrot.slane %v2090, 3
    %v2228 = vsel %vm348, %v2225, %v2227
    %v2229 = vrot.slane %v2093, 3
    %v2230 = vsel %vm348, %v2227, %v2229
    %2231 = vrot.lane.b32.xlu0 %v2212, 48
    %v2232 = vpop.permute.xlu0 %2231
    %2233 = vrot.lane.b32.xlu0 %v2214, 48
    %v2234 = vpop.permute.xlu0 %2233
    %2235 = vrot.lane.b32.xlu0 %v2216, 48
    %v2236 = vpop.permute.xlu0 %2235
    %2237 = vrot.lane.b32.xlu0 %v2218, 48
    %v2238 = vpop.permute.xlu0 %2237
    %2239 = vrot.lane.b32.xlu0 %v2220, 48
    %v2240 = vpop.permute.xlu0 %2239
    %2241 = vrot.lane.b32.xlu0 %v2222, 48
    %v2242 = vpop.permute.xlu0 %2241
    %2243 = vrot.lane.b32.xlu0 %v2224, 48
    %v2244 = vpop.permute.xlu0 %2243
    %2245 = vrot.lane.b32.xlu0 %v2226, 48
    %v2246 = vpop.permute.xlu0 %2245
    %2247 = vrot.lane.b32.xlu0 %v2228, 48
    %v2248 = vpop.permute.xlu0 %2247
    %2249 = vrot.lane.b32.xlu0 %v2230, 48
    %v2250 = vpop.permute.xlu0 %2249
    %v2261 = vrot.slane %v2068, 4
    %v2262 = vrot.slane %v2070, 4
    %v2263 = vsel %vm450, %v2261, %v2262
    %v2264 = vrot.slane %v2073, 4
    %v2265 = vsel %vm450, %v2262, %v2264
    %v2266 = vrot.slane %v2075, 4
    %v2267 = vsel %vm450, %v2264, %v2266
    %v2268 = vrot.slane %v2078, 4
    %v2269 = vsel %vm450, %v2266, %v2268
    %v2270 = vrot.slane %v2080, 4
    %v2271 = vsel %vm450, %v2268, %v2270
    %v2272 = vrot.slane %v2083, 4
    %v2273 = vsel %vm450, %v2270, %v2272
    %v2274 = vrot.slane %v2085, 4
    %v2275 = vsel %vm450, %v2272, %v2274
    %v2276 = vrot.slane %v2088, 4
    %v2277 = vsel %vm450, %v2274, %v2276
    %v2278 = vrot.slane %v2090, 4
    %v2279 = vsel %vm450, %v2276, %v2278
    %v2280 = vrot.slane %v2093, 4
    %v2281 = vsel %vm450, %v2278, %v2280
    %2282 = vrot.lane.b32.xlu0 %v2263, 64
    %v2283 = vpop.permute.xlu0 %2282
    %2284 = vrot.lane.b32.xlu0 %v2265, 64
    %v2285 = vpop.permute.xlu0 %2284
    %2286 = vrot.lane.b32.xlu0 %v2267, 64
    %v2287 = vpop.permute.xlu0 %2286
    %2288 = vrot.lane.b32.xlu0 %v2269, 64
    %v2289 = vpop.permute.xlu0 %2288
    %2290 = vrot.lane.b32.xlu0 %v2271, 64
    %v2291 = vpop.permute.xlu0 %2290
    %2292 = vrot.lane.b32.xlu0 %v2273, 64
    %v2293 = vpop.permute.xlu0 %2292
    %2294 = vrot.lane.b32.xlu0 %v2275, 64
    %v2295 = vpop.permute.xlu0 %2294
    %2296 = vrot.lane.b32.xlu0 %v2277, 64
    %v2297 = vpop.permute.xlu0 %2296
    %2298 = vrot.lane.b32.xlu0 %v2279, 64
    %v2299 = vpop.permute.xlu0 %2298
    %2300 = vrot.lane.b32.xlu0 %v2281, 64
    %v2301 = vpop.permute.xlu0 %2300
    %v2312 = vrot.slane %v2068, 5
    %v2313 = vrot.slane %v2070, 5
    %v2314 = vsel %vm552, %v2312, %v2313
    %v2315 = vrot.slane %v2073, 5
    %v2316 = vsel %vm552, %v2313, %v2315
    %v2317 = vrot.slane %v2075, 5
    %v2318 = vsel %vm552, %v2315, %v2317
    %v2319 = vrot.slane %v2078, 5
    %v2320 = vsel %vm552, %v2317, %v2319
    %v2321 = vrot.slane %v2080, 5
    %v2322 = vsel %vm552, %v2319, %v2321
    %v2323 = vrot.slane %v2083, 5
    %v2324 = vsel %vm552, %v2321, %v2323
    %v2325 = vrot.slane %v2085, 5
    %v2326 = vsel %vm552, %v2323, %v2325
    %v2327 = vrot.slane %v2088, 5
    %v2328 = vsel %vm552, %v2325, %v2327
    %v2329 = vrot.slane %v2090, 5
    %v2330 = vsel %vm552, %v2327, %v2329
    %v2331 = vrot.slane %v2093, 5
    %v2332 = vsel %vm552, %v2329, %v2331
    %2333 = vrot.lane.b32.xlu0 %v2314, 80
    %v2334 = vpop.permute.xlu0 %2333
    %2335 = vrot.lane.b32.xlu0 %v2316, 80
    %v2336 = vpop.permute.xlu0 %2335
    %2337 = vrot.lane.b32.xlu0 %v2318, 80
    %v2338 = vpop.permute.xlu0 %2337
    %2339 = vrot.lane.b32.xlu0 %v2320, 80
    %v2340 = vpop.permute.xlu0 %2339
    %2341 = vrot.lane.b32.xlu0 %v2322, 80
    %v2342 = vpop.permute.xlu0 %2341
    %2343 = vrot.lane.b32.xlu0 %v2324, 80
    %v2344 = vpop.permute.xlu0 %2343
    %2345 = vrot.lane.b32.xlu0 %v2326, 80
    %v2346 = vpop.permute.xlu0 %2345
    %2347 = vrot.lane.b32.xlu0 %v2328, 80
    %v2348 = vpop.permute.xlu0 %2347
    %2349 = vrot.lane.b32.xlu0 %v2330, 80
    %v2350 = vpop.permute.xlu0 %2349
    %2351 = vrot.lane.b32.xlu0 %v2332, 80
    %v2352 = vpop.permute.xlu0 %2351
    %v2363 = vrot.slane %v2068, 6
    %v2364 = vrot.slane %v2070, 6
    %v2365 = vsel %vm654, %v2363, %v2364
    %v2366 = vrot.slane %v2073, 6
    %v2367 = vsel %vm654, %v2364, %v2366
    %v2368 = vrot.slane %v2075, 6
    %v2369 = vsel %vm654, %v2366, %v2368
    %v2370 = vrot.slane %v2078, 6
    %v2371 = vsel %vm654, %v2368, %v2370
    %v2372 = vrot.slane %v2080, 6
    %v2373 = vsel %vm654, %v2370, %v2372
    %v2374 = vrot.slane %v2083, 6
    %v2375 = vsel %vm654, %v2372, %v2374
    %v2376 = vrot.slane %v2085, 6
    %v2377 = vsel %vm654, %v2374, %v2376
    %v2378 = vrot.slane %v2088, 6
    %v2379 = vsel %vm654, %v2376, %v2378
    %v2380 = vrot.slane %v2090, 6
    %v2381 = vsel %vm654, %v2378, %v2380
    %v2382 = vrot.slane %v2093, 6
    %v2383 = vsel %vm654, %v2380, %v2382
    %2384 = vrot.lane.b32.xlu0 %v2365, 96
    %v2385 = vpop.permute.xlu0 %2384
    %2386 = vrot.lane.b32.xlu0 %v2367, 96
    %v2387 = vpop.permute.xlu0 %2386
    %2388 = vrot.lane.b32.xlu0 %v2369, 96
    %v2389 = vpop.permute.xlu0 %2388
    %2390 = vrot.lane.b32.xlu0 %v2371, 96
    %v2391 = vpop.permute.xlu0 %2390
    %2392 = vrot.lane.b32.xlu0 %v2373, 96
    %v2393 = vpop.permute.xlu0 %2392
    %2394 = vrot.lane.b32.xlu0 %v2375, 96
    %v2395 = vpop.permute.xlu0 %2394
    %2396 = vrot.lane.b32.xlu0 %v2377, 96
    %v2397 = vpop.permute.xlu0 %2396
    %2398 = vrot.lane.b32.xlu0 %v2379, 96
    %v2399 = vpop.permute.xlu0 %2398
    %2400 = vrot.lane.b32.xlu0 %v2381, 96
    %v2401 = vpop.permute.xlu0 %2400
    %2402 = vrot.lane.b32.xlu0 %v2383, 96
    %v2403 = vpop.permute.xlu0 %2402
    %v2414 = vrot.slane %v2068, 7
    %v2415 = vrot.slane %v2070, 7
    %v2416 = vsel %vm756, %v2414, %v2415
    %v2417 = vrot.slane %v2073, 7
    %v2418 = vsel %vm756, %v2415, %v2417
    %v2419 = vrot.slane %v2075, 7
    %v2420 = vsel %vm756, %v2417, %v2419
    %v2421 = vrot.slane %v2078, 7
    %v2422 = vsel %vm756, %v2419, %v2421
    %v2423 = vrot.slane %v2080, 7
    %v2424 = vsel %vm756, %v2421, %v2423
    %v2425 = vrot.slane %v2083, 7
    %v2426 = vsel %vm756, %v2423, %v2425
    %v2427 = vrot.slane %v2085, 7
    %v2428 = vsel %vm756, %v2425, %v2427
    %v2429 = vrot.slane %v2088, 7
    %v2430 = vsel %vm756, %v2427, %v2429
    %v2431 = vrot.slane %v2090, 7
    %v2432 = vsel %vm756, %v2429, %v2431
    %v2433 = vrot.slane %v2093, 7
    %v2434 = vsel %vm756, %v2431, %v2433
    %2435 = vrot.lane.b32.xlu0 %v2416, 112
    %v2436 = vpop.permute.xlu0 %2435
    %2437 = vrot.lane.b32.xlu0 %v2418, 112
    %v2438 = vpop.permute.xlu0 %2437
    %2439 = vrot.lane.b32.xlu0 %v2420, 112
    %v2440 = vpop.permute.xlu0 %2439
    %2441 = vrot.lane.b32.xlu0 %v2422, 112
    %v2442 = vpop.permute.xlu0 %2441
    %2443 = vrot.lane.b32.xlu0 %v2424, 112
    %v2444 = vpop.permute.xlu0 %2443
    %2445 = vrot.lane.b32.xlu0 %v2426, 112
    %v2446 = vpop.permute.xlu0 %2445
    %2447 = vrot.lane.b32.xlu0 %v2428, 112
    %v2448 = vpop.permute.xlu0 %2447
    %2449 = vrot.lane.b32.xlu0 %v2430, 112
    %v2450 = vpop.permute.xlu0 %2449
    %2451 = vrot.lane.b32.xlu0 %v2432, 112
    %v2452 = vpop.permute.xlu0 %2451
    %2453 = vrot.lane.b32.xlu0 %v2434, 112
    %v2454 = vpop.permute.xlu0 %2453
    %v2466 = vrot.slane %v2095, 1
    %v2467 = vsel %vm144, %v2127, %v2466
    %2468 = vrot.lane.b32.xlu0 %v2467, 16
    %v2469 = vpop.permute.xlu0 %2468
    %v2471 = vsel %vm1576, %v2068, %v2130
    %v2472 = vsel %vm1576, %v2070, %v2132
    %v2473 = vsel %vm1576, %v2073, %v2134
    %v2474 = vsel %vm1576, %v2075, %v2136
    %v2475 = vsel %vm1576, %v2078, %v2138
    %v2476 = vsel %vm1576, %v2080, %v2140
    %v2477 = vsel %vm1576, %v2083, %v2142
    %v2478 = vsel %vm1576, %v2085, %v2144
    %v2479 = vsel %vm1576, %v2088, %v2146
    %v2480 = vsel %vm1576, %v2090, %v2148
    %vm2481 = vcmask 261120
    %v2482 = vsel %vm2481, %v2471, %v2181
    %v2483 = vsel %vm2481, %v2472, %v2183
    %v2484 = vsel %vm2481, %v2473, %v2185
    %v2485 = vsel %vm2481, %v2474, %v2187
    %v2486 = vsel %vm2481, %v2475, %v2189
    %v2487 = vsel %vm2481, %v2476, %v2191
    %v2488 = vsel %vm2481, %v2477, %v2193
    %v2489 = vsel %vm2481, %v2478, %v2195
    %v2490 = vsel %vm2481, %v2479, %v2197
    %v2491 = vsel %vm2481, %v2480, %v2199
    %vm2492 = vcmask 392192
    %v2493 = vsel %vm2492, %v2482, %v2232
    %v2494 = vsel %vm2492, %v2483, %v2234
    %v2495 = vsel %vm2492, %v2484, %v2236
    %v2496 = vsel %vm2492, %v2485, %v2238
    %v2497 = vsel %vm2492, %v2486, %v2240
    %v2498 = vsel %vm2492, %v2487, %v2242
    %v2499 = vsel %vm2492, %v2488, %v2244
    %v2500 = vsel %vm2492, %v2489, %v2246
    %v2501 = vsel %vm2492, %v2490, %v2248
    %v2502 = vsel %vm2492, %v2491, %v2250
    %vm2503 = vcmask 523264
    %v2504 = vsel %vm2503, %v2493, %v2283
    %v2505 = vsel %vm2503, %v2494, %v2285
    %v2506 = vsel %vm2503, %v2495, %v2287
    %v2507 = vsel %vm2503, %v2496, %v2289
    %v2508 = vsel %vm2503, %v2497, %v2291
    %v2509 = vsel %vm2503, %v2498, %v2293
    %v2510 = vsel %vm2503, %v2499, %v2295
    %v2511 = vsel %vm2503, %v2500, %v2297
    %v2512 = vsel %vm2503, %v2501, %v2299
    %v2513 = vsel %vm2503, %v2502, %v2301
    %vm2514 = vcmask 654336
    %v2515 = vsel %vm2514, %v2504, %v2334
    %v2516 = vsel %vm2514, %v2505, %v2336
    %v2517 = vsel %vm2514, %v2506, %v2338
    %v2518 = vsel %vm2514, %v2507, %v2340
    %v2519 = vsel %vm2514, %v2508, %v2342
    %v2520 = vsel %vm2514, %v2509, %v2344
    %v2521 = vsel %vm2514, %v2510, %v2346
    %v2522 = vsel %vm2514, %v2511, %v2348
    %v2523 = vsel %vm2514, %v2512, %v2350
    %v2524 = vsel %vm2514, %v2513, %v2352
    %vm2525 = vcmask 785408
    %v2526 = vsel %vm2525, %v2515, %v2385
    %v2527 = vsel %vm2525, %v2516, %v2387
    %v2528 = vsel %vm2525, %v2517, %v2389
    %v2529 = vsel %vm2525, %v2518, %v2391
    %v2530 = vsel %vm2525, %v2519, %v2393
    %v2531 = vsel %vm2525, %v2520, %v2395
    %v2532 = vsel %vm2525, %v2521, %v2397
    %v2533 = vsel %vm2525, %v2522, %v2399
    %v2534 = vsel %vm2525, %v2523, %v2401
    %v2535 = vsel %vm2525, %v2524, %v2403
    %vm2536 = vcmask 916480
    %v2537 = vsel %vm2536, %v2526, %v2436
    %v2538 = vsel %vm2536, %v2527, %v2438
    %v2539 = vsel %vm2536, %v2528, %v2440
    %v2540 = vsel %vm2536, %v2529, %v2442
    %v2541 = vsel %vm2536, %v2530, %v2444
    %v2542 = vsel %vm2536, %v2531, %v2446
    %v2543 = vsel %vm2536, %v2532, %v2448
    %v2544 = vsel %vm2536, %v2533, %v2450
    %v2545 = vsel %vm2536, %v2534, %v2452
    %v2546 = vsel %vm2536, %v2535, %v2454
    %v2547 = vsel %vm1576, %v2093, %v2469
    %v2548 = vpack.c.bf16 %v2538, %v2537
    %v2549 = vpack.c.bf16 %v2473, %v2472
    %v2550 = vpack.c.bf16 %v2540, %v2539
    %v2551 = vpack.c.bf16 %v2475, %v2474
    %v2552 = vpack.c.bf16 %v2542, %v2541
    %v2553 = vpack.c.bf16 %v2477, %v2476
    %v2554 = vpack.c.bf16 %v2544, %v2543
    %v2555 = vpack.c.bf16 %v2479, %v2478
    %v2556 = vpack.c.bf16 %v2546, %v2545
    %v2557 = vpack.c.bf16 %v2547, %v2480
    %v2558 = vperm.slane %v100, 3
    %v2579 = vunpack.c.l.b16 %v23
    %v2580 = vunpack.c.l.b16 %v24
    %v2581 = vunpack.c.l.b16 %v25
    %v2582 = vunpack.c.l.b16 %v26
    %v2583 = vunpack.c.l.b16 %v27
    %v2584 = vunpack.c.l.b16 %v28
    %v2585 = vunpack.c.l.b16 %v29
    %v2586 = vunpack.c.l.b16 %v30
    %v2587 = vunpack.c.l.b16 %v31
    %v2588 = vunpack.c.l.b16 %v32
    %v2589 = vunpack.c.l.b16 %v33
    %v2590 = vunpack.c.l.b16 %v34
    %v2591 = vunpack.c.l.b16 %v35
    %v2592 = vunpack.c.l.b16 %v36
    %v2593 = vunpack.c.l.b16 %v37
    %v2594 = vunpack.c.l.b16 %v38
    %v2595 = vunpack.c.l.b16 %v39
    %v2596 = vunpack.c.l.b16 %v40
    %v2597 = vunpack.c.l.b16 %v41
    %v2598 = vunpack.c.l.b16 %v42
    %v2599 = vpack.c.b16 %v2580, %v2579
    %v2600 = vpack.c.b16 %v2582, %v2581
    %v2601 = vpack.c.b16 %v2584, %v2583
    %v2602 = vpack.c.b16 %v2586, %v2585
    %v2603 = vpack.c.b16 %v2588, %v2587
    %v2604 = vpack.c.b16 %v2590, %v2589
    %v2605 = vpack.c.b16 %v2592, %v2591
    %v2606 = vpack.c.b16 %v2594, %v2593
    %v2607 = vpack.c.b16 %v2596, %v2595
    %v2608 = vpack.c.b16 %v2598, %v2597
    %v2620 = vsel %vm2481, %v2549, 0
    %v2623 = vsel %vm2481, %v2551, 0
    %v2626 = vsel %vm2481, %v2553, 0
    %v2629 = vsel %vm2481, %v2555, 0
    %v2632 = vsel %vm2481, %v2557, 0
    %2634 = vmatpush.bf16.msra.mxu0 %v2606
    %2635 = vmatpush.bf16.msra.mxu0 %v2605
    %2636 = vmatpush.bf16.msra.mxu0 %v2604
    %2637 = vmatpush.bf16.msra.mxu0 %v2603
    %2638 = vmatpush.bf16.msra.mxu0 %v2602
    %2639 = vmatpush.bf16.msra.mxu0 %v2601
    %2640 = vmatpush.bf16.msra.mxu0 %v2600
    %2641 = vmatpush.bf16.msra.mxu0 %v2599
    %2642 = vmatmul.bf16.gmra.mxu0 %v2548
    %v2643 = vpop.f32.mrf.mxu0
    %v2644 = vadd.f32 %v2558, %v2643
    %v2645 = vpop.f32.mrf.mxu0
    %v2646 = vadd.f32 %v2558, %v2645
    %2647 = vmatmul.bf16.gmra.mxu0 %v2550
    %v2648 = vpop.f32.mrf.mxu0
    %v2649 = vadd.f32 %v2558, %v2648
    %v2650 = vpop.f32.mrf.mxu0
    %v2651 = vadd.f32 %v2558, %v2650
    %2652 = vmatmul.bf16.gmra.mxu0 %v2552
    %v2653 = vpop.f32.mrf.mxu0
    %v2654 = vadd.f32 %v2558, %v2653
    %v2655 = vpop.f32.mrf.mxu0
    %v2656 = vadd.f32 %v2558, %v2655
    %2657 = vmatmul.bf16.gmra.mxu0 %v2554
    %v2658 = vpop.f32.mrf.mxu0
    %v2659 = vadd.f32 %v2558, %v2658
    %v2660 = vpop.f32.mrf.mxu0
    %v2661 = vadd.f32 %v2558, %v2660
    %2662 = vmatmul.bf16.gmra.mxu0 %v2556
    %v2663 = vpop.f32.mrf.mxu0
    %v2664 = vadd.f32 %v2558, %v2663
    %v2665 = vpop.f32.mrf.mxu0
    %v2666 = vadd.f32 %v2558, %v2665
    %2667 = vdwg.mxu0
    %2668 = vmatpush.bf16.msra.mxu0 0
    %2669 = vmatpush.bf16.msra.mxu0 0
    %2670 = vmatpush.bf16.msra.mxu0 0
    %2671 = vmatpush.bf16.msra.mxu0 0
    %2672 = vmatpush.bf16.msra.mxu0 0
    %2673 = vmatpush.bf16.msra.mxu0 0
    %2674 = vmatpush.bf16.msra.mxu0 %v2608
    %2675 = vmatpush.bf16.msra.mxu0 %v2607
    %2676 = vmatmul.bf16.gmra.mxu0 %v2620
    %v2677 = vpop.f32.mrf.mxu0
    %v2678 = vadd.f32 %v2644, %v2677
    %v2679 = vpop.f32.mrf.mxu0
    %v2680 = vadd.f32 %v2646, %v2679
    %2681 = vmatmul.bf16.gmra.mxu0 %v2623
    %v2682 = vpop.f32.mrf.mxu0
    %v2683 = vadd.f32 %v2649, %v2682
    %v2684 = vpop.f32.mrf.mxu0
    %v2685 = vadd.f32 %v2651, %v2684
    %2686 = vmatmul.bf16.gmra.mxu0 %v2626
    %v2687 = vpop.f32.mrf.mxu0
    %v2688 = vadd.f32 %v2654, %v2687
    %v2689 = vpop.f32.mrf.mxu0
    %v2690 = vadd.f32 %v2656, %v2689
    %2691 = vmatmul.bf16.gmra.mxu0 %v2629
    %v2692 = vpop.f32.mrf.mxu0
    %v2693 = vadd.f32 %v2659, %v2692
    %v2694 = vpop.f32.mrf.mxu0
    %v2695 = vadd.f32 %v2661, %v2694
    %2696 = vmatmul.bf16.gmra.mxu0 %v2632
    %v2697 = vpop.f32.mrf.mxu0
    %v2698 = vadd.f32 %v2664, %v2697
    %v2699 = vpop.f32.mrf.mxu0
    %v2700 = vadd.f32 %v2666, %v2699
    %2701 = vdwg.mxu0
    %v2702 = vmax.f32 %v2678, 0.0
    %v2703 = vmax.f32 %v2680, 0.0
    %v2704 = vmax.f32 %v2683, 0.0
    %v2705 = vmax.f32 %v2685, 0.0
    %v2706 = vmax.f32 %v2688, 0.0
    %v2707 = vmax.f32 %v2690, 0.0
    %v2708 = vmax.f32 %v2693, 0.0
    %v2709 = vmax.f32 %v2695, 0.0
    %v2710 = vmax.f32 %v2698, 0.0
    %v2711 = vmax.f32 %v2700, 0.0
    %v2722 = vrot.slane %v2702, 1
    %v2723 = vrot.slane %v2703, 1
    %v2724 = vsel %vm144, %v2722, %v2723
    %v2725 = vrot.slane %v2704, 1
    %v2726 = vsel %vm144, %v2723, %v2725
    %v2727 = vrot.slane %v2705, 1
    %v2728 = vsel %vm144, %v2725, %v2727
    %v2729 = vrot.slane %v2706, 1
    %v2730 = vsel %vm144, %v2727, %v2729
    %v2731 = vrot.slane %v2707, 1
    %v2732 = vsel %vm144, %v2729, %v2731
    %v2733 = vrot.slane %v2708, 1
    %v2734 = vsel %vm144, %v2731, %v2733
    %v2735 = vrot.slane %v2709, 1
    %v2736 = vsel %vm144, %v2733, %v2735
    %v2737 = vrot.slane %v2710, 1
    %v2738 = vsel %vm144, %v2735, %v2737
    %v2739 = vrot.slane %v2711, 1
    %v2740 = vsel %vm144, %v2737, %v2739
    %v2751 = vmax.f32 %v2702, %v2724
    %v2752 = vmax.f32 %v2703, %v2726
    %v2753 = vmax.f32 %v2704, %v2728
    %v2754 = vmax.f32 %v2705, %v2730
    %v2755 = vmax.f32 %v2706, %v2732
    %v2756 = vmax.f32 %v2707, %v2734
    %v2757 = vmax.f32 %v2708, %v2736
    %v2758 = vmax.f32 %v2709, %v2738
    %v2759 = vmax.f32 %v2710, %v2740
    %v2760 = vmax.f32 %v2711, %v2739
    %v2761 = vpack.c.bf16 %v2752, %v2751
    %v2762 = vpack.c.bf16 %v2754, %v2753
    %v2763 = vpack.c.bf16 %v2756, %v2755
    %v2764 = vpack.c.bf16 %v2758, %v2757
    %v2765 = vpack.c.bf16 %v2760, %v2759
    %v2766 = vpack.c.bf16 %v1970, %v1970
    %vm2767 = vcmask 646144
    %v2769 = vsel %vm2767, %v1982, 0
    %v2772 = vsel %vm2767, %v1984, 0
    %v2775 = vsel %vm2767, %v1986, 0
    %v2778 = vsel %vm2767, %v2766, 0
    %v2781 = vand.u32 %v2765, %v2015
    %2783 = vmatpush.bf16.msra.mxu0 0
    %2784 = vmatpush.bf16.msra.mxu0 0
    %2785 = vmatpush.bf16.msra.mxu0 0
    %2786 = vmatpush.bf16.msra.mxu0 %v2781
    %2787 = vmatpush.bf16.msra.mxu0 %v2764
    %2788 = vmatpush.bf16.msra.mxu0 %v2763
    %2789 = vmatpush.bf16.msra.mxu0 %v2762
    %2790 = vmatpush.bf16.msra.mxu0 %v2761
    %2791 = vmatmul.bf16.gmra.mxu0 %v2769
    %v2792 = vpop.f32.mrf.mxu0
    %v2793 = vadd.f32 0.0, %v2792
    %v2794 = vpop.f32.mrf.mxu0
    %v2795 = vadd.f32 0.0, %v2794
    %2796 = vmatmul.bf16.gmra.mxu0 %v2772
    %v2797 = vpop.f32.mrf.mxu0
    %v2798 = vadd.f32 0.0, %v2797
    %v2799 = vpop.f32.mrf.mxu0
    %v2800 = vadd.f32 0.0, %v2799
    %2801 = vmatmul.bf16.gmra.mxu0 %v2775
    %v2802 = vpop.f32.mrf.mxu0
    %v2803 = vadd.f32 0.0, %v2802
    %v2804 = vpop.f32.mrf.mxu0
    %v2805 = vadd.f32 0.0, %v2804
    %2806 = vmatmul.bf16.gmra.mxu0 %v2778
    %v2807 = vpop.f32.mrf.mxu0
    %v2808 = vadd.f32 0.0, %v2807
    %v2809 = vpop.f32.mrf.mxu0
    %2810 = vdwg.mxu0
    %v2817 = vrot.slane %v2793, 1
    %v2818 = vrot.slane %v2795, 1
    %v2819 = vsel %vm144, %v2817, %v2818
    %v2820 = vrot.slane %v2798, 1
    %v2821 = vsel %vm144, %v2818, %v2820
    %v2822 = vrot.slane %v2800, 1
    %v2823 = vsel %vm144, %v2820, %v2822
    %v2824 = vrot.slane %v2803, 1
    %v2825 = vsel %vm144, %v2822, %v2824
    %v2826 = vrot.slane %v2805, 1
    %v2827 = vsel %vm144, %v2824, %v2826
    %2828 = vrot.lane.b32.xlu0 %v2819, 32
    %v2829 = vpop.permute.xlu0 %2828
    %2830 = vrot.lane.b32.xlu0 %v2821, 32
    %v2831 = vpop.permute.xlu0 %2830
    %2832 = vrot.lane.b32.xlu0 %v2823, 32
    %v2833 = vpop.permute.xlu0 %2832
    %2834 = vrot.lane.b32.xlu0 %v2825, 32
    %v2835 = vpop.permute.xlu0 %2834
    %2836 = vrot.lane.b32.xlu0 %v2827, 32
    %v2837 = vpop.permute.xlu0 %2836
    %v2843 = vrot.slane %v2793, 2
    %v2844 = vrot.slane %v2795, 2
    %v2845 = vsel %vm246, %v2843, %v2844
    %v2846 = vrot.slane %v2798, 2
    %v2847 = vsel %vm246, %v2844, %v2846
    %v2848 = vrot.slane %v2800, 2
    %v2849 = vsel %vm246, %v2846, %v2848
    %v2850 = vrot.slane %v2803, 2
    %v2851 = vsel %vm246, %v2848, %v2850
    %v2852 = vrot.slane %v2805, 2
    %v2853 = vsel %vm246, %v2850, %v2852
    %2854 = vrot.lane.b32.xlu0 %v2845, 64
    %v2855 = vpop.permute.xlu0 %2854
    %2856 = vrot.lane.b32.xlu0 %v2847, 64
    %v2857 = vpop.permute.xlu0 %2856
    %2858 = vrot.lane.b32.xlu0 %v2849, 64
    %v2859 = vpop.permute.xlu0 %2858
    %2860 = vrot.lane.b32.xlu0 %v2851, 64
    %v2861 = vpop.permute.xlu0 %2860
    %2862 = vrot.lane.b32.xlu0 %v2853, 64
    %v2863 = vpop.permute.xlu0 %2862
    %v2869 = vrot.slane %v2793, 3
    %v2870 = vrot.slane %v2795, 3
    %v2871 = vsel %vm348, %v2869, %v2870
    %v2872 = vrot.slane %v2798, 3
    %v2873 = vsel %vm348, %v2870, %v2872
    %v2874 = vrot.slane %v2800, 3
    %v2875 = vsel %vm348, %v2872, %v2874
    %v2876 = vrot.slane %v2803, 3
    %v2877 = vsel %vm348, %v2874, %v2876
    %v2878 = vrot.slane %v2805, 3
    %v2879 = vsel %vm348, %v2876, %v2878
    %2880 = vrot.lane.b32.xlu0 %v2871, 96
    %v2881 = vpop.permute.xlu0 %2880
    %2882 = vrot.lane.b32.xlu0 %v2873, 96
    %v2883 = vpop.permute.xlu0 %2882
    %2884 = vrot.lane.b32.xlu0 %v2875, 96
    %v2885 = vpop.permute.xlu0 %2884
    %2886 = vrot.lane.b32.xlu0 %v2877, 96
    %v2887 = vpop.permute.xlu0 %2886
    %2888 = vrot.lane.b32.xlu0 %v2879, 96
    %v2889 = vpop.permute.xlu0 %2888
    %v2895 = vrot.slane %v2793, 4
    %v2896 = vrot.slane %v2795, 4
    %v2897 = vsel %vm450, %v2895, %v2896
    %v2898 = vrot.slane %v2798, 4
    %v2899 = vsel %vm450, %v2896, %v2898
    %v2900 = vrot.slane %v2800, 4
    %v2901 = vsel %vm450, %v2898, %v2900
    %v2902 = vrot.slane %v2803, 4
    %v2903 = vsel %vm450, %v2900, %v2902
    %v2904 = vrot.slane %v2805, 4
    %v2905 = vsel %vm450, %v2902, %v2904
    %v2911 = vrot.slane %v2793, 5
    %v2912 = vrot.slane %v2795, 5
    %v2913 = vsel %vm552, %v2911, %v2912
    %v2914 = vrot.slane %v2798, 5
    %v2915 = vsel %vm552, %v2912, %v2914
    %v2916 = vrot.slane %v2800, 5
    %v2917 = vsel %vm552, %v2914, %v2916
    %v2918 = vrot.slane %v2803, 5
    %v2919 = vsel %vm552, %v2916, %v2918
    %v2920 = vrot.slane %v2805, 5
    %v2921 = vsel %vm552, %v2918, %v2920
    %2922 = vrot.lane.b32.xlu0 %v2913, 32
    %v2923 = vpop.permute.xlu0 %2922
    %2924 = vrot.lane.b32.xlu0 %v2915, 32
    %v2925 = vpop.permute.xlu0 %2924
    %2926 = vrot.lane.b32.xlu0 %v2917, 32
    %v2927 = vpop.permute.xlu0 %2926
    %2928 = vrot.lane.b32.xlu0 %v2919, 32
    %v2929 = vpop.permute.xlu0 %2928
    %2930 = vrot.lane.b32.xlu0 %v2921, 32
    %v2931 = vpop.permute.xlu0 %2930
    %v2937 = vrot.slane %v2793, 6
    %v2938 = vrot.slane %v2795, 6
    %v2939 = vsel %vm654, %v2937, %v2938
    %v2940 = vrot.slane %v2798, 6
    %v2941 = vsel %vm654, %v2938, %v2940
    %v2942 = vrot.slane %v2800, 6
    %v2943 = vsel %vm654, %v2940, %v2942
    %v2944 = vrot.slane %v2803, 6
    %v2945 = vsel %vm654, %v2942, %v2944
    %v2946 = vrot.slane %v2805, 6
    %v2947 = vsel %vm654, %v2944, %v2946
    %2948 = vrot.lane.b32.xlu0 %v2939, 64
    %v2949 = vpop.permute.xlu0 %2948
    %2950 = vrot.lane.b32.xlu0 %v2941, 64
    %v2951 = vpop.permute.xlu0 %2950
    %2952 = vrot.lane.b32.xlu0 %v2943, 64
    %v2953 = vpop.permute.xlu0 %2952
    %2954 = vrot.lane.b32.xlu0 %v2945, 64
    %v2955 = vpop.permute.xlu0 %2954
    %2956 = vrot.lane.b32.xlu0 %v2947, 64
    %v2957 = vpop.permute.xlu0 %2956
    %v2963 = vrot.slane %v2793, 7
    %v2964 = vrot.slane %v2795, 7
    %v2965 = vsel %vm756, %v2963, %v2964
    %v2966 = vrot.slane %v2798, 7
    %v2967 = vsel %vm756, %v2964, %v2966
    %v2968 = vrot.slane %v2800, 7
    %v2969 = vsel %vm756, %v2966, %v2968
    %v2970 = vrot.slane %v2803, 7
    %v2971 = vsel %vm756, %v2968, %v2970
    %v2972 = vrot.slane %v2805, 7
    %v2973 = vsel %vm756, %v2970, %v2972
    %2974 = vrot.lane.b32.xlu0 %v2965, 96
    %v2975 = vpop.permute.xlu0 %2974
    %2976 = vrot.lane.b32.xlu0 %v2967, 96
    %v2977 = vpop.permute.xlu0 %2976
    %2978 = vrot.lane.b32.xlu0 %v2969, 96
    %v2979 = vpop.permute.xlu0 %2978
    %2980 = vrot.lane.b32.xlu0 %v2971, 96
    %v2981 = vpop.permute.xlu0 %2980
    %2982 = vrot.lane.b32.xlu0 %v2973, 96
    %v2983 = vpop.permute.xlu0 %2982
    %v2990 = vrot.slane %v2808, 1
    %v2991 = vsel %vm144, %v2826, %v2990
    %2992 = vrot.lane.b32.xlu0 %v2991, 32
    %v2993 = vpop.permute.xlu0 %2992
    %v2995 = vsel %vm2481, %v2793, %v2829
    %v2996 = vsel %vm2481, %v2795, %v2831
    %v2997 = vsel %vm2481, %v2798, %v2833
    %v2998 = vsel %vm2481, %v2800, %v2835
    %v2999 = vsel %vm2481, %v2803, %v2837
    %v3000 = vsel %vm2503, %v2995, %v2855
    %v3001 = vsel %vm2503, %v2996, %v2857
    %v3002 = vsel %vm2503, %v2997, %v2859
    %v3003 = vsel %vm2503, %v2998, %v2861
    %v3004 = vsel %vm2503, %v2999, %v2863
    %v3005 = vsel %vm2525, %v3000, %v2881
    %v3006 = vsel %vm2525, %v3001, %v2883
    %v3007 = vsel %vm2525, %v3002, %v2885
    %v3008 = vsel %vm2525, %v3003, %v2887
    %v3009 = vsel %vm2525, %v3004, %v2889
    %v3010 = vsel %vm2481, %v2897, %v2923
    %v3011 = vsel %vm2481, %v2899, %v2925
    %v3012 = vsel %vm2481, %v2901, %v2927
    %v3013 = vsel %vm2481, %v2903, %v2929
    %v3014 = vsel %vm2481, %v2905, %v2931
    %v3015 = vsel %vm2503, %v3010, %v2949
    %v3016 = vsel %vm2503, %v3011, %v2951
    %v3017 = vsel %vm2503, %v3012, %v2953
    %v3018 = vsel %vm2503, %v3013, %v2955
    %v3019 = vsel %vm2503, %v3014, %v2957
    %v3020 = vsel %vm2525, %v3015, %v2975
    %v3021 = vsel %vm2525, %v3016, %v2977
    %v3022 = vsel %vm2525, %v3017, %v2979
    %v3023 = vsel %vm2525, %v3018, %v2981
    %v3024 = vsel %vm2525, %v3019, %v2983
    %v3025 = vsel %vm2481, %v2805, %v2993
    %v3026 = vpack.c.bf16 %v3006, %v3005
    %v3027 = vpack.c.bf16 %v3021, %v3020
    %v3028 = vpack.c.bf16 %v2997, %v2996
    %v3029 = vpack.c.bf16 %v3008, %v3007
    %v3030 = vpack.c.bf16 %v3023, %v3022
    %v3031 = vpack.c.bf16 %v2999, %v2998
    %v3032 = vpack.c.bf16 %v3009, %v3009
    %v3033 = vpack.c.bf16 %v3024, %v3024
    %v3034 = vpack.c.bf16 %v3025, %v3025
    %v3035 = vperm.slane %v100, 4
    %v3076 = vunpack.c.l.b16 %v43
    %v3077 = vunpack.c.l.b16 %v44
    %v3078 = vunpack.c.l.b16 %v45
    %v3079 = vunpack.c.l.b16 %v46
    %v3080 = vunpack.c.l.b16 %v47
    %v3081 = vunpack.c.l.b16 %v48
    %v3082 = vunpack.c.l.b16 %v49
    %v3083 = vunpack.c.l.b16 %v50
    %v3084 = vunpack.c.l.b16 %v51
    %v3085 = vunpack.c.l.b16 %v52
    %v3086 = vunpack.c.l.b16 %v53
    %v3087 = vunpack.c.l.b16 %v54
    %v3088 = vunpack.c.l.b16 %v55
    %v3089 = vunpack.c.l.b16 %v56
    %v3090 = vunpack.c.l.b16 %v57
    %v3091 = vunpack.c.l.b16 %v58
    %v3092 = vunpack.c.l.b16 %v59
    %v3093 = vunpack.c.l.b16 %v60
    %v3094 = vunpack.c.l.b16 %v61
    %v3095 = vunpack.c.l.b16 %v62
    %v3096 = vunpack.c.l.b16 %v63
    %v3097 = vunpack.c.l.b16 %v64
    %v3098 = vunpack.c.l.b16 %v65
    %v3099 = vunpack.c.l.b16 %v66
    %v3100 = vunpack.c.l.b16 %v67
    %v3101 = vunpack.c.l.b16 %v68
    %v3102 = vunpack.c.l.b16 %v69
    %v3103 = vunpack.c.l.b16 %v70
    %v3104 = vunpack.c.l.b16 %v71
    %v3105 = vunpack.c.l.b16 %v72
    %v3106 = vunpack.c.l.b16 %v73
    %v3107 = vunpack.c.l.b16 %v74
    %v3108 = vunpack.c.l.b16 %v75
    %v3109 = vunpack.c.l.b16 %v76
    %v3110 = vunpack.c.l.b16 %v77
    %v3111 = vunpack.c.l.b16 %v78
    %v3112 = vunpack.c.l.b16 %v79
    %v3113 = vunpack.c.l.b16 %v80
    %v3114 = vunpack.c.l.b16 %v81
    %v3115 = vunpack.c.l.b16 %v82
    %v3116 = vpack.c.b16 %v3077, %v3076
    %v3117 = vpack.c.b16 %v3079, %v3078
    %v3118 = vpack.c.b16 %v3081, %v3080
    %v3119 = vpack.c.b16 %v3083, %v3082
    %v3120 = vpack.c.b16 %v3085, %v3084
    %v3121 = vpack.c.b16 %v3087, %v3086
    %v3122 = vpack.c.b16 %v3089, %v3088
    %v3123 = vpack.c.b16 %v3091, %v3090
    %v3124 = vpack.c.b16 %v3093, %v3092
    %v3125 = vpack.c.b16 %v3095, %v3094
    %v3126 = vpack.c.b16 %v3097, %v3096
    %v3127 = vpack.c.b16 %v3099, %v3098
    %v3128 = vpack.c.b16 %v3101, %v3100
    %v3129 = vpack.c.b16 %v3103, %v3102
    %v3130 = vpack.c.b16 %v3105, %v3104
    %v3131 = vpack.c.b16 %v3107, %v3106
    %v3132 = vpack.c.b16 %v3109, %v3108
    %v3133 = vpack.c.b16 %v3111, %v3110
    %v3134 = vpack.c.b16 %v3113, %v3112
    %v3135 = vpack.c.b16 %v3115, %v3114
    %v3157 = vsel %vm2503, %v3028, 0
    %v3160 = vsel %vm2503, %v3031, 0
    %v3163 = vsel %vm2503, %v3034, 0
    %3165 = vmatpush.bf16.msra.mxu0 %v3123
    %3166 = vmatpush.bf16.msra.mxu0 %v3122
    %3167 = vmatpush.bf16.msra.mxu0 %v3121
    %3168 = vmatpush.bf16.msra.mxu0 %v3120
    %3169 = vmatpush.bf16.msra.mxu0 %v3119
    %3170 = vmatpush.bf16.msra.mxu0 %v3118
    %3171 = vmatpush.bf16.msra.mxu0 %v3117
    %3172 = vmatpush.bf16.msra.mxu0 %v3116
    %3173 = vmatmul.bf16.gmra.mxu0 %v3026
    %v3174 = vpop.f32.mrf.mxu0
    %v3175 = vadd.f32 %v3035, %v3174
    %v3176 = vpop.f32.mrf.mxu0
    %v3177 = vadd.f32 %v3035, %v3176
    %3178 = vmatmul.bf16.gmra.mxu0 %v3029
    %v3179 = vpop.f32.mrf.mxu0
    %v3180 = vadd.f32 %v3035, %v3179
    %v3181 = vpop.f32.mrf.mxu0
    %v3182 = vadd.f32 %v3035, %v3181
    %3183 = vmatmul.bf16.gmra.mxu0 %v3032
    %v3184 = vpop.f32.mrf.mxu0
    %v3185 = vadd.f32 %v3035, %v3184
    %v3186 = vpop.f32.mrf.mxu0
    %3187 = vdwg.mxu0
    %3188 = vmatpush.bf16.msra.mxu0 %v3131
    %3189 = vmatpush.bf16.msra.mxu0 %v3130
    %3190 = vmatpush.bf16.msra.mxu0 %v3129
    %3191 = vmatpush.bf16.msra.mxu0 %v3128
    %3192 = vmatpush.bf16.msra.mxu0 %v3127
    %3193 = vmatpush.bf16.msra.mxu0 %v3126
    %3194 = vmatpush.bf16.msra.mxu0 %v3125
    %3195 = vmatpush.bf16.msra.mxu0 %v3124
    %3196 = vmatmul.bf16.gmra.mxu0 %v3027
    %v3197 = vpop.f32.mrf.mxu0
    %v3198 = vadd.f32 %v3175, %v3197
    %v3199 = vpop.f32.mrf.mxu0
    %v3200 = vadd.f32 %v3177, %v3199
    %3201 = vmatmul.bf16.gmra.mxu0 %v3030
    %v3202 = vpop.f32.mrf.mxu0
    %v3203 = vadd.f32 %v3180, %v3202
    %v3204 = vpop.f32.mrf.mxu0
    %v3205 = vadd.f32 %v3182, %v3204
    %3206 = vmatmul.bf16.gmra.mxu0 %v3033
    %v3207 = vpop.f32.mrf.mxu0
    %v3208 = vadd.f32 %v3185, %v3207
    %v3209 = vpop.f32.mrf.mxu0
    %3210 = vdwg.mxu0
    %3211 = vmatpush.bf16.msra.mxu0 0
    %3212 = vmatpush.bf16.msra.mxu0 0
    %3213 = vmatpush.bf16.msra.mxu0 0
    %3214 = vmatpush.bf16.msra.mxu0 0
    %3215 = vmatpush.bf16.msra.mxu0 %v3135
    %3216 = vmatpush.bf16.msra.mxu0 %v3134
    %3217 = vmatpush.bf16.msra.mxu0 %v3133
    %3218 = vmatpush.bf16.msra.mxu0 %v3132
    %3219 = vmatmul.bf16.gmra.mxu0 %v3157
    %v3220 = vpop.f32.mrf.mxu0
    %v3221 = vadd.f32 %v3198, %v3220
    %v3222 = vpop.f32.mrf.mxu0
    %v3223 = vadd.f32 %v3200, %v3222
    %3224 = vmatmul.bf16.gmra.mxu0 %v3160
    %v3225 = vpop.f32.mrf.mxu0
    %v3226 = vadd.f32 %v3203, %v3225
    %v3227 = vpop.f32.mrf.mxu0
    %v3228 = vadd.f32 %v3205, %v3227
    %3229 = vmatmul.bf16.gmra.mxu0 %v3163
    %v3230 = vpop.f32.mrf.mxu0
    %v3231 = vadd.f32 %v3208, %v3230
    %v3232 = vpop.f32.mrf.mxu0
    %3233 = vdwg.mxu0
    %v3234 = vmax.f32 %v3221, 0.0
    %v3235 = vmax.f32 %v3223, 0.0
    %v3236 = vmax.f32 %v3226, 0.0
    %v3237 = vmax.f32 %v3228, 0.0
    %v3238 = vmax.f32 %v3231, 0.0
    %v3244 = vrot.slane %v3234, 1
    %v3245 = vrot.slane %v3235, 1
    %v3246 = vsel %vm144, %v3244, %v3245
    %v3247 = vrot.slane %v3236, 1
    %v3248 = vsel %vm144, %v3245, %v3247
    %v3249 = vrot.slane %v3237, 1
    %v3250 = vsel %vm144, %v3247, %v3249
    %v3251 = vrot.slane %v3238, 1
    %v3252 = vsel %vm144, %v3249, %v3251
    %v3258 = vmax.f32 %v3234, %v3246
    %v3259 = vmax.f32 %v3235, %v3248
    %v3260 = vmax.f32 %v3236, %v3250
    %v3261 = vmax.f32 %v3237, %v3252
    %v3262 = vmax.f32 %v3238, %v3251
    %v3263 = vpack.c.bf16 %v3259, %v3258
    %v3264 = vpack.c.bf16 %v3261, %v3260
    %v3265 = vpack.c.bf16 %v3262, %v3262
    %v3266 = vmul.u32 %v1316, 20
    %vm3267 = vcmp.eq.s32.totalorder %v1896, %v3266
    %v3268 = vsel %vm3267, 1, 0
    %v3269 = vcvt.s32.f32 %v3268
    %v3270 = vpack.c.bf16 %v3269, %v3269
    %vm3271 = vcmask 318464
    %v3273 = vsel %vm3271, %v3270, 0
    %v3275 = vsel %vm552, 4294967295, 65535
    %v3276 = vsel %vm450, %v3275, 0
    %v3278 = vand.u32 %v3265, %v3276
    %3280 = vmatpush.bf16.msra.mxu0 0
    %3281 = vmatpush.bf16.msra.mxu0 0
    %3282 = vmatpush.bf16.msra.mxu0 0
    %3283 = vmatpush.bf16.msra.mxu0 0
    %3284 = vmatpush.bf16.msra.mxu0 0
    %3285 = vmatpush.bf16.msra.mxu0 %v3278
    %3286 = vmatpush.bf16.msra.mxu0 %v3264
    %3287 = vmatpush.bf16.msra.mxu0 %v3263
    %3288 = vmatmul.bf16.gmra.mxu0 %v3273
    %v3289 = vpop.f32.mrf.mxu0
    %v3290 = vadd.f32 0.0, %v3289
    %v3291 = vpop.f32.mrf.mxu0
    %3292 = vdwg.mxu0
    %v3293 = vpack.c.bf16 %v3290, %v3290
    %v3294 = vperm.slane %v100, 5
    %v3303 = vunpack.c.l.b16 %v83
    %v3304 = vunpack.c.l.b16 %v84
    %v3305 = vunpack.c.l.b16 %v85
    %v3306 = vunpack.c.l.b16 %v86
    %v3307 = vunpack.c.l.b16 %v87
    %v3308 = vunpack.c.l.b16 %v88
    %v3309 = vunpack.c.l.b16 %v89
    %v3310 = vunpack.c.l.b16 %v90
    %v3311 = vpack.c.b16 %v3304, %v3303
    %v3312 = vpack.c.b16 %v3306, %v3305
    %v3313 = vpack.c.b16 %v3308, %v3307
    %v3314 = vpack.c.b16 %v3310, %v3309
    %v3320 = vsel %vm2503, %v3293, 0
    %3322 = vmatpush.bf16.msra.mxu0 0
    %3323 = vmatpush.bf16.msra.mxu0 0
    %3324 = vmatpush.bf16.msra.mxu0 0
    %3325 = vmatpush.bf16.msra.mxu0 0
    %3326 = vmatpush.bf16.msra.mxu0 %v3314
    %3327 = vmatpush.bf16.msra.mxu0 %v3313
    %3328 = vmatpush.bf16.msra.mxu0 %v3312
    %3329 = vmatpush.bf16.msra.mxu0 %v3311
    %3330 = vmatmul.bf16.gmra.mxu0 %v3320
    %v3331 = vpop.f32.mrf.mxu0
    %v3332 = vadd.f32 %v3294, %v3331
    %v3333 = vpop.f32.mrf.mxu0
    %3334 = vdwg.mxu0
    %v3335 = vmax.f32 %v3332, 0.0
    %v3336 = vpack.c.bf16 %v3335, %v3335
    %v3337 = vperm.slane %v100, 6
    %v3345 = vunpack.c.l.b16 %v91
    %v3346 = vunpack.c.l.b16 %v92
    %v3347 = vunpack.c.l.b16 %v93
    %v3348 = vunpack.c.l.b16 %v94
    %v3349 = vunpack.c.l.b16 %v95
    %v3350 = vunpack.c.l.b16 %v96
    %v3351 = vunpack.c.l.b16 %v97
    %v3352 = vpack.c.b16 %v3346, %v3345
    %v3353 = vpack.c.b16 %v3348, %v3347
    %v3354 = vpack.c.b16 %v3350, %v3349
    %v3355 = vpack.c.b16 %v3351, %v3351
    %v3360 = vsel %vm1202, %v3336, 0
    %v3363 = vsel %vm756, %v3355, 0
    %3365 = vmatpush.bf16.msra.mxu0 0
    %3366 = vmatpush.bf16.msra.mxu0 0
    %3367 = vmatpush.bf16.msra.mxu0 0
    %3368 = vmatpush.bf16.msra.mxu0 0
    %3369 = vmatpush.bf16.msra.mxu0 %v3363
    %3370 = vmatpush.bf16.msra.mxu0 %v3354
    %3371 = vmatpush.bf16.msra.mxu0 %v3353
    %3372 = vmatpush.bf16.msra.mxu0 %v3352
    %3373 = vmatmul.bf16.gmra.mxu0 %v3360
    %v3374 = vpop.f32.mrf.mxu0
    %v3375 = vadd.f32 %v3337, %v3374
    %v3376 = vpop.f32.mrf.mxu0
    %3377 = vdwg.mxu0
    %v3378 = vmax.f32 %v3375, 0.0
    %v3379 = vpack.c.bf16 %v3378, %v3378
    %v3380 = vperm.slane %v100, 7
    %v3383 = vunpack.c.l.b16 %v98
    %v3384 = vunpack.c.l.b16 %v99
    %v3385 = vpack.c.b16 %v3384, %v3383
    %v3387 = vsel %vm1002, %v3379, 0
    %v3390 = vsel %vm348, %v3385, 0
    %3392 = vmatpush.bf16.msra.mxu0 0
    %3393 = vmatpush.bf16.msra.mxu0 0
    %3394 = vmatpush.bf16.msra.mxu0 0
    %3395 = vmatpush.bf16.msra.mxu0 0
    %3396 = vmatpush.bf16.msra.mxu0 0
    %3397 = vmatpush.bf16.msra.mxu0 0
    %3398 = vmatpush.bf16.msra.mxu0 0
    %3399 = vmatpush.bf16.msra.mxu0 %v3390
    %3400 = vmatmul.bf16.gmra.mxu0 %v3387
    %v3401 = vpop.f32.mrf.mxu0
    %v3402 = vadd.f32 %v3380, %v3401
    %v3403 = vpop.f32.mrf.mxu0
    %3404 = vdwg.mxu0
    %v3405 = vmax.f32 %v3402, 0.0
    %vm3406 = vcmask 9216
    %3407 = vst.msk [vmem:[#allocation2] sm:$0x3] %vm3406, %v3405
    // Predicated region
    $region14: #{conv_forward.1} parent=1 // pred_check
      _
    $region15: #{conv_forward.1} parent=1 // pred_check_branch
      %3409 = sbr.rel (0) target = $region17
    $region16: #{conv_forward.1} parent=1 // pred_region
      %3411 = vsyncadd [#allocation3], 0
      %s3413 = sshll.u32 [#allocation2], 4
      %s3414 = int_to_ptr.vmem [resolvable:$true] %s3413
      %s3415 = sshll.u32 %s3, 4
      %s3416 = int_to_ptr.hbm [resolvable:$true] %s3415
      %3418 = dma.vmem_to_hbm [thread:$0]  %s3414, 32, %s3416, [#allocation3]
    $region17: #{conv_forward.1} parent=1 // pred_fallthru
      _
    // Predicated region
    $region18: #{conv_forward.1} parent=1 // pred_check
      _
    $region19: #{conv_forward.1} parent=1 // pred_check_branch
      %3420 = sbr.rel (0) target = $region21
    $region20: #{conv_forward.1} parent=1 // pred_region
      %3422 = dma.done [#allocation3], 32
    $region21: #{conv_forward.1} parent=1 // pred_fallthru
      _
    %3423 = vsyncpa [#allocation3], 1

</llo_original>
